<compile_context>
chip_gen: v7x
topology: tpu7x:2x2x1
jax: 0.10.0
libtpu: 0.0.40
codegen_flags: <defaults>
</compile_context>

<pallas_src>
import math
import jax
import jax.numpy as jnp
from jax.experimental import pallas as pl
from jax.experimental.pallas import tpu as pltpu

# ---- model config (small, consistent with the module) ----
B, S = 2, 8                 # batch, seq_len
H = 128                     # hidden_dim
NH = 4                      # n_heads
DH = H // NH                # head_dim
FF = 4 * H                  # ff_dim
BELIEF = 64                 # belief_dim
VOCAB = 256                 # vocab_size (constructor arg, small synthetic)
NLAYERS = 2
T_MIN, T_MAX = 0.1, 2.0
P_MIN, P_MAX = 0.1, 0.9
EPS = 1e-5                  # nn.LayerNorm default eps
ATT_SCALE = 1.0 / math.sqrt(DH)

# static packing sanity checks (tie lane prefixes to output widths)
assert H % NH == 0
assert BELIEF + 5 <= H      # packed output row: belief | temp | pen | q | t_logit | p_logit
assert BELIEF <= H and 2 <= H

# packed per-layer vector rows (each row is H wide)
R_BQ, R_BK, R_BV, R_BO, R_G1, R_BE1, R_B2, R_G2, R_BE2 = range(9)
NVEC = 9
# packed head vector rows (each row is H wide; small biases live in a lane prefix)
HR_BB1, HR_BG, HR_BBETA, HR_QB1, HR_QG, HR_QBETA, HR_BB2, HR_BTP, HR_QB2 = range(9)
NHVEC = 9


def _layernorm(x, gamma, beta):
    mu = jnp.mean(x, axis=-1, keepdims=True)
    var = jnp.mean((x - mu) ** 2, axis=-1, keepdims=True)
    return (x - mu) * jax.lax.rsqrt(var + EPS) * gamma + beta


# ---------------- single fused kernel: 2x transformer block + all heads ----------------
def fused_belief_kernel(x_ref, wqkv_ref, wo_ref, w1_ref, w2_ref, b1_ref, vec_ref,
                        hw1_ref, hw2_ref, qw1tp_ref, qw2_ref, hvec_ref, out_ref):
    x = x_ref[...]                                               # (B*S, H) f32

    for l in range(NLAYERS):                                     # static layer loop, weights resident
        wqkv = wqkv_ref[l]                                       # (H, 3H)  bf16 (Q cols pre-scaled)
        wo = wo_ref[l]                                           # (H, H)   bf16
        w1 = w1_ref[l]                                           # (H, FF)  bf16
        w2 = w2_ref[l]                                           # (FF, H)  bf16
        b1 = b1_ref[l]                                           # (1, FF)  f32
        vec = vec_ref[l]                                         # (NVEC, H) f32

        xb = x.astype(jnp.bfloat16)
        qkv = jnp.dot(xb, wqkv, preferred_element_type=jnp.float32)      # (B*S, 3H)
        # one bf16 cast per tensor, before the head split; q bias is pre-scaled by 1/sqrt(DH)
        q = (qkv[:, 0 * H:1 * H] + vec[R_BQ:R_BQ + 1]).reshape(B, S, H).astype(jnp.bfloat16)
        k = (qkv[:, 1 * H:2 * H] + vec[R_BK:R_BK + 1]).reshape(B, S, H).astype(jnp.bfloat16)
        v = (qkv[:, 2 * H:3 * H] + vec[R_BV:R_BV + 1]).reshape(B, S, H).astype(jnp.bfloat16)

        heads = []
        for h in range(NH):                                      # static lane slices
            lo, hi = h * DH, (h + 1) * DH
            s = jnp.einsum("bqd,bkd->bqk", q[:, :, lo:hi], k[:, :, lo:hi],
                           preferred_element_type=jnp.float32)   # (B, S, S), scale folded in weights
            s = s - jnp.max(s, axis=-1, keepdims=True)
            p = jnp.exp(s)
            inv = pl.reciprocal(jnp.sum(p, axis=-1, keepdims=True), approx=True)   # EUP, not VALU
            p = (p * inv).astype(jnp.bfloat16)
            oh = jnp.einsum("bqk,bkd->bqd", p, v[:, :, lo:hi],
                            preferred_element_type=jnp.float32)  # (B, S, DH)
            heads.append(oh.reshape(B * S, DH))

        # one lane concatenate (XLU) + a single K=128 output-projection matmul
        o_cat = jnp.concatenate(heads, axis=-1).astype(jnp.bfloat16)     # (B*S, H)
        attn = jnp.dot(o_cat, wo, preferred_element_type=jnp.float32) + vec[R_BO:R_BO + 1]

        h1 = _layernorm(x + attn, vec[R_G1:R_G1 + 1], vec[R_BE1:R_BE1 + 1])
        ff = jnp.maximum(jnp.dot(h1.astype(jnp.bfloat16), w1,
                                 preferred_element_type=jnp.float32) + b1, 0.0)
        ff = jnp.dot(ff.astype(jnp.bfloat16), w2,
                     preferred_element_type=jnp.float32) + vec[R_B2:R_B2 + 1]
        x = _layernorm(h1 + ff, vec[R_G2:R_G2 + 1], vec[R_BE2:R_BE2 + 1])

    # last token per batch sample (mask=None path): single static sublane slice
    last = x.reshape(B, S, H)[:, S - 1, :]                       # (B, H)

    hv = hvec_ref[...]                                           # (NHVEC, H) f32

    # belief_projection: Linear -> LayerNorm -> ReLU -> Linear
    hb = jnp.dot(last.astype(jnp.bfloat16), hw1_ref[...],
                 preferred_element_type=jnp.float32) + hv[HR_BB1:HR_BB1 + 1]
    hb = jnp.maximum(_layernorm(hb, hv[HR_BG:HR_BG + 1], hv[HR_BBETA:HR_BBETA + 1]), 0.0)
    belief = jnp.dot(hb.astype(jnp.bfloat16), hw2_ref[...],
                     preferred_element_type=jnp.float32) + hv[HR_BB2:HR_BB2 + 1, 0:BELIEF]

    # q_network first layer fused with temp/penalty projections: one (BELIEF, 2H) matmul
    qtp = jnp.dot(belief.astype(jnp.bfloat16), qw1tp_ref[...],
                  preferred_element_type=jnp.float32)            # (B, 2H)
    qh = qtp[:, 0:H] + hv[HR_QB1:HR_QB1 + 1]
    tp = qtp[:, H:H + 2] + hv[HR_BTP:HR_BTP + 1, 0:2]            # (B, 2), vreg-boundary slice
    t_logit = tp[:, 0:1]
    p_logit = tp[:, 1:2]
    temperature = T_MIN + (T_MAX - T_MIN) * jax.nn.sigmoid(t_logit)
    penalty = P_MIN + (P_MAX - P_MIN) * jax.nn.sigmoid(p_logit)

    # q_network tail: LayerNorm -> ReLU -> Linear
    qh = jnp.maximum(_layernorm(qh, hv[HR_QG:HR_QG + 1], hv[HR_QBETA:HR_QBETA + 1]), 0.0)
    q_value = jnp.dot(qh.astype(jnp.bfloat16), qw2_ref[...],
                      preferred_element_type=jnp.float32) + hv[HR_QB2:HR_QB2 + 1, 0:1]   # (B, 1)

    # lane-dense packed output (B, 128): single unmasked full-width store
    pad = jnp.zeros((B, H - BELIEF - 5), jnp.float32)
    out_ref[...] = jnp.concatenate(
        [belief, temperature, penalty, q_value, t_logit, p_logit, pad], axis=-1)


# ---------------- parameter init (deterministic, synthetic, pre-packed) ----------------
def init_params(key):
    f32 = jnp.float32

    def nrm(k, shape, scale=0.02):
        return (scale * jax.random.normal(k, shape)).astype(f32)

    keys = iter(jax.random.split(key, 64))
    params = {"embedding": nrm(next(keys), (VOCAB, H))}

    wqkv, wo, w1, w2, b1, vec = [], [], [], [], [], []
    for _ in range(NLAYERS):
        # fold the 1/sqrt(DH) attention scale into Wq and bq (loading real PyTorch weights
        # would require the same pre-scaling of Wq / bq).
        wq = nrm(next(keys), (H, H)) * ATT_SCALE
        wk = nrm(next(keys), (H, H))
        wv = nrm(next(keys), (H, H))
        wqkv.append(jnp.concatenate([wq, wk, wv], axis=1))            # (H, 3H)
        wo.append(nrm(next(keys), (H, H)))
        w1.append(nrm(next(keys), (H, FF)))
        w2.append(nrm(next(keys), (FF, H)))
        b1.append(nrm(next(keys), (1, FF), 0.01))
        v = jnp.zeros((NVEC, H), f32)
        v = v.at[R_BQ].set(nrm(next(keys), (H,), 0.01) * ATT_SCALE)   # pre-scaled q bias
        v = v.at[R_BK].set(nrm(next(keys), (H,), 0.01))
        v = v.at[R_BV].set(nrm(next(keys), (H,), 0.01))
        v = v.at[R_BO].set(nrm(next(keys), (H,), 0.01))
        v = v.at[R_G1].set(1.0)                                       # LN gammas = 1, betas = 0
        v = v.at[R_B2].set(nrm(next(keys), (H,), 0.01))
        v = v.at[R_G2].set(1.0)
        vec.append(v)

    params["wqkv"] = jnp.stack(wqkv).astype(jnp.bfloat16)             # (L, H, 3H)
    params["wo"] = jnp.stack(wo).astype(jnp.bfloat16)                 # (L, H, H)
    params["w1"] = jnp.stack(w1).astype(jnp.bfloat16)                 # (L, H, FF)
    params["w2"] = jnp.stack(w2).astype(jnp.bfloat16)                 # (L, FF, H)
    params["b1"] = jnp.stack(b1)                                      # (L, 1, FF) f32
    params["vec"] = jnp.stack(vec)                                    # (L, NVEC, H) f32

    params["hw1"] = nrm(next(keys), (H, H)).astype(jnp.bfloat16)
    params["hw2"] = nrm(next(keys), (H, BELIEF)).astype(jnp.bfloat16)
    qw1 = nrm(next(keys), (BELIEF, H))
    wtp = nrm(next(keys), (BELIEF, 2))                                # [temp | penalty] columns
    params["qw1tp"] = jnp.concatenate(
        [qw1, jnp.pad(wtp, ((0, 0), (0, H - 2)))], axis=1).astype(jnp.bfloat16)   # (BELIEF, 2H)
    params["qw2"] = nrm(next(keys), (H, 1)).astype(jnp.bfloat16)

    hv = jnp.zeros((NHVEC, H), f32)
    hv = hv.at[HR_BB1].set(nrm(next(keys), (H,), 0.01))
    hv = hv.at[HR_BG].set(1.0)
    hv = hv.at[HR_QB1].set(nrm(next(keys), (H,), 0.01))
    hv = hv.at[HR_QG].set(1.0)
    hv = hv.at[HR_BB2, 0:BELIEF].set(nrm(next(keys), (BELIEF,), 0.01))
    hv = hv.at[HR_BTP, 0:2].set(nrm(next(keys), (2,), 0.01))
    hv = hv.at[HR_QB2, 0:1].set(nrm(next(keys), (1,), 0.01))
    params["hvec"] = hv                                               # (NHVEC, H) f32
    return params


def positional_encoding(seq_len, d_model):
    position = jnp.arange(seq_len, dtype=jnp.float32)[:, None]
    div_term = jnp.exp(jnp.arange(0, d_model, 2, dtype=jnp.float32)
                       * (-math.log(10000.0) / d_model))
    pe = jnp.zeros((seq_len, d_model), jnp.float32)
    pe = pe.at[:, 0::2].set(jnp.sin(position * div_term))
    pe = pe.at[:, 1::2].set(jnp.cos(position * div_term))
    return pe


# ---------------- full forward: one pallas_call, no grid, no double buffering ----------------
def belief_network_forward(params, token_ids):
    # glue: embedding gather + positional encoding (dropout is identity in eval)
    x = params["embedding"][token_ids] + positional_encoding(S, H)[None, :, :]   # (B,S,H)
    x = x.reshape(B * S, H).astype(jnp.float32)

    arrays = [x, params["wqkv"], params["wo"], params["w1"], params["w2"],
              params["b1"], params["vec"], params["hw1"], params["hw2"],
              params["qw1tp"], params["qw2"], params["hvec"]]

    out = pl.pallas_call(
        fused_belief_kernel,
        out_shape=jax.ShapeDtypeStruct((B, H), jnp.float32),
        in_specs=[pl.BlockSpec(memory_space=pltpu.MemorySpace.VMEM) for _ in arrays],
        out_specs=pl.BlockSpec(memory_space=pltpu.MemorySpace.VMEM),
    )(*arrays)

    belief = out[:, 0:BELIEF]
    temperature = out[:, BELIEF + 0:BELIEF + 1]
    penalty = out[:, BELIEF + 1:BELIEF + 2]
    q_value = out[:, BELIEF + 2:BELIEF + 3]
    temp_logit = out[:, BELIEF + 3:BELIEF + 4]
    penalty_logit = out[:, BELIEF + 4:BELIEF + 5]
    return {
        "belief_state": belief,
        "prompt_embedding": jnp.concatenate([temperature, penalty], axis=1),
        "q_value": q_value,
        "temp_logit": temp_logit,
        "penalty_logit": penalty_logit,
    }


if __name__ == "__main__":
    key = jax.random.PRNGKey(0)
    pkey, dkey = jax.random.split(key)
    params = init_params(pkey)
    token_ids = jax.random.randint(dkey, (B, S), 0, VOCAB, dtype=jnp.int32)

    out = jax.jit(belief_network_forward)(params, token_ids)
    jax.block_until_ready(out)

    assert out["belief_state"].shape == (B, BELIEF)
    assert out["prompt_embedding"].shape == (B, 2)
    assert out["q_value"].shape == (B, 1)
    assert out["temp_logit"].shape == (B, 1)
    assert out["penalty_logit"].shape == (B, 1)
    assert bool(jnp.all(jnp.isfinite(out["belief_state"])))
    assert bool(jnp.all(out["prompt_embedding"][:, 0] >= T_MIN))
    assert bool(jnp.all(out["prompt_embedding"][:, 0] <= T_MAX))
    assert bool(jnp.all(out["prompt_embedding"][:, 1] >= P_MIN))
    assert bool(jnp.all(out["prompt_embedding"][:, 1] <= P_MAX))
    print("KERNEL_OK")
</pallas_src>

<mosaic_0001>
module attributes {stable_mosaic.version = 11 : i64} {
  func.func @fused_belief_kernel(%arg0: memref<16x128xf32, #tpu.memory_space<vmem>>, %arg1: memref<2x128x384xbf16, #tpu.memory_space<vmem>>, %arg2: memref<2x128x128xbf16, #tpu.memory_space<vmem>>, %arg3: memref<2x128x512xbf16, #tpu.memory_space<vmem>>, %arg4: memref<2x512x128xbf16, #tpu.memory_space<vmem>>, %arg5: memref<2x1x512xf32, #tpu.memory_space<vmem>>, %arg6: memref<2x9x128xf32, #tpu.memory_space<vmem>>, %arg7: memref<128x128xbf16, #tpu.memory_space<vmem>>, %arg8: memref<128x64xbf16, #tpu.memory_space<vmem>>, %arg9: memref<64x256xbf16, #tpu.memory_space<vmem>>, %arg10: memref<128x1xbf16, #tpu.memory_space<vmem>>, %arg11: memref<9x128xf32, #tpu.memory_space<vmem>>, %arg12: memref<2x128xf32, #tpu.memory_space<vmem>>) attributes {dimension_semantics = [], scalar_prefetch = 0 : i64, scratch_operands = 0 : i64, tpu.core_type = #tpu.core_type<tc>} {
    %c0 = arith.constant 0 : index
    %c0_0 = arith.constant 0 : index
    %0 = vector.load %arg0[%c0, %c0_0] : memref<16x128xf32, #tpu.memory_space<vmem>>, vector<16x128xf32>
    %c0_1 = arith.constant 0 : index
    %c0_2 = arith.constant 0 : index
    %c0_3 = arith.constant 0 : index
    %1 = vector.load %arg1[%c0_1, %c0_2, %c0_3] : memref<2x128x384xbf16, #tpu.memory_space<vmem>>, vector<1x128x384xbf16>
    %2 = vector.shape_cast %1 : vector<1x128x384xbf16> to vector<128x384xbf16>
    %c0_4 = arith.constant 0 : index
    %c0_5 = arith.constant 0 : index
    %c0_6 = arith.constant 0 : index
    %3 = vector.load %arg2[%c0_4, %c0_5, %c0_6] : memref<2x128x128xbf16, #tpu.memory_space<vmem>>, vector<1x128x128xbf16>
    %4 = vector.shape_cast %3 : vector<1x128x128xbf16> to vector<128x128xbf16>
    %c0_7 = arith.constant 0 : index
    %c0_8 = arith.constant 0 : index
    %c0_9 = arith.constant 0 : index
    %5 = vector.load %arg3[%c0_7, %c0_8, %c0_9] : memref<2x128x512xbf16, #tpu.memory_space<vmem>>, vector<1x128x512xbf16>
    %6 = vector.shape_cast %5 : vector<1x128x512xbf16> to vector<128x512xbf16>
    %c0_10 = arith.constant 0 : index
    %c0_11 = arith.constant 0 : index
    %c0_12 = arith.constant 0 : index
    %7 = vector.load %arg4[%c0_10, %c0_11, %c0_12] : memref<2x512x128xbf16, #tpu.memory_space<vmem>>, vector<1x512x128xbf16>
    %8 = vector.shape_cast %7 : vector<1x512x128xbf16> to vector<512x128xbf16>
    %c0_13 = arith.constant 0 : index
    %c0_14 = arith.constant 0 : index
    %c0_15 = arith.constant 0 : index
    %9 = vector.load %arg5[%c0_13, %c0_14, %c0_15] : memref<2x1x512xf32, #tpu.memory_space<vmem>>, vector<1x1x512xf32>
    %10 = vector.shape_cast %9 : vector<1x1x512xf32> to vector<1x512xf32>
    %c0_16 = arith.constant 0 : index
    %c0_17 = arith.constant 0 : index
    %c0_18 = arith.constant 0 : index
    %11 = vector.load %arg6[%c0_16, %c0_17, %c0_18] : memref<2x9x128xf32, #tpu.memory_space<vmem>>, vector<1x9x128xf32>
    %12 = vector.shape_cast %11 : vector<1x9x128xf32> to vector<9x128xf32>
    %13 = arith.truncf %0 : vector<16x128xf32> to vector<16x128xbf16>
    %cst = arith.constant dense<0.000000e+00> : vector<16x384xf32>
    %14 = tpu.matmul %13, %2, %cst {dimension_numbers = #tpu.dot_dimension_numbers<[1], [0], [0], [1], [0, 0, 1, 1], [], []>} : vector<16x128xbf16>, vector<128x384xbf16>, vector<16x384xf32> -> vector<16x384xf32>
    %15 = vector.extract_strided_slice %14 {offsets = [0, 0], sizes = [16, 128], strides = [1, 1]} : vector<16x384xf32> to vector<16x128xf32>
    %16 = vector.extract_strided_slice %12 {offsets = [0, 0], sizes = [1, 128], strides = [1, 1]} : vector<9x128xf32> to vector<1x128xf32>
    %17 = vector.broadcast %16 : vector<1x128xf32> to vector<16x128xf32>
    %18 = arith.addf %15, %17 : vector<16x128xf32>
    %19 = vector.shape_cast %18 : vector<16x128xf32> to vector<2x8x128xf32>
    %20 = arith.truncf %19 : vector<2x8x128xf32> to vector<2x8x128xbf16>
    %21 = vector.extract_strided_slice %14 {offsets = [0, 128], sizes = [16, 128], strides = [1, 1]} : vector<16x384xf32> to vector<16x128xf32>
    %22 = vector.extract_strided_slice %12 {offsets = [1, 0], sizes = [1, 128], strides = [1, 1]} : vector<9x128xf32> to vector<1x128xf32>
    %23 = vector.broadcast %22 : vector<1x128xf32> to vector<16x128xf32>
    %24 = arith.addf %21, %23 : vector<16x128xf32>
    %25 = vector.shape_cast %24 : vector<16x128xf32> to vector<2x8x128xf32>
    %26 = arith.truncf %25 : vector<2x8x128xf32> to vector<2x8x128xbf16>
    %27 = vector.extract_strided_slice %14 {offsets = [0, 256], sizes = [16, 128], strides = [1, 1]} : vector<16x384xf32> to vector<16x128xf32>
    %28 = vector.extract_strided_slice %12 {offsets = [2, 0], sizes = [1, 128], strides = [1, 1]} : vector<9x128xf32> to vector<1x128xf32>
    %29 = vector.broadcast %28 : vector<1x128xf32> to vector<16x128xf32>
    %30 = arith.addf %27, %29 : vector<16x128xf32>
    %31 = vector.shape_cast %30 : vector<16x128xf32> to vector<2x8x128xf32>
    %32 = arith.truncf %31 : vector<2x8x128xf32> to vector<2x8x128xbf16>
    %33 = vector.extract_strided_slice %20 {offsets = [0, 0, 0], sizes = [2, 8, 32], strides = [1, 1, 1]} : vector<2x8x128xbf16> to vector<2x8x32xbf16>
    %34 = vector.extract_strided_slice %26 {offsets = [0, 0, 0], sizes = [2, 8, 32], strides = [1, 1, 1]} : vector<2x8x128xbf16> to vector<2x8x32xbf16>
    "tpu.trace_start"() <{level = 10 : i32, message = "bqd,bkd->bqk"}> : () -> ()
    %cst_19 = arith.constant dense<0.000000e+00> : vector<2x8x8xf32>
    %35 = tpu.matmul %33, %34, %cst_19 {dimension_numbers = #tpu.dot_dimension_numbers<[2], [2], [1], [1], [0, 0, 0, 1, 1, 1], [0], [0]>} : vector<2x8x32xbf16>, vector<2x8x32xbf16>, vector<2x8x8xf32> -> vector<2x8x8xf32>
    "tpu.trace_stop"() : () -> ()
    %cst_20 = arith.constant dense<0xFF800000> : vector<2x8xf32>
    %36 = vector.multi_reduction <maximumf>, %35, %cst_20 [2] : vector<2x8x8xf32> to vector<2x8xf32>
    %37 = vector.shape_cast %36 : vector<2x8xf32> to vector<2x8x1xf32>
    %38 = vector.broadcast %37 : vector<2x8x1xf32> to vector<2x8x8xf32>
    %39 = arith.subf %35, %38 : vector<2x8x8xf32>
    %40 = math.exp %39 : vector<2x8x8xf32>
    %cst_21 = arith.constant dense<0.000000e+00> : vector<2x8xf32>
    %41 = vector.multi_reduction <add>, %40, %cst_21 [2] : vector<2x8x8xf32> to vector<2x8xf32>
    %42 = vector.shape_cast %41 : vector<2x8xf32> to vector<2x8x1xf32>
    %43 = tpu.reciprocal %42 {approx = true} : vector<2x8x1xf32> -> vector<2x8x1xf32>
    %44 = vector.broadcast %43 : vector<2x8x1xf32> to vector<2x8x8xf32>
    %45 = arith.mulf %40, %44 : vector<2x8x8xf32>
    %46 = arith.truncf %45 : vector<2x8x8xf32> to vector<2x8x8xbf16>
    %47 = vector.extract_strided_slice %32 {offsets = [0, 0, 0], sizes = [2, 8, 32], strides = [1, 1, 1]} : vector<2x8x128xbf16> to vector<2x8x32xbf16>
    "tpu.trace_start"() <{level = 10 : i32, message = "bqk,bkd->bqd"}> : () -> ()
    %cst_22 = arith.constant dense<0.000000e+00> : vector<2x8x32xf32>
    %48 = tpu.matmul %46, %47, %cst_22 {dimension_numbers = #tpu.dot_dimension_numbers<[2], [1], [1], [2], [0, 0, 0, 1, 1, 2], [0], [0]>} : vector<2x8x8xbf16>, vector<2x8x32xbf16>, vector<2x8x32xf32> -> vector<2x8x32xf32>
    "tpu.trace_stop"() : () -> ()
    %49 = vector.shape_cast %48 : vector<2x8x32xf32> to vector<16x32xf32>
    %50 = vector.extract_strided_slice %20 {offsets = [0, 0, 32], sizes = [2, 8, 32], strides = [1, 1, 1]} : vector<2x8x128xbf16> to vector<2x8x32xbf16>
    %51 = vector.extract_strided_slice %26 {offsets = [0, 0, 32], sizes = [2, 8, 32], strides = [1, 1, 1]} : vector<2x8x128xbf16> to vector<2x8x32xbf16>
    "tpu.trace_start"() <{level = 10 : i32, message = "bqd,bkd->bqk"}> : () -> ()
    %cst_23 = arith.constant dense<0.000000e+00> : vector<2x8x8xf32>
    %52 = tpu.matmul %50, %51, %cst_23 {dimension_numbers = #tpu.dot_dimension_numbers<[2], [2], [1], [1], [0, 0, 0, 1, 1, 1], [0], [0]>} : vector<2x8x32xbf16>, vector<2x8x32xbf16>, vector<2x8x8xf32> -> vector<2x8x8xf32>
    "tpu.trace_stop"() : () -> ()
    %cst_24 = arith.constant dense<0xFF800000> : vector<2x8xf32>
    %53 = vector.multi_reduction <maximumf>, %52, %cst_24 [2] : vector<2x8x8xf32> to vector<2x8xf32>
    %54 = vector.shape_cast %53 : vector<2x8xf32> to vector<2x8x1xf32>
    %55 = vector.broadcast %54 : vector<2x8x1xf32> to vector<2x8x8xf32>
    %56 = arith.subf %52, %55 : vector<2x8x8xf32>
    %57 = math.exp %56 : vector<2x8x8xf32>
    %cst_25 = arith.constant dense<0.000000e+00> : vector<2x8xf32>
    %58 = vector.multi_reduction <add>, %57, %cst_25 [2] : vector<2x8x8xf32> to vector<2x8xf32>
    %59 = vector.shape_cast %58 : vector<2x8xf32> to vector<2x8x1xf32>
    %60 = tpu.reciprocal %59 {approx = true} : vector<2x8x1xf32> -> vector<2x8x1xf32>
    %61 = vector.broadcast %60 : vector<2x8x1xf32> to vector<2x8x8xf32>
    %62 = arith.mulf %57, %61 : vector<2x8x8xf32>
    %63 = arith.truncf %62 : vector<2x8x8xf32> to vector<2x8x8xbf16>
    %64 = vector.extract_strided_slice %32 {offsets = [0, 0, 32], sizes = [2, 8, 32], strides = [1, 1, 1]} : vector<2x8x128xbf16> to vector<2x8x32xbf16>
    "tpu.trace_start"() <{level = 10 : i32, message = "bqk,bkd->bqd"}> : () -> ()
    %cst_26 = arith.constant dense<0.000000e+00> : vector<2x8x32xf32>
    %65 = tpu.matmul %63, %64, %cst_26 {dimension_numbers = #tpu.dot_dimension_numbers<[2], [1], [1], [2], [0, 0, 0, 1, 1, 2], [0], [0]>} : vector<2x8x8xbf16>, vector<2x8x32xbf16>, vector<2x8x32xf32> -> vector<2x8x32xf32>
    "tpu.trace_stop"() : () -> ()
    %66 = vector.shape_cast %65 : vector<2x8x32xf32> to vector<16x32xf32>
    %67 = vector.extract_strided_slice %20 {offsets = [0, 0, 64], sizes = [2, 8, 32], strides = [1, 1, 1]} : vector<2x8x128xbf16> to vector<2x8x32xbf16>
    %68 = vector.extract_strided_slice %26 {offsets = [0, 0, 64], sizes = [2, 8, 32], strides = [1, 1, 1]} : vector<2x8x128xbf16> to vector<2x8x32xbf16>
    "tpu.trace_start"() <{level = 10 : i32, message = "bqd,bkd->bqk"}> : () -> ()
    %cst_27 = arith.constant dense<0.000000e+00> : vector<2x8x8xf32>
    %69 = tpu.matmul %67, %68, %cst_27 {dimension_numbers = #tpu.dot_dimension_numbers<[2], [2], [1], [1], [0, 0, 0, 1, 1, 1], [0], [0]>} : vector<2x8x32xbf16>, vector<2x8x32xbf16>, vector<2x8x8xf32> -> vector<2x8x8xf32>
    "tpu.trace_stop"() : () -> ()
    %cst_28 = arith.constant dense<0xFF800000> : vector<2x8xf32>
    %70 = vector.multi_reduction <maximumf>, %69, %cst_28 [2] : vector<2x8x8xf32> to vector<2x8xf32>
    %71 = vector.shape_cast %70 : vector<2x8xf32> to vector<2x8x1xf32>
    %72 = vector.broadcast %71 : vector<2x8x1xf32> to vector<2x8x8xf32>
    %73 = arith.subf %69, %72 : vector<2x8x8xf32>
    %74 = math.exp %73 : vector<2x8x8xf32>
    %cst_29 = arith.constant dense<0.000000e+00> : vector<2x8xf32>
    %75 = vector.multi_reduction <add>, %74, %cst_29 [2] : vector<2x8x8xf32> to vector<2x8xf32>
    %76 = vector.shape_cast %75 : vector<2x8xf32> to vector<2x8x1xf32>
    %77 = tpu.reciprocal %76 {approx = true} : vector<2x8x1xf32> -> vector<2x8x1xf32>
    %78 = vector.broadcast %77 : vector<2x8x1xf32> to vector<2x8x8xf32>
    %79 = arith.mulf %74, %78 : vector<2x8x8xf32>
    %80 = arith.truncf %79 : vector<2x8x8xf32> to vector<2x8x8xbf16>
    %81 = vector.extract_strided_slice %32 {offsets = [0, 0, 64], sizes = [2, 8, 32], strides = [1, 1, 1]} : vector<2x8x128xbf16> to vector<2x8x32xbf16>
    "tpu.trace_start"() <{level = 10 : i32, message = "bqk,bkd->bqd"}> : () -> ()
    %cst_30 = arith.constant dense<0.000000e+00> : vector<2x8x32xf32>
    %82 = tpu.matmul %80, %81, %cst_30 {dimension_numbers = #tpu.dot_dimension_numbers<[2], [1], [1], [2], [0, 0, 0, 1, 1, 2], [0], [0]>} : vector<2x8x8xbf16>, vector<2x8x32xbf16>, vector<2x8x32xf32> -> vector<2x8x32xf32>
    "tpu.trace_stop"() : () -> ()
    %83 = vector.shape_cast %82 : vector<2x8x32xf32> to vector<16x32xf32>
    %84 = vector.extract_strided_slice %20 {offsets = [0, 0, 96], sizes = [2, 8, 32], strides = [1, 1, 1]} : vector<2x8x128xbf16> to vector<2x8x32xbf16>
    %85 = vector.extract_strided_slice %26 {offsets = [0, 0, 96], sizes = [2, 8, 32], strides = [1, 1, 1]} : vector<2x8x128xbf16> to vector<2x8x32xbf16>
    "tpu.trace_start"() <{level = 10 : i32, message = "bqd,bkd->bqk"}> : () -> ()
    %cst_31 = arith.constant dense<0.000000e+00> : vector<2x8x8xf32>
    %86 = tpu.matmul %84, %85, %cst_31 {dimension_numbers = #tpu.dot_dimension_numbers<[2], [2], [1], [1], [0, 0, 0, 1, 1, 1], [0], [0]>} : vector<2x8x32xbf16>, vector<2x8x32xbf16>, vector<2x8x8xf32> -> vector<2x8x8xf32>
    "tpu.trace_stop"() : () -> ()
    %cst_32 = arith.constant dense<0xFF800000> : vector<2x8xf32>
    %87 = vector.multi_reduction <maximumf>, %86, %cst_32 [2] : vector<2x8x8xf32> to vector<2x8xf32>
    %88 = vector.shape_cast %87 : vector<2x8xf32> to vector<2x8x1xf32>
    %89 = vector.broadcast %88 : vector<2x8x1xf32> to vector<2x8x8xf32>
    %90 = arith.subf %86, %89 : vector<2x8x8xf32>
    %91 = math.exp %90 : vector<2x8x8xf32>
    %cst_33 = arith.constant dense<0.000000e+00> : vector<2x8xf32>
    %92 = vector.multi_reduction <add>, %91, %cst_33 [2] : vector<2x8x8xf32> to vector<2x8xf32>
    %93 = vector.shape_cast %92 : vector<2x8xf32> to vector<2x8x1xf32>
    %94 = tpu.reciprocal %93 {approx = true} : vector<2x8x1xf32> -> vector<2x8x1xf32>
    %95 = vector.broadcast %94 : vector<2x8x1xf32> to vector<2x8x8xf32>
    %96 = arith.mulf %91, %95 : vector<2x8x8xf32>
    %97 = arith.truncf %96 : vector<2x8x8xf32> to vector<2x8x8xbf16>
    %98 = vector.extract_strided_slice %32 {offsets = [0, 0, 96], sizes = [2, 8, 32], strides = [1, 1, 1]} : vector<2x8x128xbf16> to vector<2x8x32xbf16>
    "tpu.trace_start"() <{level = 10 : i32, message = "bqk,bkd->bqd"}> : () -> ()
    %cst_34 = arith.constant dense<0.000000e+00> : vector<2x8x32xf32>
    %99 = tpu.matmul %97, %98, %cst_34 {dimension_numbers = #tpu.dot_dimension_numbers<[2], [1], [1], [2], [0, 0, 0, 1, 1, 2], [0], [0]>} : vector<2x8x8xbf16>, vector<2x8x32xbf16>, vector<2x8x32xf32> -> vector<2x8x32xf32>
    "tpu.trace_stop"() : () -> ()
    %100 = vector.shape_cast %99 : vector<2x8x32xf32> to vector<16x32xf32>
    %101 = tpu.concatenate %49, %66, %83, %100 in 1 : vector<16x32xf32>, vector<16x32xf32>, vector<16x32xf32>, vector<16x32xf32> -> vector<16x128xf32>
    %102 = arith.truncf %101 : vector<16x128xf32> to vector<16x128xbf16>
    %cst_35 = arith.constant dense<0.000000e+00> : vector<16x128xf32>
    %103 = tpu.matmul %102, %4, %cst_35 {dimension_numbers = #tpu.dot_dimension_numbers<[1], [0], [0], [1], [0, 0, 1, 1], [], []>} : vector<16x128xbf16>, vector<128x128xbf16>, vector<16x128xf32> -> vector<16x128xf32>
    %104 = vector.extract_strided_slice %12 {offsets = [3, 0], sizes = [1, 128], strides = [1, 1]} : vector<9x128xf32> to vector<1x128xf32>
    %105 = vector.broadcast %104 : vector<1x128xf32> to vector<16x128xf32>
    %106 = arith.addf %103, %105 : vector<16x128xf32>
    %107 = arith.addf %0, %106 : vector<16x128xf32>
    %108 = vector.extract_strided_slice %12 {offsets = [4, 0], sizes = [1, 128], strides = [1, 1]} : vector<9x128xf32> to vector<1x128xf32>
    %109 = vector.extract_strided_slice %12 {offsets = [5, 0], sizes = [1, 128], strides = [1, 1]} : vector<9x128xf32> to vector<1x128xf32>
    %cst_36 = arith.constant dense<0.000000e+00> : vector<16xf32>
    %110 = vector.multi_reduction <add>, %107, %cst_36 [1] : vector<16x128xf32> to vector<16xf32>
    %111 = vector.shape_cast %110 : vector<16xf32> to vector<16x1xf32>
    %cst_37 = arith.constant 1.280000e+02 : f32
    %112 = vector.broadcast %cst_37 : f32 to vector<16x1xf32>
    %113 = arith.divf %111, %112 : vector<16x1xf32>
    %114 = vector.broadcast %113 : vector<16x1xf32> to vector<16x128xf32>
    %115 = arith.subf %107, %114 : vector<16x128xf32>
    %116 = arith.mulf %115, %115 : vector<16x128xf32>
    %cst_38 = arith.constant dense<0.000000e+00> : vector<16xf32>
    %117 = vector.multi_reduction <add>, %116, %cst_38 [1] : vector<16x128xf32> to vector<16xf32>
    %118 = vector.shape_cast %117 : vector<16xf32> to vector<16x1xf32>
    %cst_39 = arith.constant 1.280000e+02 : f32
    %119 = vector.broadcast %cst_39 : f32 to vector<16x1xf32>
    %120 = arith.divf %118, %119 : vector<16x1xf32>
    %121 = vector.broadcast %113 : vector<16x1xf32> to vector<16x128xf32>
    %122 = arith.subf %107, %121 : vector<16x128xf32>
    %cst_40 = arith.constant 9.99999974E-6 : f32
    %123 = vector.broadcast %cst_40 : f32 to vector<16x1xf32>
    %124 = arith.addf %120, %123 : vector<16x1xf32>
    %125 = math.rsqrt %124 : vector<16x1xf32>
    %126 = vector.broadcast %125 : vector<16x1xf32> to vector<16x128xf32>
    %127 = arith.mulf %122, %126 : vector<16x128xf32>
    %128 = vector.broadcast %108 : vector<1x128xf32> to vector<16x128xf32>
    %129 = arith.mulf %127, %128 : vector<16x128xf32>
    %130 = vector.broadcast %109 : vector<1x128xf32> to vector<16x128xf32>
    %131 = arith.addf %129, %130 : vector<16x128xf32>
    %132 = arith.truncf %131 : vector<16x128xf32> to vector<16x128xbf16>
    %cst_41 = arith.constant dense<0.000000e+00> : vector<16x512xf32>
    %133 = tpu.matmul %132, %6, %cst_41 {dimension_numbers = #tpu.dot_dimension_numbers<[1], [0], [0], [1], [0, 0, 1, 1], [], []>} : vector<16x128xbf16>, vector<128x512xbf16>, vector<16x512xf32> -> vector<16x512xf32>
    %134 = vector.broadcast %10 : vector<1x512xf32> to vector<16x512xf32>
    %135 = arith.addf %133, %134 : vector<16x512xf32>
    %cst_42 = arith.constant 0.000000e+00 : f32
    %136 = vector.broadcast %cst_42 : f32 to vector<16x512xf32>
    %137 = arith.maximumf %135, %136 : vector<16x512xf32>
    %138 = arith.truncf %137 : vector<16x512xf32> to vector<16x512xbf16>
    %cst_43 = arith.constant dense<0.000000e+00> : vector<16x128xf32>
    %139 = tpu.matmul %138, %8, %cst_43 {dimension_numbers = #tpu.dot_dimension_numbers<[1], [0], [0], [1], [0, 0, 1, 1], [], []>} : vector<16x512xbf16>, vector<512x128xbf16>, vector<16x128xf32> -> vector<16x128xf32>
    %140 = vector.extract_strided_slice %12 {offsets = [6, 0], sizes = [1, 128], strides = [1, 1]} : vector<9x128xf32> to vector<1x128xf32>
    %141 = vector.broadcast %140 : vector<1x128xf32> to vector<16x128xf32>
    %142 = arith.addf %139, %141 : vector<16x128xf32>
    %143 = arith.addf %131, %142 : vector<16x128xf32>
    %144 = vector.extract_strided_slice %12 {offsets = [7, 0], sizes = [1, 128], strides = [1, 1]} : vector<9x128xf32> to vector<1x128xf32>
    %145 = vector.extract_strided_slice %12 {offsets = [8, 0], sizes = [1, 128], strides = [1, 1]} : vector<9x128xf32> to vector<1x128xf32>
    %cst_44 = arith.constant dense<0.000000e+00> : vector<16xf32>
    %146 = vector.multi_reduction <add>, %143, %cst_44 [1] : vector<16x128xf32> to vector<16xf32>
    %147 = vector.shape_cast %146 : vector<16xf32> to vector<16x1xf32>
    %cst_45 = arith.constant 1.280000e+02 : f32
    %148 = vector.broadcast %cst_45 : f32 to vector<16x1xf32>
    %149 = arith.divf %147, %148 : vector<16x1xf32>
    %150 = vector.broadcast %149 : vector<16x1xf32> to vector<16x128xf32>
    %151 = arith.subf %143, %150 : vector<16x128xf32>
    %152 = arith.mulf %151, %151 : vector<16x128xf32>
    %cst_46 = arith.constant dense<0.000000e+00> : vector<16xf32>
    %153 = vector.multi_reduction <add>, %152, %cst_46 [1] : vector<16x128xf32> to vector<16xf32>
    %154 = vector.shape_cast %153 : vector<16xf32> to vector<16x1xf32>
    %cst_47 = arith.constant 1.280000e+02 : f32
    %155 = vector.broadcast %cst_47 : f32 to vector<16x1xf32>
    %156 = arith.divf %154, %155 : vector<16x1xf32>
    %157 = vector.broadcast %149 : vector<16x1xf32> to vector<16x128xf32>
    %158 = arith.subf %143, %157 : vector<16x128xf32>
    %cst_48 = arith.constant 9.99999974E-6 : f32
    %159 = vector.broadcast %cst_48 : f32 to vector<16x1xf32>
    %160 = arith.addf %156, %159 : vector<16x1xf32>
    %161 = math.rsqrt %160 : vector<16x1xf32>
    %162 = vector.broadcast %161 : vector<16x1xf32> to vector<16x128xf32>
    %163 = arith.mulf %158, %162 : vector<16x128xf32>
    %164 = vector.broadcast %144 : vector<1x128xf32> to vector<16x128xf32>
    %165 = arith.mulf %163, %164 : vector<16x128xf32>
    %166 = vector.broadcast %145 : vector<1x128xf32> to vector<16x128xf32>
    %167 = arith.addf %165, %166 : vector<16x128xf32>
    %c1 = arith.constant 1 : index
    %c0_49 = arith.constant 0 : index
    %c0_50 = arith.constant 0 : index
    %168 = vector.load %arg1[%c1, %c0_49, %c0_50] : memref<2x128x384xbf16, #tpu.memory_space<vmem>>, vector<1x128x384xbf16>
    %169 = vector.shape_cast %168 : vector<1x128x384xbf16> to vector<128x384xbf16>
    %c1_51 = arith.constant 1 : index
    %c0_52 = arith.constant 0 : index
    %c0_53 = arith.constant 0 : index
    %170 = vector.load %arg2[%c1_51, %c0_52, %c0_53] : memref<2x128x128xbf16, #tpu.memory_space<vmem>>, vector<1x128x128xbf16>
    %171 = vector.shape_cast %170 : vector<1x128x128xbf16> to vector<128x128xbf16>
    %c1_54 = arith.constant 1 : index
    %c0_55 = arith.constant 0 : index
    %c0_56 = arith.constant 0 : index
    %172 = vector.load %arg3[%c1_54, %c0_55, %c0_56] : memref<2x128x512xbf16, #tpu.memory_space<vmem>>, vector<1x128x512xbf16>
    %173 = vector.shape_cast %172 : vector<1x128x512xbf16> to vector<128x512xbf16>
    %c1_57 = arith.constant 1 : index
    %c0_58 = arith.constant 0 : index
    %c0_59 = arith.constant 0 : index
    %174 = vector.load %arg4[%c1_57, %c0_58, %c0_59] : memref<2x512x128xbf16, #tpu.memory_space<vmem>>, vector<1x512x128xbf16>
    %175 = vector.shape_cast %174 : vector<1x512x128xbf16> to vector<512x128xbf16>
    %c1_60 = arith.constant 1 : index
    %c0_61 = arith.constant 0 : index
    %c0_62 = arith.constant 0 : index
    %176 = vector.load %arg5[%c1_60, %c0_61, %c0_62] : memref<2x1x512xf32, #tpu.memory_space<vmem>>, vector<1x1x512xf32>
    %177 = vector.shape_cast %176 : vector<1x1x512xf32> to vector<1x512xf32>
    %c1_63 = arith.constant 1 : index
    %c0_64 = arith.constant 0 : index
    %c0_65 = arith.constant 0 : index
    %178 = vector.load %arg6[%c1_63, %c0_64, %c0_65] : memref<2x9x128xf32, #tpu.memory_space<vmem>>, vector<1x9x128xf32>
    %179 = vector.shape_cast %178 : vector<1x9x128xf32> to vector<9x128xf32>
    %180 = arith.truncf %167 : vector<16x128xf32> to vector<16x128xbf16>
    %cst_66 = arith.constant dense<0.000000e+00> : vector<16x384xf32>
    %181 = tpu.matmul %180, %169, %cst_66 {dimension_numbers = #tpu.dot_dimension_numbers<[1], [0], [0], [1], [0, 0, 1, 1], [], []>} : vector<16x128xbf16>, vector<128x384xbf16>, vector<16x384xf32> -> vector<16x384xf32>
    %182 = vector.extract_strided_slice %181 {offsets = [0, 0], sizes = [16, 128], strides = [1, 1]} : vector<16x384xf32> to vector<16x128xf32>
    %183 = vector.extract_strided_slice %179 {offsets = [0, 0], sizes = [1, 128], strides = [1, 1]} : vector<9x128xf32> to vector<1x128xf32>
    %184 = vector.broadcast %183 : vector<1x128xf32> to vector<16x128xf32>
    %185 = arith.addf %182, %184 : vector<16x128xf32>
    %186 = vector.shape_cast %185 : vector<16x128xf32> to vector<2x8x128xf32>
    %187 = arith.truncf %186 : vector<2x8x128xf32> to vector<2x8x128xbf16>
    %188 = vector.extract_strided_slice %181 {offsets = [0, 128], sizes = [16, 128], strides = [1, 1]} : vector<16x384xf32> to vector<16x128xf32>
    %189 = vector.extract_strided_slice %179 {offsets = [1, 0], sizes = [1, 128], strides = [1, 1]} : vector<9x128xf32> to vector<1x128xf32>
    %190 = vector.broadcast %189 : vector<1x128xf32> to vector<16x128xf32>
    %191 = arith.addf %188, %190 : vector<16x128xf32>
    %192 = vector.shape_cast %191 : vector<16x128xf32> to vector<2x8x128xf32>
    %193 = arith.truncf %192 : vector<2x8x128xf32> to vector<2x8x128xbf16>
    %194 = vector.extract_strided_slice %181 {offsets = [0, 256], sizes = [16, 128], strides = [1, 1]} : vector<16x384xf32> to vector<16x128xf32>
    %195 = vector.extract_strided_slice %179 {offsets = [2, 0], sizes = [1, 128], strides = [1, 1]} : vector<9x128xf32> to vector<1x128xf32>
    %196 = vector.broadcast %195 : vector<1x128xf32> to vector<16x128xf32>
    %197 = arith.addf %194, %196 : vector<16x128xf32>
    %198 = vector.shape_cast %197 : vector<16x128xf32> to vector<2x8x128xf32>
    %199 = arith.truncf %198 : vector<2x8x128xf32> to vector<2x8x128xbf16>
    %200 = vector.extract_strided_slice %187 {offsets = [0, 0, 0], sizes = [2, 8, 32], strides = [1, 1, 1]} : vector<2x8x128xbf16> to vector<2x8x32xbf16>
    %201 = vector.extract_strided_slice %193 {offsets = [0, 0, 0], sizes = [2, 8, 32], strides = [1, 1, 1]} : vector<2x8x128xbf16> to vector<2x8x32xbf16>
    "tpu.trace_start"() <{level = 10 : i32, message = "bqd,bkd->bqk"}> : () -> ()
    %cst_67 = arith.constant dense<0.000000e+00> : vector<2x8x8xf32>
    %202 = tpu.matmul %200, %201, %cst_67 {dimension_numbers = #tpu.dot_dimension_numbers<[2], [2], [1], [1], [0, 0, 0, 1, 1, 1], [0], [0]>} : vector<2x8x32xbf16>, vector<2x8x32xbf16>, vector<2x8x8xf32> -> vector<2x8x8xf32>
    "tpu.trace_stop"() : () -> ()
    %cst_68 = arith.constant dense<0xFF800000> : vector<2x8xf32>
    %203 = vector.multi_reduction <maximumf>, %202, %cst_68 [2] : vector<2x8x8xf32> to vector<2x8xf32>
    %204 = vector.shape_cast %203 : vector<2x8xf32> to vector<2x8x1xf32>
    %205 = vector.broadcast %204 : vector<2x8x1xf32> to vector<2x8x8xf32>
    %206 = arith.subf %202, %205 : vector<2x8x8xf32>
    %207 = math.exp %206 : vector<2x8x8xf32>
    %cst_69 = arith.constant dense<0.000000e+00> : vector<2x8xf32>
    %208 = vector.multi_reduction <add>, %207, %cst_69 [2] : vector<2x8x8xf32> to vector<2x8xf32>
    %209 = vector.shape_cast %208 : vector<2x8xf32> to vector<2x8x1xf32>
    %210 = tpu.reciprocal %209 {approx = true} : vector<2x8x1xf32> -> vector<2x8x1xf32>
    %211 = vector.broadcast %210 : vector<2x8x1xf32> to vector<2x8x8xf32>
    %212 = arith.mulf %207, %211 : vector<2x8x8xf32>
    %213 = arith.truncf %212 : vector<2x8x8xf32> to vector<2x8x8xbf16>
    %214 = vector.extract_strided_slice %199 {offsets = [0, 0, 0], sizes = [2, 8, 32], strides = [1, 1, 1]} : vector<2x8x128xbf16> to vector<2x8x32xbf16>
    "tpu.trace_start"() <{level = 10 : i32, message = "bqk,bkd->bqd"}> : () -> ()
    %cst_70 = arith.constant dense<0.000000e+00> : vector<2x8x32xf32>
    %215 = tpu.matmul %213, %214, %cst_70 {dimension_numbers = #tpu.dot_dimension_numbers<[2], [1], [1], [2], [0, 0, 0, 1, 1, 2], [0], [0]>} : vector<2x8x8xbf16>, vector<2x8x32xbf16>, vector<2x8x32xf32> -> vector<2x8x32xf32>
    "tpu.trace_stop"() : () -> ()
    %216 = vector.shape_cast %215 : vector<2x8x32xf32> to vector<16x32xf32>
    %217 = vector.extract_strided_slice %187 {offsets = [0, 0, 32], sizes = [2, 8, 32], strides = [1, 1, 1]} : vector<2x8x128xbf16> to vector<2x8x32xbf16>
    %218 = vector.extract_strided_slice %193 {offsets = [0, 0, 32], sizes = [2, 8, 32], strides = [1, 1, 1]} : vector<2x8x128xbf16> to vector<2x8x32xbf16>
    "tpu.trace_start"() <{level = 10 : i32, message = "bqd,bkd->bqk"}> : () -> ()
    %cst_71 = arith.constant dense<0.000000e+00> : vector<2x8x8xf32>
    %219 = tpu.matmul %217, %218, %cst_71 {dimension_numbers = #tpu.dot_dimension_numbers<[2], [2], [1], [1], [0, 0, 0, 1, 1, 1], [0], [0]>} : vector<2x8x32xbf16>, vector<2x8x32xbf16>, vector<2x8x8xf32> -> vector<2x8x8xf32>
    "tpu.trace_stop"() : () -> ()
    %cst_72 = arith.constant dense<0xFF800000> : vector<2x8xf32>
    %220 = vector.multi_reduction <maximumf>, %219, %cst_72 [2] : vector<2x8x8xf32> to vector<2x8xf32>
    %221 = vector.shape_cast %220 : vector<2x8xf32> to vector<2x8x1xf32>
    %222 = vector.broadcast %221 : vector<2x8x1xf32> to vector<2x8x8xf32>
    %223 = arith.subf %219, %222 : vector<2x8x8xf32>
    %224 = math.exp %223 : vector<2x8x8xf32>
    %cst_73 = arith.constant dense<0.000000e+00> : vector<2x8xf32>
    %225 = vector.multi_reduction <add>, %224, %cst_73 [2] : vector<2x8x8xf32> to vector<2x8xf32>
    %226 = vector.shape_cast %225 : vector<2x8xf32> to vector<2x8x1xf32>
    %227 = tpu.reciprocal %226 {approx = true} : vector<2x8x1xf32> -> vector<2x8x1xf32>
    %228 = vector.broadcast %227 : vector<2x8x1xf32> to vector<2x8x8xf32>
    %229 = arith.mulf %224, %228 : vector<2x8x8xf32>
    %230 = arith.truncf %229 : vector<2x8x8xf32> to vector<2x8x8xbf16>
    %231 = vector.extract_strided_slice %199 {offsets = [0, 0, 32], sizes = [2, 8, 32], strides = [1, 1, 1]} : vector<2x8x128xbf16> to vector<2x8x32xbf16>
    "tpu.trace_start"() <{level = 10 : i32, message = "bqk,bkd->bqd"}> : () -> ()
    %cst_74 = arith.constant dense<0.000000e+00> : vector<2x8x32xf32>
    %232 = tpu.matmul %230, %231, %cst_74 {dimension_numbers = #tpu.dot_dimension_numbers<[2], [1], [1], [2], [0, 0, 0, 1, 1, 2], [0], [0]>} : vector<2x8x8xbf16>, vector<2x8x32xbf16>, vector<2x8x32xf32> -> vector<2x8x32xf32>
    "tpu.trace_stop"() : () -> ()
    %233 = vector.shape_cast %232 : vector<2x8x32xf32> to vector<16x32xf32>
    %234 = vector.extract_strided_slice %187 {offsets = [0, 0, 64], sizes = [2, 8, 32], strides = [1, 1, 1]} : vector<2x8x128xbf16> to vector<2x8x32xbf16>
    %235 = vector.extract_strided_slice %193 {offsets = [0, 0, 64], sizes = [2, 8, 32], strides = [1, 1, 1]} : vector<2x8x128xbf16> to vector<2x8x32xbf16>
    "tpu.trace_start"() <{level = 10 : i32, message = "bqd,bkd->bqk"}> : () -> ()
    %cst_75 = arith.constant dense<0.000000e+00> : vector<2x8x8xf32>
    %236 = tpu.matmul %234, %235, %cst_75 {dimension_numbers = #tpu.dot_dimension_numbers<[2], [2], [1], [1], [0, 0, 0, 1, 1, 1], [0], [0]>} : vector<2x8x32xbf16>, vector<2x8x32xbf16>, vector<2x8x8xf32> -> vector<2x8x8xf32>
    "tpu.trace_stop"() : () -> ()
    %cst_76 = arith.constant dense<0xFF800000> : vector<2x8xf32>
    %237 = vector.multi_reduction <maximumf>, %236, %cst_76 [2] : vector<2x8x8xf32> to vector<2x8xf32>
    %238 = vector.shape_cast %237 : vector<2x8xf32> to vector<2x8x1xf32>
    %239 = vector.broadcast %238 : vector<2x8x1xf32> to vector<2x8x8xf32>
    %240 = arith.subf %236, %239 : vector<2x8x8xf32>
    %241 = math.exp %240 : vector<2x8x8xf32>
    %cst_77 = arith.constant dense<0.000000e+00> : vector<2x8xf32>
    %242 = vector.multi_reduction <add>, %241, %cst_77 [2] : vector<2x8x8xf32> to vector<2x8xf32>
    %243 = vector.shape_cast %242 : vector<2x8xf32> to vector<2x8x1xf32>
    %244 = tpu.reciprocal %243 {approx = true} : vector<2x8x1xf32> -> vector<2x8x1xf32>
    %245 = vector.broadcast %244 : vector<2x8x1xf32> to vector<2x8x8xf32>
    %246 = arith.mulf %241, %245 : vector<2x8x8xf32>
    %247 = arith.truncf %246 : vector<2x8x8xf32> to vector<2x8x8xbf16>
    %248 = vector.extract_strided_slice %199 {offsets = [0, 0, 64], sizes = [2, 8, 32], strides = [1, 1, 1]} : vector<2x8x128xbf16> to vector<2x8x32xbf16>
    "tpu.trace_start"() <{level = 10 : i32, message = "bqk,bkd->bqd"}> : () -> ()
    %cst_78 = arith.constant dense<0.000000e+00> : vector<2x8x32xf32>
    %249 = tpu.matmul %247, %248, %cst_78 {dimension_numbers = #tpu.dot_dimension_numbers<[2], [1], [1], [2], [0, 0, 0, 1, 1, 2], [0], [0]>} : vector<2x8x8xbf16>, vector<2x8x32xbf16>, vector<2x8x32xf32> -> vector<2x8x32xf32>
    "tpu.trace_stop"() : () -> ()
    %250 = vector.shape_cast %249 : vector<2x8x32xf32> to vector<16x32xf32>
    %251 = vector.extract_strided_slice %187 {offsets = [0, 0, 96], sizes = [2, 8, 32], strides = [1, 1, 1]} : vector<2x8x128xbf16> to vector<2x8x32xbf16>
    %252 = vector.extract_strided_slice %193 {offsets = [0, 0, 96], sizes = [2, 8, 32], strides = [1, 1, 1]} : vector<2x8x128xbf16> to vector<2x8x32xbf16>
    "tpu.trace_start"() <{level = 10 : i32, message = "bqd,bkd->bqk"}> : () -> ()
    %cst_79 = arith.constant dense<0.000000e+00> : vector<2x8x8xf32>
    %253 = tpu.matmul %251, %252, %cst_79 {dimension_numbers = #tpu.dot_dimension_numbers<[2], [2], [1], [1], [0, 0, 0, 1, 1, 1], [0], [0]>} : vector<2x8x32xbf16>, vector<2x8x32xbf16>, vector<2x8x8xf32> -> vector<2x8x8xf32>
    "tpu.trace_stop"() : () -> ()
    %cst_80 = arith.constant dense<0xFF800000> : vector<2x8xf32>
    %254 = vector.multi_reduction <maximumf>, %253, %cst_80 [2] : vector<2x8x8xf32> to vector<2x8xf32>
    %255 = vector.shape_cast %254 : vector<2x8xf32> to vector<2x8x1xf32>
    %256 = vector.broadcast %255 : vector<2x8x1xf32> to vector<2x8x8xf32>
    %257 = arith.subf %253, %256 : vector<2x8x8xf32>
    %258 = math.exp %257 : vector<2x8x8xf32>
    %cst_81 = arith.constant dense<0.000000e+00> : vector<2x8xf32>
    %259 = vector.multi_reduction <add>, %258, %cst_81 [2] : vector<2x8x8xf32> to vector<2x8xf32>
    %260 = vector.shape_cast %259 : vector<2x8xf32> to vector<2x8x1xf32>
    %261 = tpu.reciprocal %260 {approx = true} : vector<2x8x1xf32> -> vector<2x8x1xf32>
    %262 = vector.broadcast %261 : vector<2x8x1xf32> to vector<2x8x8xf32>
    %263 = arith.mulf %258, %262 : vector<2x8x8xf32>
    %264 = arith.truncf %263 : vector<2x8x8xf32> to vector<2x8x8xbf16>
    %265 = vector.extract_strided_slice %199 {offsets = [0, 0, 96], sizes = [2, 8, 32], strides = [1, 1, 1]} : vector<2x8x128xbf16> to vector<2x8x32xbf16>
    "tpu.trace_start"() <{level = 10 : i32, message = "bqk,bkd->bqd"}> : () -> ()
    %cst_82 = arith.constant dense<0.000000e+00> : vector<2x8x32xf32>
    %266 = tpu.matmul %264, %265, %cst_82 {dimension_numbers = #tpu.dot_dimension_numbers<[2], [1], [1], [2], [0, 0, 0, 1, 1, 2], [0], [0]>} : vector<2x8x8xbf16>, vector<2x8x32xbf16>, vector<2x8x32xf32> -> vector<2x8x32xf32>
    "tpu.trace_stop"() : () -> ()
    %267 = vector.shape_cast %266 : vector<2x8x32xf32> to vector<16x32xf32>
    %268 = tpu.concatenate %216, %233, %250, %267 in 1 : vector<16x32xf32>, vector<16x32xf32>, vector<16x32xf32>, vector<16x32xf32> -> vector<16x128xf32>
    %269 = arith.truncf %268 : vector<16x128xf32> to vector<16x128xbf16>
    %cst_83 = arith.constant dense<0.000000e+00> : vector<16x128xf32>
    %270 = tpu.matmul %269, %171, %cst_83 {dimension_numbers = #tpu.dot_dimension_numbers<[1], [0], [0], [1], [0, 0, 1, 1], [], []>} : vector<16x128xbf16>, vector<128x128xbf16>, vector<16x128xf32> -> vector<16x128xf32>
    %271 = vector.extract_strided_slice %179 {offsets = [3, 0], sizes = [1, 128], strides = [1, 1]} : vector<9x128xf32> to vector<1x128xf32>
    %272 = vector.broadcast %271 : vector<1x128xf32> to vector<16x128xf32>
    %273 = arith.addf %270, %272 : vector<16x128xf32>
    %274 = arith.addf %167, %273 : vector<16x128xf32>
    %275 = vector.extract_strided_slice %179 {offsets = [4, 0], sizes = [1, 128], strides = [1, 1]} : vector<9x128xf32> to vector<1x128xf32>
    %276 = vector.extract_strided_slice %179 {offsets = [5, 0], sizes = [1, 128], strides = [1, 1]} : vector<9x128xf32> to vector<1x128xf32>
    %cst_84 = arith.constant dense<0.000000e+00> : vector<16xf32>
    %277 = vector.multi_reduction <add>, %274, %cst_84 [1] : vector<16x128xf32> to vector<16xf32>
    %278 = vector.shape_cast %277 : vector<16xf32> to vector<16x1xf32>
    %cst_85 = arith.constant 1.280000e+02 : f32
    %279 = vector.broadcast %cst_85 : f32 to vector<16x1xf32>
    %280 = arith.divf %278, %279 : vector<16x1xf32>
    %281 = vector.broadcast %280 : vector<16x1xf32> to vector<16x128xf32>
    %282 = arith.subf %274, %281 : vector<16x128xf32>
    %283 = arith.mulf %282, %282 : vector<16x128xf32>
    %cst_86 = arith.constant dense<0.000000e+00> : vector<16xf32>
    %284 = vector.multi_reduction <add>, %283, %cst_86 [1] : vector<16x128xf32> to vector<16xf32>
    %285 = vector.shape_cast %284 : vector<16xf32> to vector<16x1xf32>
    %cst_87 = arith.constant 1.280000e+02 : f32
    %286 = vector.broadcast %cst_87 : f32 to vector<16x1xf32>
    %287 = arith.divf %285, %286 : vector<16x1xf32>
    %288 = vector.broadcast %280 : vector<16x1xf32> to vector<16x128xf32>
    %289 = arith.subf %274, %288 : vector<16x128xf32>
    %cst_88 = arith.constant 9.99999974E-6 : f32
    %290 = vector.broadcast %cst_88 : f32 to vector<16x1xf32>
    %291 = arith.addf %287, %290 : vector<16x1xf32>
    %292 = math.rsqrt %291 : vector<16x1xf32>
    %293 = vector.broadcast %292 : vector<16x1xf32> to vector<16x128xf32>
    %294 = arith.mulf %289, %293 : vector<16x128xf32>
    %295 = vector.broadcast %275 : vector<1x128xf32> to vector<16x128xf32>
    %296 = arith.mulf %294, %295 : vector<16x128xf32>
    %297 = vector.broadcast %276 : vector<1x128xf32> to vector<16x128xf32>
    %298 = arith.addf %296, %297 : vector<16x128xf32>
    %299 = arith.truncf %298 : vector<16x128xf32> to vector<16x128xbf16>
    %cst_89 = arith.constant dense<0.000000e+00> : vector<16x512xf32>
    %300 = tpu.matmul %299, %173, %cst_89 {dimension_numbers = #tpu.dot_dimension_numbers<[1], [0], [0], [1], [0, 0, 1, 1], [], []>} : vector<16x128xbf16>, vector<128x512xbf16>, vector<16x512xf32> -> vector<16x512xf32>
    %301 = vector.broadcast %177 : vector<1x512xf32> to vector<16x512xf32>
    %302 = arith.addf %300, %301 : vector<16x512xf32>
    %cst_90 = arith.constant 0.000000e+00 : f32
    %303 = vector.broadcast %cst_90 : f32 to vector<16x512xf32>
    %304 = arith.maximumf %302, %303 : vector<16x512xf32>
    %305 = arith.truncf %304 : vector<16x512xf32> to vector<16x512xbf16>
    %cst_91 = arith.constant dense<0.000000e+00> : vector<16x128xf32>
    %306 = tpu.matmul %305, %175, %cst_91 {dimension_numbers = #tpu.dot_dimension_numbers<[1], [0], [0], [1], [0, 0, 1, 1], [], []>} : vector<16x512xbf16>, vector<512x128xbf16>, vector<16x128xf32> -> vector<16x128xf32>
    %307 = vector.extract_strided_slice %179 {offsets = [6, 0], sizes = [1, 128], strides = [1, 1]} : vector<9x128xf32> to vector<1x128xf32>
    %308 = vector.broadcast %307 : vector<1x128xf32> to vector<16x128xf32>
    %309 = arith.addf %306, %308 : vector<16x128xf32>
    %310 = arith.addf %298, %309 : vector<16x128xf32>
    %311 = vector.extract_strided_slice %179 {offsets = [7, 0], sizes = [1, 128], strides = [1, 1]} : vector<9x128xf32> to vector<1x128xf32>
    %312 = vector.extract_strided_slice %179 {offsets = [8, 0], sizes = [1, 128], strides = [1, 1]} : vector<9x128xf32> to vector<1x128xf32>
    %cst_92 = arith.constant dense<0.000000e+00> : vector<16xf32>
    %313 = vector.multi_reduction <add>, %310, %cst_92 [1] : vector<16x128xf32> to vector<16xf32>
    %314 = vector.shape_cast %313 : vector<16xf32> to vector<16x1xf32>
    %cst_93 = arith.constant 1.280000e+02 : f32
    %315 = vector.broadcast %cst_93 : f32 to vector<16x1xf32>
    %316 = arith.divf %314, %315 : vector<16x1xf32>
    %317 = vector.broadcast %316 : vector<16x1xf32> to vector<16x128xf32>
    %318 = arith.subf %310, %317 : vector<16x128xf32>
    %319 = arith.mulf %318, %318 : vector<16x128xf32>
    %cst_94 = arith.constant dense<0.000000e+00> : vector<16xf32>
    %320 = vector.multi_reduction <add>, %319, %cst_94 [1] : vector<16x128xf32> to vector<16xf32>
    %321 = vector.shape_cast %320 : vector<16xf32> to vector<16x1xf32>
    %cst_95 = arith.constant 1.280000e+02 : f32
    %322 = vector.broadcast %cst_95 : f32 to vector<16x1xf32>
    %323 = arith.divf %321, %322 : vector<16x1xf32>
    %324 = vector.broadcast %316 : vector<16x1xf32> to vector<16x128xf32>
    %325 = arith.subf %310, %324 : vector<16x128xf32>
    %cst_96 = arith.constant 9.99999974E-6 : f32
    %326 = vector.broadcast %cst_96 : f32 to vector<16x1xf32>
    %327 = arith.addf %323, %326 : vector<16x1xf32>
    %328 = math.rsqrt %327 : vector<16x1xf32>
    %329 = vector.broadcast %328 : vector<16x1xf32> to vector<16x128xf32>
    %330 = arith.mulf %325, %329 : vector<16x128xf32>
    %331 = vector.broadcast %311 : vector<1x128xf32> to vector<16x128xf32>
    %332 = arith.mulf %330, %331 : vector<16x128xf32>
    %333 = vector.broadcast %312 : vector<1x128xf32> to vector<16x128xf32>
    %334 = arith.addf %332, %333 : vector<16x128xf32>
    %335 = vector.shape_cast %334 : vector<16x128xf32> to vector<2x8x128xf32>
    %336 = vector.extract_strided_slice %335 {offsets = [0, 7, 0], sizes = [2, 1, 128], strides = [1, 1, 1]} : vector<2x8x128xf32> to vector<2x1x128xf32>
    %337 = vector.shape_cast %336 : vector<2x1x128xf32> to vector<2x128xf32>
    %c0_97 = arith.constant 0 : index
    %c0_98 = arith.constant 0 : index
    %338 = vector.load %arg11[%c0_97, %c0_98] : memref<9x128xf32, #tpu.memory_space<vmem>>, vector<9x128xf32>
    %339 = arith.truncf %337 : vector<2x128xf32> to vector<2x128xbf16>
    %c0_99 = arith.constant 0 : index
    %c0_100 = arith.constant 0 : index
    %340 = vector.load %arg7[%c0_99, %c0_100] : memref<128x128xbf16, #tpu.memory_space<vmem>>, vector<128x128xbf16>
    %cst_101 = arith.constant dense<0.000000e+00> : vector<2x128xf32>
    %341 = tpu.matmul %339, %340, %cst_101 {dimension_numbers = #tpu.dot_dimension_numbers<[1], [0], [0], [1], [0, 0, 1, 1], [], []>} : vector<2x128xbf16>, vector<128x128xbf16>, vector<2x128xf32> -> vector<2x128xf32>
    %342 = vector.extract_strided_slice %338 {offsets = [0, 0], sizes = [1, 128], strides = [1, 1]} : vector<9x128xf32> to vector<1x128xf32>
    %343 = vector.broadcast %342 : vector<1x128xf32> to vector<2x128xf32>
    %344 = arith.addf %341, %343 : vector<2x128xf32>
    %345 = vector.extract_strided_slice %338 {offsets = [1, 0], sizes = [1, 128], strides = [1, 1]} : vector<9x128xf32> to vector<1x128xf32>
    %346 = vector.extract_strided_slice %338 {offsets = [2, 0], sizes = [1, 128], strides = [1, 1]} : vector<9x128xf32> to vector<1x128xf32>
    %cst_102 = arith.constant dense<0.000000e+00> : vector<2xf32>
    %347 = vector.multi_reduction <add>, %344, %cst_102 [1] : vector<2x128xf32> to vector<2xf32>
    %348 = vector.shape_cast %347 : vector<2xf32> to vector<2x1xf32>
    %cst_103 = arith.constant 1.280000e+02 : f32
    %349 = vector.broadcast %cst_103 : f32 to vector<2x1xf32>
    %350 = arith.divf %348, %349 : vector<2x1xf32>
    %351 = vector.broadcast %350 : vector<2x1xf32> to vector<2x128xf32>
    %352 = arith.subf %344, %351 : vector<2x128xf32>
    %353 = arith.mulf %352, %352 : vector<2x128xf32>
    %cst_104 = arith.constant dense<0.000000e+00> : vector<2xf32>
    %354 = vector.multi_reduction <add>, %353, %cst_104 [1] : vector<2x128xf32> to vector<2xf32>
    %355 = vector.shape_cast %354 : vector<2xf32> to vector<2x1xf32>
    %cst_105 = arith.constant 1.280000e+02 : f32
    %356 = vector.broadcast %cst_105 : f32 to vector<2x1xf32>
    %357 = arith.divf %355, %356 : vector<2x1xf32>
    %358 = vector.broadcast %350 : vector<2x1xf32> to vector<2x128xf32>
    %359 = arith.subf %344, %358 : vector<2x128xf32>
    %cst_106 = arith.constant 9.99999974E-6 : f32
    %360 = vector.broadcast %cst_106 : f32 to vector<2x1xf32>
    %361 = arith.addf %357, %360 : vector<2x1xf32>
    %362 = math.rsqrt %361 : vector<2x1xf32>
    %363 = vector.broadcast %362 : vector<2x1xf32> to vector<2x128xf32>
    %364 = arith.mulf %359, %363 : vector<2x128xf32>
    %365 = vector.broadcast %345 : vector<1x128xf32> to vector<2x128xf32>
    %366 = arith.mulf %364, %365 : vector<2x128xf32>
    %367 = vector.broadcast %346 : vector<1x128xf32> to vector<2x128xf32>
    %368 = arith.addf %366, %367 : vector<2x128xf32>
    %cst_107 = arith.constant 0.000000e+00 : f32
    %369 = vector.broadcast %cst_107 : f32 to vector<2x128xf32>
    %370 = arith.maximumf %368, %369 : vector<2x128xf32>
    %371 = arith.truncf %370 : vector<2x128xf32> to vector<2x128xbf16>
    %c0_108 = arith.constant 0 : index
    %c0_109 = arith.constant 0 : index
    %372 = vector.load %arg8[%c0_108, %c0_109] : memref<128x64xbf16, #tpu.memory_space<vmem>>, vector<128x64xbf16>
    %cst_110 = arith.constant dense<0.000000e+00> : vector<2x64xf32>
    %373 = tpu.matmul %371, %372, %cst_110 {dimension_numbers = #tpu.dot_dimension_numbers<[1], [0], [0], [1], [0, 0, 1, 1], [], []>} : vector<2x128xbf16>, vector<128x64xbf16>, vector<2x64xf32> -> vector<2x64xf32>
    %374 = vector.extract_strided_slice %338 {offsets = [6, 0], sizes = [1, 64], strides = [1, 1]} : vector<9x128xf32> to vector<1x64xf32>
    %375 = vector.broadcast %374 : vector<1x64xf32> to vector<2x64xf32>
    %376 = arith.addf %373, %375 : vector<2x64xf32>
    %377 = arith.truncf %376 : vector<2x64xf32> to vector<2x64xbf16>
    %c0_111 = arith.constant 0 : index
    %c0_112 = arith.constant 0 : index
    %378 = vector.load %arg9[%c0_111, %c0_112] : memref<64x256xbf16, #tpu.memory_space<vmem>>, vector<64x256xbf16>
    %cst_113 = arith.constant dense<0.000000e+00> : vector<2x256xf32>
    %379 = tpu.matmul %377, %378, %cst_113 {dimension_numbers = #tpu.dot_dimension_numbers<[1], [0], [0], [1], [0, 0, 1, 1], [], []>} : vector<2x64xbf16>, vector<64x256xbf16>, vector<2x256xf32> -> vector<2x256xf32>
    %380 = vector.extract_strided_slice %379 {offsets = [0, 0], sizes = [2, 128], strides = [1, 1]} : vector<2x256xf32> to vector<2x128xf32>
    %381 = vector.extract_strided_slice %338 {offsets = [3, 0], sizes = [1, 128], strides = [1, 1]} : vector<9x128xf32> to vector<1x128xf32>
    %382 = vector.broadcast %381 : vector<1x128xf32> to vector<2x128xf32>
    %383 = arith.addf %380, %382 : vector<2x128xf32>
    %384 = vector.extract_strided_slice %379 {offsets = [0, 128], sizes = [2, 2], strides = [1, 1]} : vector<2x256xf32> to vector<2x2xf32>
    %385 = vector.extract_strided_slice %338 {offsets = [7, 0], sizes = [1, 2], strides = [1, 1]} : vector<9x128xf32> to vector<1x2xf32>
    %386 = vector.broadcast %385 : vector<1x2xf32> to vector<2x2xf32>
    %387 = arith.addf %384, %386 : vector<2x2xf32>
    %388 = vector.extract_strided_slice %387 {offsets = [0, 0], sizes = [2, 1], strides = [1, 1]} : vector<2x2xf32> to vector<2x1xf32>
    %389 = vector.extract_strided_slice %387 {offsets = [0, 1], sizes = [2, 1], strides = [1, 1]} : vector<2x2xf32> to vector<2x1xf32>
    %390 = arith.negf %388 : vector<2x1xf32>
    %391 = math.exp %390 : vector<2x1xf32>
    %cst_114 = arith.constant 1.000000e+00 : f32
    %392 = vector.broadcast %cst_114 : f32 to vector<2x1xf32>
    %393 = arith.addf %392, %391 : vector<2x1xf32>
    %394 = arith.divf %392, %393 : vector<2x1xf32>
    %cst_115 = arith.constant 1.900000e+00 : f32
    %395 = vector.broadcast %cst_115 : f32 to vector<2x1xf32>
    %396 = arith.mulf %395, %394 : vector<2x1xf32>
    %cst_116 = arith.constant 1.000000e-01 : f32
    %397 = vector.broadcast %cst_116 : f32 to vector<2x1xf32>
    %398 = arith.addf %397, %396 : vector<2x1xf32>
    %399 = arith.negf %389 : vector<2x1xf32>
    %400 = math.exp %399 : vector<2x1xf32>
    %cst_117 = arith.constant 1.000000e+00 : f32
    %401 = vector.broadcast %cst_117 : f32 to vector<2x1xf32>
    %402 = arith.addf %401, %400 : vector<2x1xf32>
    %403 = arith.divf %401, %402 : vector<2x1xf32>
    %cst_118 = arith.constant 8.000000e-01 : f32
    %404 = vector.broadcast %cst_118 : f32 to vector<2x1xf32>
    %405 = arith.mulf %404, %403 : vector<2x1xf32>
    %cst_119 = arith.constant 1.000000e-01 : f32
    %406 = vector.broadcast %cst_119 : f32 to vector<2x1xf32>
    %407 = arith.addf %406, %405 : vector<2x1xf32>
    %408 = vector.extract_strided_slice %338 {offsets = [4, 0], sizes = [1, 128], strides = [1, 1]} : vector<9x128xf32> to vector<1x128xf32>
    %409 = vector.extract_strided_slice %338 {offsets = [5, 0], sizes = [1, 128], strides = [1, 1]} : vector<9x128xf32> to vector<1x128xf32>
    %cst_120 = arith.constant dense<0.000000e+00> : vector<2xf32>
    %410 = vector.multi_reduction <add>, %383, %cst_120 [1] : vector<2x128xf32> to vector<2xf32>
    %411 = vector.shape_cast %410 : vector<2xf32> to vector<2x1xf32>
    %cst_121 = arith.constant 1.280000e+02 : f32
    %412 = vector.broadcast %cst_121 : f32 to vector<2x1xf32>
    %413 = arith.divf %411, %412 : vector<2x1xf32>
    %414 = vector.broadcast %413 : vector<2x1xf32> to vector<2x128xf32>
    %415 = arith.subf %383, %414 : vector<2x128xf32>
    %416 = arith.mulf %415, %415 : vector<2x128xf32>
    %cst_122 = arith.constant dense<0.000000e+00> : vector<2xf32>
    %417 = vector.multi_reduction <add>, %416, %cst_122 [1] : vector<2x128xf32> to vector<2xf32>
    %418 = vector.shape_cast %417 : vector<2xf32> to vector<2x1xf32>
    %cst_123 = arith.constant 1.280000e+02 : f32
    %419 = vector.broadcast %cst_123 : f32 to vector<2x1xf32>
    %420 = arith.divf %418, %419 : vector<2x1xf32>
    %421 = vector.broadcast %413 : vector<2x1xf32> to vector<2x128xf32>
    %422 = arith.subf %383, %421 : vector<2x128xf32>
    %cst_124 = arith.constant 9.99999974E-6 : f32
    %423 = vector.broadcast %cst_124 : f32 to vector<2x1xf32>
    %424 = arith.addf %420, %423 : vector<2x1xf32>
    %425 = math.rsqrt %424 : vector<2x1xf32>
    %426 = vector.broadcast %425 : vector<2x1xf32> to vector<2x128xf32>
    %427 = arith.mulf %422, %426 : vector<2x128xf32>
    %428 = vector.broadcast %408 : vector<1x128xf32> to vector<2x128xf32>
    %429 = arith.mulf %427, %428 : vector<2x128xf32>
    %430 = vector.broadcast %409 : vector<1x128xf32> to vector<2x128xf32>
    %431 = arith.addf %429, %430 : vector<2x128xf32>
    %cst_125 = arith.constant 0.000000e+00 : f32
    %432 = vector.broadcast %cst_125 : f32 to vector<2x128xf32>
    %433 = arith.maximumf %431, %432 : vector<2x128xf32>
    %434 = arith.truncf %433 : vector<2x128xf32> to vector<2x128xbf16>
    %c0_126 = arith.constant 0 : index
    %c0_127 = arith.constant 0 : index
    %435 = vector.load %arg10[%c0_126, %c0_127] : memref<128x1xbf16, #tpu.memory_space<vmem>>, vector<128x1xbf16>
    %cst_128 = arith.constant dense<0.000000e+00> : vector<2x1xf32>
    %436 = tpu.matmul %434, %435, %cst_128 {dimension_numbers = #tpu.dot_dimension_numbers<[1], [0], [0], [1], [0, 0, 1, 1], [], []>} : vector<2x128xbf16>, vector<128x1xbf16>, vector<2x1xf32> -> vector<2x1xf32>
    %437 = vector.extract_strided_slice %338 {offsets = [8, 0], sizes = [1, 1], strides = [1, 1]} : vector<9x128xf32> to vector<1x1xf32>
    %438 = vector.broadcast %437 : vector<1x1xf32> to vector<2x1xf32>
    %439 = arith.addf %436, %438 : vector<2x1xf32>
    %cst_129 = arith.constant 0.000000e+00 : f32
    %440 = vector.broadcast %cst_129 : f32 to vector<2x59xf32>
    %441 = tpu.concatenate %376, %398, %407, %439, %388, %389, %440 in 1 : vector<2x64xf32>, vector<2x1xf32>, vector<2x1xf32>, vector<2x1xf32>, vector<2x1xf32>, vector<2x1xf32>, vector<2x59xf32> -> vector<2x128xf32>
    %c0_130 = arith.constant 0 : index
    %c0_131 = arith.constant 0 : index
    %442 = vector.load %arg12[%c0_130, %c0_131] : memref<2x128xf32, #tpu.memory_space<vmem>>, vector<2x128xf32>
    tpu.vector_store %arg12[%c0_130, %c0_131], %441 {strides = array<i32>} : memref<2x128xf32, #tpu.memory_space<vmem>>, vector<2x128xf32>,
    return
  }
}

</mosaic_0001>

<llo_original>
// kernel: belief_network_forward.1
$region0: #{belief_network_forward.1}
  #allocation0 [shape = 'u32[]', space=smem, size = 0x4, offset = 0x4, fixed_abs, tag = 'smem constant byte address 0x4 - core index']
  #allocation1 [shape = 'u32[144,128]{1,0:T(1,128)}', space=vmem, size = 0x12000, scoped, tag = 'internal scratch']
  %s0 = inlined_call_operand.vmem [shape: f32[16,128], index: 0, kind: input, shape index: {}]
  %s1 = inlined_call_operand.hbm [shape: bf16[2,128,384], index: 1, kind: input, shape index: {}]
  %s2 = inlined_call_operand.vmem [shape: bf16[2,128,128], index: 2, kind: input, shape index: {}]
  %s3 = inlined_call_operand.vmem [shape: bf16[2,128,512], index: 3, kind: input, shape index: {}]
  %s4 = inlined_call_operand.hbm [shape: bf16[2,512,128], index: 4, kind: input, shape index: {}]
  %s5 = inlined_call_operand.vmem [shape: f32[2,1,512], index: 5, kind: input, shape index: {}]
  %s6 = inlined_call_operand.vmem [shape: f32[2,9,128], index: 6, kind: input, shape index: {}]
  %s7 = inlined_call_operand.vmem [shape: bf16[128,128], index: 7, kind: input, shape index: {}]
  %s8 = inlined_call_operand.vmem [shape: bf16[128,64], index: 8, kind: input, shape index: {}]
  %s9 = inlined_call_operand.vmem [shape: bf16[64,256], index: 9, kind: input, shape index: {}]
  %s10 = inlined_call_operand.vmem [shape: bf16[128,1], index: 10, kind: input, shape index: {}]
  %s11 = inlined_call_operand.vmem [shape: f32[9,128], index: 11, kind: input, shape index: {}]
  %s12 = inlined_call_operand.vmem [shape: f32[2,128], index: 12, kind: output, shape index: {}]
  %s13 = sld [smem:[#allocation0]]
  $region66: #{belief_network_forward.1} parent=0
    _
  %s15 = ssub.s32 1, %s13
  %s16 = scalar_select 0, %s15, %s13
  $region1: #{belief_network_forward.1} parent=0
    #allocation2 [shape = 'u8[196608]{0}', space=vmem, size = 0x30000, scoped, tag = 'input window, operand 1, single buffered']
    #allocation3 [shape = 's32[1]{0}', space=sflag, size = 0x4, scoped, tag = 'scoped memory for belief_network_forward.1']
    #allocation4 [shape = 'u8[262144]{0}', space=vmem, size = 0x40000, scoped, tag = 'input window, operand 4, single buffered']
    #allocation5 [shape = 's32[1]{0}', space=sflag, size = 0x4, scoped, tag = 'scoped memory for belief_network_forward.1']
    %17 = vsyncpa [#allocation3], 0
    %18 = vsyncpa [#allocation5], 0
    // Predicated region
    $region2: #{belief_network_forward.1} parent=1 // pred_check
      _
    $region3: #{belief_network_forward.1} parent=1 // pred_check_branch
      %20 = sbr.rel (0) target = $region5
    $region4: #{belief_network_forward.1} parent=1 // pred_region
      _
    $region5: #{belief_network_forward.1} parent=1 // pred_fallthru
      _
    // Predicated region
    $region6: #{belief_network_forward.1} parent=1 // pred_check
      _
    $region7: #{belief_network_forward.1} parent=1 // pred_check_branch
      %22 = sbr.rel (0) target = $region9
    $region8: #{belief_network_forward.1} parent=1 // pred_region
      %s24 = ssub.s32 6144, 6144
      %25 = vsyncadd [#allocation3], %s24
      %s26 = sshll.u32 [#allocation2], 4
      %s27 = int_to_ptr.vmem [resolvable:$true] %s26
      %32 = dma.hbm_to_vmem [thread:$0]  %s1, 6144, %s27, [#allocation3], 192, 192, 12
    $region9: #{belief_network_forward.1} parent=1 // pred_fallthru
      _
    // Predicated region
    $region10: #{belief_network_forward.1} parent=1 // pred_check
      _
    $region11: #{belief_network_forward.1} parent=1 // pred_check_branch
      %34 = sbr.rel (0) target = $region13
    $region12: #{belief_network_forward.1} parent=1 // pred_region
      _
    $region13: #{belief_network_forward.1} parent=1 // pred_fallthru
      _
    // Predicated region
    $region14: #{belief_network_forward.1} parent=1 // pred_check
      _
    $region15: #{belief_network_forward.1} parent=1 // pred_check_branch
      %36 = sbr.rel (0) target = $region17
    $region16: #{belief_network_forward.1} parent=1 // pred_region
      _
    $region17: #{belief_network_forward.1} parent=1 // pred_fallthru
      _
    // Predicated region
    $region18: #{belief_network_forward.1} parent=1 // pred_check
      _
    $region19: #{belief_network_forward.1} parent=1 // pred_check_branch
      %38 = sbr.rel (0) target = $region21
    $region20: #{belief_network_forward.1} parent=1 // pred_region
      %s40 = ssub.s32 8192, 8192
      %41 = vsyncadd [#allocation5], %s40
      %s42 = sshll.u32 [#allocation4], 4
      %s43 = int_to_ptr.vmem [resolvable:$true] %s42
      %48 = dma.hbm_to_vmem [thread:$0]  %s4, 8192, %s43, [#allocation5], 64, 64, 4
    $region21: #{belief_network_forward.1} parent=1 // pred_fallthru
      _
    // Predicated region
    $region22: #{belief_network_forward.1} parent=1 // pred_check
      _
    $region23: #{belief_network_forward.1} parent=1 // pred_check_branch
      %50 = sbr.rel (0) target = $region25
    $region24: #{belief_network_forward.1} parent=1 // pred_region
      _
    $region25: #{belief_network_forward.1} parent=1 // pred_fallthru
      _
    // Predicated region
    $region26: #{belief_network_forward.1} parent=1 // pred_check
      _
    $region27: #{belief_network_forward.1} parent=1 // pred_check_branch
      %52 = sbr.rel (0) target = $region29
    $region28: #{belief_network_forward.1} parent=1 // pred_region
      _
    $region29: #{belief_network_forward.1} parent=1 // pred_fallthru
      _
    // Predicated region
    $region30: #{belief_network_forward.1} parent=1 // pred_check
      _
    $region31: #{belief_network_forward.1} parent=1 // pred_check_branch
      %54 = sbr.rel (0) target = $region33
    $region32: #{belief_network_forward.1} parent=1 // pred_region
      _
    $region33: #{belief_network_forward.1} parent=1 // pred_fallthru
      _
    // Predicated region
    $region34: #{belief_network_forward.1} parent=1 // pred_check
      _
    $region35: #{belief_network_forward.1} parent=1 // pred_check_branch
      %56 = sbr.rel (0) target = $region37
    $region36: #{belief_network_forward.1} parent=1 // pred_region
      _
    $region37: #{belief_network_forward.1} parent=1 // pred_fallthru
      _
    // Predicated region
    $region38: #{belief_network_forward.1} parent=1 // pred_check
      _
    $region39: #{belief_network_forward.1} parent=1 // pred_check_branch
      %58 = sbr.rel (0) target = $region41
    $region40: #{belief_network_forward.1} parent=1 // pred_region
      _
    $region41: #{belief_network_forward.1} parent=1 // pred_fallthru
      _
    // Predicated region
    $region42: #{belief_network_forward.1} parent=1 // pred_check
      _
    $region43: #{belief_network_forward.1} parent=1 // pred_check_branch
      %60 = sbr.rel (0) target = $region45
    $region44: #{belief_network_forward.1} parent=1 // pred_region
      _
    $region45: #{belief_network_forward.1} parent=1 // pred_fallthru
      _
    // Predicated region
    $region46: #{belief_network_forward.1} parent=1 // pred_check
      _
    $region47: #{belief_network_forward.1} parent=1 // pred_check_branch
      %62 = sbr.rel (0) target = $region49
    $region48: #{belief_network_forward.1} parent=1 // pred_region
      _
    $region49: #{belief_network_forward.1} parent=1 // pred_fallthru
      _
    // Predicated region
    $region50: #{belief_network_forward.1} parent=1 // pred_check
      _
    $region51: #{belief_network_forward.1} parent=1 // pred_check_branch
      %64 = sbr.rel (0) target = $region53
    $region52: #{belief_network_forward.1} parent=1 // pred_region
      %65 = dma.done [#allocation3], 6144
    $region53: #{belief_network_forward.1} parent=1 // pred_fallthru
      _
    // Predicated region
    $region54: #{belief_network_forward.1} parent=1 // pred_check
      _
    $region55: #{belief_network_forward.1} parent=1 // pred_check_branch
      %67 = sbr.rel (0) target = $region57
    $region56: #{belief_network_forward.1} parent=1 // pred_region
      %68 = dma.done [#allocation5], 8192
    $region57: #{belief_network_forward.1} parent=1 // pred_fallthru
      _
    %v70 = vld [vmem:[%s0] sm:$0xff]
    %v71 = vld [vmem:[%s0 + $0x8] sm:$0xff]
    %v72 = vld [vmem:[#allocation2] sm:$0xff]
    %v73 = vld [vmem:[#allocation2 + $0x8] sm:$0xf]
    %v74 = vld [vmem:[#allocation2 + $0xc] sm:$0xff]
    %v75 = vld [vmem:[#allocation2 + $0x14] sm:$0xf]
    %v76 = vld [vmem:[#allocation2 + $0x18] sm:$0xff]
    %v77 = vld [vmem:[#allocation2 + $0x20] sm:$0xf]
    %v78 = vld [vmem:[#allocation2 + $0x24] sm:$0xff]
    %v79 = vld [vmem:[#allocation2 + $0x2c] sm:$0xf]
    %v80 = vld [vmem:[#allocation2 + $0x30] sm:$0xff]
    %v81 = vld [vmem:[#allocation2 + $0x38] sm:$0xf]
    %v82 = vld [vmem:[#allocation2 + $0x3c] sm:$0xff]
    %v83 = vld [vmem:[#allocation2 + $0x44] sm:$0xf]
    %v84 = vld [vmem:[#allocation2 + $0x48] sm:$0xff]
    %v85 = vld [vmem:[#allocation2 + $0x50] sm:$0xf]
    %v86 = vld [vmem:[#allocation2 + $0x54] sm:$0xff]
    %v87 = vld [vmem:[#allocation2 + $0x5c] sm:$0xf]
    %v88 = vld [vmem:[#allocation2 + $0x60] sm:$0xff]
    %v89 = vld [vmem:[#allocation2 + $0x68] sm:$0xf]
    %v90 = vld [vmem:[#allocation2 + $0x6c] sm:$0xff]
    %v91 = vld [vmem:[#allocation2 + $0x74] sm:$0xf]
    %v92 = vld [vmem:[#allocation2 + $0x78] sm:$0xff]
    %v93 = vld [vmem:[#allocation2 + $0x80] sm:$0xf]
    %v94 = vld [vmem:[#allocation2 + $0x84] sm:$0xff]
    %v95 = vld [vmem:[#allocation2 + $0x8c] sm:$0xf]
    %v96 = vld [vmem:[#allocation2 + $0x90] sm:$0xff]
    %v97 = vld [vmem:[#allocation2 + $0x98] sm:$0xf]
    %v98 = vld [vmem:[#allocation2 + $0x9c] sm:$0xff]
    %v99 = vld [vmem:[#allocation2 + $0xa4] sm:$0xf]
    %v100 = vld [vmem:[#allocation2 + $0xa8] sm:$0xff]
    %v101 = vld [vmem:[#allocation2 + $0xb0] sm:$0xf]
    %v102 = vld [vmem:[#allocation2 + $0xb4] sm:$0xff]
    %v103 = vld [vmem:[#allocation2 + $0xbc] sm:$0xf]
    %v104 = vld [vmem:[%s2] sm:$0xf]
    %v105 = vld [vmem:[%s2 + $0x4] sm:$0xf]
    %v106 = vld [vmem:[%s2 + $0x8] sm:$0xf]
    %v107 = vld [vmem:[%s2 + $0xc] sm:$0xf]
    %v108 = vld [vmem:[%s2 + $0x10] sm:$0xf]
    %v109 = vld [vmem:[%s2 + $0x14] sm:$0xf]
    %v110 = vld [vmem:[%s2 + $0x18] sm:$0xf]
    %v111 = vld [vmem:[%s2 + $0x1c] sm:$0xf]
    %v112 = vld [vmem:[%s2 + $0x20] sm:$0xf]
    %v113 = vld [vmem:[%s2 + $0x24] sm:$0xf]
    %v114 = vld [vmem:[%s2 + $0x28] sm:$0xf]
    %v115 = vld [vmem:[%s2 + $0x2c] sm:$0xf]
    %v116 = vld [vmem:[%s2 + $0x30] sm:$0xf]
    %v117 = vld [vmem:[%s2 + $0x34] sm:$0xf]
    %v118 = vld [vmem:[%s2 + $0x38] sm:$0xf]
    %v119 = vld [vmem:[%s2 + $0x3c] sm:$0xf]
    %v120 = vld [vmem:[%s3] sm:$0xff]
    %v121 = vld [vmem:[%s3 + $0x8] sm:$0xff]
    %v122 = vld [vmem:[%s3 + $0x10] sm:$0xff]
    %v123 = vld [vmem:[%s3 + $0x18] sm:$0xff]
    %v124 = vld [vmem:[%s3 + $0x20] sm:$0xff]
    %v125 = vld [vmem:[%s3 + $0x28] sm:$0xff]
    %v126 = vld [vmem:[%s3 + $0x30] sm:$0xff]
    %v127 = vld [vmem:[%s3 + $0x38] sm:$0xff]
    %v128 = vld [vmem:[%s3 + $0x40] sm:$0xff]
    %v129 = vld [vmem:[%s3 + $0x48] sm:$0xff]
    %v130 = vld [vmem:[%s3 + $0x50] sm:$0xff]
    %v131 = vld [vmem:[%s3 + $0x58] sm:$0xff]
    %v132 = vld [vmem:[%s3 + $0x60] sm:$0xff]
    %v133 = vld [vmem:[%s3 + $0x68] sm:$0xff]
    %v134 = vld [vmem:[%s3 + $0x70] sm:$0xff]
    %v135 = vld [vmem:[%s3 + $0x78] sm:$0xff]
    %v136 = vld [vmem:[%s3 + $0x80] sm:$0xff]
    %v137 = vld [vmem:[%s3 + $0x88] sm:$0xff]
    %v138 = vld [vmem:[%s3 + $0x90] sm:$0xff]
    %v139 = vld [vmem:[%s3 + $0x98] sm:$0xff]
    %v140 = vld [vmem:[%s3 + $0xa0] sm:$0xff]
    %v141 = vld [vmem:[%s3 + $0xa8] sm:$0xff]
    %v142 = vld [vmem:[%s3 + $0xb0] sm:$0xff]
    %v143 = vld [vmem:[%s3 + $0xb8] sm:$0xff]
    %v144 = vld [vmem:[%s3 + $0xc0] sm:$0xff]
    %v145 = vld [vmem:[%s3 + $0xc8] sm:$0xff]
    %v146 = vld [vmem:[%s3 + $0xd0] sm:$0xff]
    %v147 = vld [vmem:[%s3 + $0xd8] sm:$0xff]
    %v148 = vld [vmem:[%s3 + $0xe0] sm:$0xff]
    %v149 = vld [vmem:[%s3 + $0xe8] sm:$0xff]
    %v150 = vld [vmem:[%s3 + $0xf0] sm:$0xff]
    %v151 = vld [vmem:[%s3 + $0xf8] sm:$0xff]
    %v152 = vld [vmem:[#allocation4] sm:$0xf]
    %v153 = vld [vmem:[#allocation4 + $0x4] sm:$0xf]
    %v154 = vld [vmem:[#allocation4 + $0x8] sm:$0xf]
    %v155 = vld [vmem:[#allocation4 + $0xc] sm:$0xf]
    %v156 = vld [vmem:[#allocation4 + $0x10] sm:$0xf]
    %v157 = vld [vmem:[#allocation4 + $0x14] sm:$0xf]
    %v158 = vld [vmem:[#allocation4 + $0x18] sm:$0xf]
    %v159 = vld [vmem:[#allocation4 + $0x1c] sm:$0xf]
    %v160 = vld [vmem:[#allocation4 + $0x20] sm:$0xf]
    %v161 = vld [vmem:[#allocation4 + $0x24] sm:$0xf]
    %v162 = vld [vmem:[#allocation4 + $0x28] sm:$0xf]
    %v163 = vld [vmem:[#allocation4 + $0x2c] sm:$0xf]
    %v164 = vld [vmem:[#allocation4 + $0x30] sm:$0xf]
    %v165 = vld [vmem:[#allocation4 + $0x34] sm:$0xf]
    %v166 = vld [vmem:[#allocation4 + $0x38] sm:$0xf]
    %v167 = vld [vmem:[#allocation4 + $0x3c] sm:$0xf]
    %v168 = vld [vmem:[#allocation4 + $0x40] sm:$0xf]
    %v169 = vld [vmem:[#allocation4 + $0x44] sm:$0xf]
    %v170 = vld [vmem:[#allocation4 + $0x48] sm:$0xf]
    %v171 = vld [vmem:[#allocation4 + $0x4c] sm:$0xf]
    %v172 = vld [vmem:[#allocation4 + $0x50] sm:$0xf]
    %v173 = vld [vmem:[#allocation4 + $0x54] sm:$0xf]
    %v174 = vld [vmem:[#allocation4 + $0x58] sm:$0xf]
    %v175 = vld [vmem:[#allocation4 + $0x5c] sm:$0xf]
    %v176 = vld [vmem:[#allocation4 + $0x60] sm:$0xf]
    %v177 = vld [vmem:[#allocation4 + $0x64] sm:$0xf]
    %v178 = vld [vmem:[#allocation4 + $0x68] sm:$0xf]
    %v179 = vld [vmem:[#allocation4 + $0x6c] sm:$0xf]
    %v180 = vld [vmem:[#allocation4 + $0x70] sm:$0xf]
    %v181 = vld [vmem:[#allocation4 + $0x74] sm:$0xf]
    %v182 = vld [vmem:[#allocation4 + $0x78] sm:$0xf]
    %v183 = vld [vmem:[#allocation4 + $0x7c] sm:$0xf]
    %v184 = vld [vmem:[#allocation4 + $0x80] sm:$0xf]
    %v185 = vld [vmem:[#allocation4 + $0x84] sm:$0xf]
    %v186 = vld [vmem:[#allocation4 + $0x88] sm:$0xf]
    %v187 = vld [vmem:[#allocation4 + $0x8c] sm:$0xf]
    %v188 = vld [vmem:[#allocation4 + $0x90] sm:$0xf]
    %v189 = vld [vmem:[#allocation4 + $0x94] sm:$0xf]
    %v190 = vld [vmem:[#allocation4 + $0x98] sm:$0xf]
    %v191 = vld [vmem:[#allocation4 + $0x9c] sm:$0xf]
    %v192 = vld [vmem:[#allocation4 + $0xa0] sm:$0xf]
    %v193 = vld [vmem:[#allocation4 + $0xa4] sm:$0xf]
    %v194 = vld [vmem:[#allocation4 + $0xa8] sm:$0xf]
    %v195 = vld [vmem:[#allocation4 + $0xac] sm:$0xf]
    %v196 = vld [vmem:[#allocation4 + $0xb0] sm:$0xf]
    %v197 = vld [vmem:[#allocation4 + $0xb4] sm:$0xf]
    %v198 = vld [vmem:[#allocation4 + $0xb8] sm:$0xf]
    %v199 = vld [vmem:[#allocation4 + $0xbc] sm:$0xf]
    %v200 = vld [vmem:[#allocation4 + $0xc0] sm:$0xf]
    %v201 = vld [vmem:[#allocation4 + $0xc4] sm:$0xf]
    %v202 = vld [vmem:[#allocation4 + $0xc8] sm:$0xf]
    %v203 = vld [vmem:[#allocation4 + $0xcc] sm:$0xf]
    %v204 = vld [vmem:[#allocation4 + $0xd0] sm:$0xf]
    %v205 = vld [vmem:[#allocation4 + $0xd4] sm:$0xf]
    %v206 = vld [vmem:[#allocation4 + $0xd8] sm:$0xf]
    %v207 = vld [vmem:[#allocation4 + $0xdc] sm:$0xf]
    %v208 = vld [vmem:[#allocation4 + $0xe0] sm:$0xf]
    %v209 = vld [vmem:[#allocation4 + $0xe4] sm:$0xf]
    %v210 = vld [vmem:[#allocation4 + $0xe8] sm:$0xf]
    %v211 = vld [vmem:[#allocation4 + $0xec] sm:$0xf]
    %v212 = vld [vmem:[#allocation4 + $0xf0] sm:$0xf]
    %v213 = vld [vmem:[#allocation4 + $0xf4] sm:$0xf]
    %v214 = vld [vmem:[#allocation4 + $0xf8] sm:$0xf]
    %v215 = vld [vmem:[#allocation4 + $0xfc] sm:$0xf]
    %v216 = vld [vmem:[%s5] sm:$0xf]
    %v217 = vld [vmem:[%s6] sm:$0xff]
    %v218 = vld [vmem:[%s6 + $0x8] sm:$0x1]
    %v219 = vpack.c.bf16 %v71, %v70
    %v252 = vunpack.c.l.b16 %v72
    %v253 = vunpack.c.h.b16 %v72
    %v254 = vunpack.c.l.b16 %v73
    %v255 = vunpack.c.l.b16 %v74
    %v256 = vunpack.c.h.b16 %v74
    %v257 = vunpack.c.l.b16 %v75
    %v258 = vunpack.c.l.b16 %v76
    %v259 = vunpack.c.h.b16 %v76
    %v260 = vunpack.c.l.b16 %v77
    %v261 = vunpack.c.l.b16 %v78
    %v262 = vunpack.c.h.b16 %v78
    %v263 = vunpack.c.l.b16 %v79
    %v264 = vunpack.c.l.b16 %v80
    %v265 = vunpack.c.h.b16 %v80
    %v266 = vunpack.c.l.b16 %v81
    %v267 = vunpack.c.l.b16 %v82
    %v268 = vunpack.c.h.b16 %v82
    %v269 = vunpack.c.l.b16 %v83
    %v270 = vunpack.c.l.b16 %v84
    %v271 = vunpack.c.h.b16 %v84
    %v272 = vunpack.c.l.b16 %v85
    %v273 = vunpack.c.l.b16 %v86
    %v274 = vunpack.c.h.b16 %v86
    %v275 = vunpack.c.l.b16 %v87
    %v276 = vunpack.c.l.b16 %v88
    %v277 = vunpack.c.h.b16 %v88
    %v278 = vunpack.c.l.b16 %v89
    %v279 = vunpack.c.l.b16 %v90
    %v280 = vunpack.c.h.b16 %v90
    %v281 = vunpack.c.l.b16 %v91
    %v282 = vunpack.c.l.b16 %v92
    %v283 = vunpack.c.h.b16 %v92
    %v284 = vunpack.c.l.b16 %v93
    %v285 = vunpack.c.l.b16 %v94
    %v286 = vunpack.c.h.b16 %v94
    %v287 = vunpack.c.l.b16 %v95
    %v288 = vunpack.c.l.b16 %v96
    %v289 = vunpack.c.h.b16 %v96
    %v290 = vunpack.c.l.b16 %v97
    %v291 = vunpack.c.l.b16 %v98
    %v292 = vunpack.c.h.b16 %v98
    %v293 = vunpack.c.l.b16 %v99
    %v294 = vunpack.c.l.b16 %v100
    %v295 = vunpack.c.h.b16 %v100
    %v296 = vunpack.c.l.b16 %v101
    %v297 = vunpack.c.l.b16 %v102
    %v298 = vunpack.c.h.b16 %v102
    %v299 = vunpack.c.l.b16 %v103
    %v300 = vpack.c.b16 %v255, %v252
    %v301 = vpack.c.b16 %v256, %v253
    %v302 = vpack.c.b16 %v257, %v254
    %v303 = vpack.c.b16 %v261, %v258
    %v304 = vpack.c.b16 %v262, %v259
    %v305 = vpack.c.b16 %v263, %v260
    %v306 = vpack.c.b16 %v267, %v264
    %v307 = vpack.c.b16 %v268, %v265
    %v308 = vpack.c.b16 %v269, %v266
    %v309 = vpack.c.b16 %v273, %v270
    %v310 = vpack.c.b16 %v274, %v271
    %v311 = vpack.c.b16 %v275, %v272
    %v312 = vpack.c.b16 %v279, %v276
    %v313 = vpack.c.b16 %v280, %v277
    %v314 = vpack.c.b16 %v281, %v278
    %v315 = vpack.c.b16 %v285, %v282
    %v316 = vpack.c.b16 %v286, %v283
    %v317 = vpack.c.b16 %v287, %v284
    %v318 = vpack.c.b16 %v291, %v288
    %v319 = vpack.c.b16 %v292, %v289
    %v320 = vpack.c.b16 %v293, %v290
    %v321 = vpack.c.b16 %v297, %v294
    %v322 = vpack.c.b16 %v298, %v295
    %v323 = vpack.c.b16 %v299, %v296
    %348 = vmatprep.subr.bf16.mxu0 %v301
    %349 = vmatpush1.bf16.msra.mxu0 %v300
    %350 = vmatprep.subr.bf16.mxu0 %v304
    %351 = vmatpush1.bf16.msra.mxu0 %v303
    %352 = vmatprep.subr.bf16.mxu0 %v307
    %353 = vmatpush1.bf16.msra.mxu0 %v306
    %354 = vmatprep.subr.bf16.mxu0 %v310
    %355 = vmatpush1.bf16.msra.mxu0 %v309
    %356 = vmatprep.subr.bf16.mxu0 %v313
    %357 = vmatpush1.bf16.msra.mxu0 %v312
    %358 = vmatprep.subr.bf16.mxu0 %v316
    %359 = vmatpush1.bf16.msra.mxu0 %v315
    %360 = vmatprep.subr.bf16.mxu0 %v319
    %361 = vmatpush1.bf16.msra.mxu0 %v318
    %362 = vmatprep.subr.bf16.mxu0 %v322
    %363 = vmatpush1.bf16.msra.mxu0 %v321
    %364 = vmatprep.subr.bf16.mxu0 0
    %365 = vmatpush1.bf16.msra.mxu0 0
    %366 = vmatprep.subr.bf16.mxu0 0
    %367 = vmatpush1.bf16.msra.mxu0 0
    %368 = vmatprep.subr.bf16.mxu0 0
    %369 = vmatpush1.bf16.msra.mxu0 0
    %370 = vmatprep.subr.bf16.mxu0 0
    %371 = vmatpush1.bf16.msra.mxu0 0
    %372 = vmatprep.subr.bf16.mxu0 0
    %373 = vmatpush1.bf16.msra.mxu0 0
    %374 = vmatprep.subr.bf16.mxu0 0
    %375 = vmatpush1.bf16.msra.mxu0 0
    %376 = vmatprep.subr.bf16.mxu0 0
    %377 = vmatpush1.bf16.msra.mxu0 0
    %378 = vmatprep.subr.bf16.mxu0 0
    %379 = vmatpush1.bf16.msra.mxu0 0
    %380 = vmatprep.mubr.bf16.mxu0 0
    %381 = vmatmul.mubr.bf16.gmra.mrb[0].mxu0 %v219
    %v382 = vpop.f32.mrb[0].mxu0
    %v383 = vadd.f32 0.0, %v382
    %v384 = vpop.f32.mrb[0].mxu0
    %v385 = vadd.f32 0.0, %v384
    %v386 = vpop.f32.mrb[0].mxu0
    %v387 = vadd.f32 0.0, %v386
    %v388 = vpop.f32.mrb[0].mxu0
    %v389 = vadd.f32 0.0, %v388
    %390 = vdwg.mxu0
    %391 = vmatprep.subr.bf16.mxu0 0
    %392 = vmatpush1.bf16.msra.mxu0 %v302
    %393 = vmatprep.subr.bf16.mxu0 0
    %394 = vmatpush1.bf16.msra.mxu0 %v305
    %395 = vmatprep.subr.bf16.mxu0 0
    %396 = vmatpush1.bf16.msra.mxu0 %v308
    %397 = vmatprep.subr.bf16.mxu0 0
    %398 = vmatpush1.bf16.msra.mxu0 %v311
    %399 = vmatprep.subr.bf16.mxu0 0
    %400 = vmatpush1.bf16.msra.mxu0 %v314
    %401 = vmatprep.subr.bf16.mxu0 0
    %402 = vmatpush1.bf16.msra.mxu0 %v317
    %403 = vmatprep.subr.bf16.mxu0 0
    %404 = vmatpush1.bf16.msra.mxu0 %v320
    %405 = vmatprep.subr.bf16.mxu0 0
    %406 = vmatpush1.bf16.msra.mxu0 %v323
    %407 = vmatprep.subr.bf16.mxu0 0
    %408 = vmatpush1.bf16.msra.mxu0 0
    %409 = vmatprep.subr.bf16.mxu0 0
    %410 = vmatpush1.bf16.msra.mxu0 0
    %411 = vmatprep.subr.bf16.mxu0 0
    %412 = vmatpush1.bf16.msra.mxu0 0
    %413 = vmatprep.subr.bf16.mxu0 0
    %414 = vmatpush1.bf16.msra.mxu0 0
    %415 = vmatprep.subr.bf16.mxu0 0
    %416 = vmatpush1.bf16.msra.mxu0 0
    %417 = vmatprep.subr.bf16.mxu0 0
    %418 = vmatpush1.bf16.msra.mxu0 0
    %419 = vmatprep.subr.bf16.mxu0 0
    %420 = vmatpush1.bf16.msra.mxu0 0
    %421 = vmatprep.subr.bf16.mxu0 0
    %422 = vmatpush1.bf16.msra.mxu0 0
    %423 = vmatprep.mubr.bf16.mxu0 0
    %424 = vmatmul.mubr.bf16.gmra.mrb[0].mxu0 %v219
    %v425 = vpop.f32.mrb[0].mxu0
    %v426 = vadd.f32 0.0, %v425
    %v427 = vpop.f32.mrb[0].mxu0
    %v428 = vpop.f32.mrb[0].mxu0
    %v429 = vadd.f32 0.0, %v428
    %v430 = vpop.f32.mrb[0].mxu0
    %431 = vdwg.mxu0
    %v432 = vlaneseq
    %v433 = vshrl.u32 %v432, 7
    %v434 = vsub.s32 0, %v433
    %v435 = vrot.slane %v217, %v434
    %v436 = vadd.f32 %v383, %v435
    %v437 = vadd.f32 %v387, %v435
    %v438 = vpack.c.bf16 %v436, %v436
    %v439 = vpack.c.bf16 %v437, %v437
    %v440 = vlaneseq
    %v441 = vshrl.u32 %v440, 7
    %v442 = vsub.s32 1, %v441
    %v443 = vrot.slane %v217, %v442
    %v444 = vadd.f32 %v385, %v443
    %v445 = vadd.f32 %v389, %v443
    %v446 = vpack.c.bf16 %v444, %v444
    %v447 = vpack.c.bf16 %v445, %v445
    %v448 = vlaneseq
    %v449 = vshrl.u32 %v448, 7
    %v450 = vsub.s32 2, %v449
    %v451 = vrot.slane %v217, %v450
    %v452 = vadd.f32 %v426, %v451
    %v453 = vadd.f32 %v429, %v451
    %v454 = vpack.c.bf16 %v452, %v452
    %v455 = vpack.c.bf16 %v453, %v453
    %vm456 = vcmask 261120
    %v458 = vsel %vm456, %v438, 0
    %v461 = vsel %vm456, %v446, 0
    %463 = vmatprep.subr.bf16.mxu0 0
    %464 = vmatpush1.bf16.xpose.msra.mxu0 %v461
    %465 = vmatprep.subr.bf16.mxu0 0
    %466 = vmatpush1.bf16.xpose.msra.mxu0 0
    %467 = vmatprep.subr.bf16.mxu0 0
    %468 = vmatpush1.bf16.xpose.msra.mxu0 0
    %469 = vmatprep.subr.bf16.mxu0 0
    %470 = vmatpush1.bf16.xpose.msra.mxu0 0
    %471 = vmatprep.subr.bf16.mxu0 0
    %472 = vmatpush1.bf16.xpose.msra.mxu0 0
    %473 = vmatprep.subr.bf16.mxu0 0
    %474 = vmatpush1.bf16.xpose.msra.mxu0 0
    %475 = vmatprep.subr.bf16.mxu0 0
    %476 = vmatpush1.bf16.xpose.msra.mxu0 0
    %477 = vmatprep.subr.bf16.mxu0 0
    %478 = vmatpush1.bf16.xpose.msra.mxu0 0
    %479 = vmatprep.subr.bf16.mxu0 0
    %480 = vmatpush1.bf16.xpose.msra.mxu0 0
    %481 = vmatprep.subr.bf16.mxu0 0
    %482 = vmatpush1.bf16.xpose.msra.mxu0 0
    %483 = vmatprep.subr.bf16.mxu0 0
    %484 = vmatpush1.bf16.xpose.msra.mxu0 0
    %485 = vmatprep.subr.bf16.mxu0 0
    %486 = vmatpush1.bf16.xpose.msra.mxu0 0
    %487 = vmatprep.subr.bf16.mxu0 0
    %488 = vmatpush1.bf16.xpose.msra.mxu0 0
    %489 = vmatprep.subr.bf16.mxu0 0
    %490 = vmatpush1.bf16.xpose.msra.mxu0 0
    %491 = vmatprep.subr.bf16.mxu0 0
    %492 = vmatpush1.bf16.xpose.msra.mxu0 0
    %493 = vmatprep.subr.bf16.mxu0 0
    %494 = vmatpush1.bf16.xpose.msra.mxu0 0
    %495 = vmatprep.mubr.bf16.mxu0 0
    %496 = vmatmul.mubr.bf16.gmra.mrb[0].mxu0 %v458
    %v497 = vpop.f32.mrb[0].mxu0
    %v498 = vadd.f32 0.0, %v497
    %v499 = vpop.f32.mrb[0].mxu0
    %v500 = vpop.f32.mrb[0].mxu0
    %v501 = vpop.f32.mrb[0].mxu0
    %502 = vdwg.mxu0
    %v504 = vsel %vm456, %v439, 0
    %v507 = vsel %vm456, %v447, 0
    %509 = vmatprep.subr.bf16.mxu0 0
    %510 = vmatpush1.bf16.xpose.msra.mxu0 %v507
    %511 = vmatprep.subr.bf16.mxu0 0
    %512 = vmatpush1.bf16.xpose.msra.mxu0 0
    %513 = vmatprep.subr.bf16.mxu0 0
    %514 = vmatpush1.bf16.xpose.msra.mxu0 0
    %515 = vmatprep.subr.bf16.mxu0 0
    %516 = vmatpush1.bf16.xpose.msra.mxu0 0
    %517 = vmatprep.subr.bf16.mxu0 0
    %518 = vmatpush1.bf16.xpose.msra.mxu0 0
    %519 = vmatprep.subr.bf16.mxu0 0
    %520 = vmatpush1.bf16.xpose.msra.mxu0 0
    %521 = vmatprep.subr.bf16.mxu0 0
    %522 = vmatpush1.bf16.xpose.msra.mxu0 0
    %523 = vmatprep.subr.bf16.mxu0 0
    %524 = vmatpush1.bf16.xpose.msra.mxu0 0
    %525 = vmatprep.subr.bf16.mxu0 0
    %526 = vmatpush1.bf16.xpose.msra.mxu0 0
    %527 = vmatprep.subr.bf16.mxu0 0
    %528 = vmatpush1.bf16.xpose.msra.mxu0 0
    %529 = vmatprep.subr.bf16.mxu0 0
    %530 = vmatpush1.bf16.xpose.msra.mxu0 0
    %531 = vmatprep.subr.bf16.mxu0 0
    %532 = vmatpush1.bf16.xpose.msra.mxu0 0
    %533 = vmatprep.subr.bf16.mxu0 0
    %534 = vmatpush1.bf16.xpose.msra.mxu0 0
    %535 = vmatprep.subr.bf16.mxu0 0
    %536 = vmatpush1.bf16.xpose.msra.mxu0 0
    %537 = vmatprep.subr.bf16.mxu0 0
    %538 = vmatpush1.bf16.xpose.msra.mxu0 0
    %539 = vmatprep.subr.bf16.mxu0 0
    %540 = vmatpush1.bf16.xpose.msra.mxu0 0
    %541 = vmatprep.mubr.bf16.mxu0 0
    %542 = vmatmul.mubr.bf16.gmra.mrb[0].mxu0 %v504
    %v543 = vpop.f32.mrb[0].mxu0
    %v544 = vadd.f32 0.0, %v543
    %v545 = vpop.f32.mrb[0].mxu0
    %v546 = vpop.f32.mrb[0].mxu0
    %v547 = vpop.f32.mrb[0].mxu0
    %548 = vdwg.mxu0
    %vm549 = vcmask 64512
    %v550 = vsel %vm549, %v498, -inf
    %551 = vmax.xlane.f32.xlu0 %v550
    %v552 = vpop.xlane.xlu0 %551
    %v553 = vsel %vm549, %v544, -inf
    %554 = vmax.xlane.f32.xlu0 %v553
    %v555 = vpop.xlane.xlu0 %554
    %v556 = vsub.f32 %v498, %v552
    %v557 = vsub.f32 %v544, %v555
    %v558 = vmul.f32 %v556, 1.442695
    %v559 = vpow.pop %v558
    %v560 = vmul.f32 %v557, 1.442695
    %v561 = vpow.pop %v560
    %v562 = vsel %vm549, %v559, 0.0
    %563 = vadd.xlane.f32.xlu0 %v562
    %v564 = vpop.xlane.xlu0 %563
    %v565 = vsel %vm549, %v561, 0.0
    %566 = vadd.xlane.f32.xlu0 %v565
    %v567 = vpop.xlane.xlu0 %566
    %v568 = vrcp.pop %v564
    %v569 = vrcp.pop %v567
    %v570 = vmul.f32 %v559, %v568
    %v571 = vmul.f32 %v561, %v569
    %v572 = vpack.c.bf16 %v570, %v570
    %v573 = vpack.c.bf16 %v571, %v571
    %v575 = vsel %vm549, %v572, 0
    %vm577 = vcmask 1043456
    %v579 = vsel %vm577, %v454, 0
    %581 = vmatprep.subr.bf16.mxu0 0
    %582 = vmatpush1.bf16.msra.mxu0 %v579
    %583 = vmatprep.subr.bf16.mxu0 0
    %584 = vmatpush1.bf16.msra.mxu0 0
    %585 = vmatprep.subr.bf16.mxu0 0
    %586 = vmatpush1.bf16.msra.mxu0 0
    %587 = vmatprep.subr.bf16.mxu0 0
    %588 = vmatpush1.bf16.msra.mxu0 0
    %589 = vmatprep.subr.bf16.mxu0 0
    %590 = vmatpush1.bf16.msra.mxu0 0
    %591 = vmatprep.subr.bf16.mxu0 0
    %592 = vmatpush1.bf16.msra.mxu0 0
    %593 = vmatprep.subr.bf16.mxu0 0
    %594 = vmatpush1.bf16.msra.mxu0 0
    %595 = vmatprep.subr.bf16.mxu0 0
    %596 = vmatpush1.bf16.msra.mxu0 0
    %597 = vmatprep.subr.bf16.mxu0 0
    %598 = vmatpush1.bf16.msra.mxu0 0
    %599 = vmatprep.subr.bf16.mxu0 0
    %600 = vmatpush1.bf16.msra.mxu0 0
    %601 = vmatprep.subr.bf16.mxu0 0
    %602 = vmatpush1.bf16.msra.mxu0 0
    %603 = vmatprep.subr.bf16.mxu0 0
    %604 = vmatpush1.bf16.msra.mxu0 0
    %605 = vmatprep.subr.bf16.mxu0 0
    %606 = vmatpush1.bf16.msra.mxu0 0
    %607 = vmatprep.subr.bf16.mxu0 0
    %608 = vmatpush1.bf16.msra.mxu0 0
    %609 = vmatprep.subr.bf16.mxu0 0
    %610 = vmatpush1.bf16.msra.mxu0 0
    %611 = vmatprep.subr.bf16.mxu0 0
    %612 = vmatpush1.bf16.msra.mxu0 0
    %613 = vmatprep.mubr.bf16.mxu0 0
    %614 = vmatmul.mubr.bf16.gmra.mrb[0].mxu0 %v575
    %v615 = vpop.f32.mrb[0].mxu0
    %v616 = vadd.f32 0.0, %v615
    %v617 = vpop.f32.mrb[0].mxu0
    %v618 = vpop.f32.mrb[0].mxu0
    %v619 = vpop.f32.mrb[0].mxu0
    %620 = vdwg.mxu0
    %v622 = vsel %vm549, %v573, 0
    %v625 = vsel %vm577, %v455, 0
    %627 = vmatprep.subr.bf16.mxu0 0
    %628 = vmatpush1.bf16.msra.mxu0 %v625
    %629 = vmatprep.subr.bf16.mxu0 0
    %630 = vmatpush1.bf16.msra.mxu0 0
    %631 = vmatprep.subr.bf16.mxu0 0
    %632 = vmatpush1.bf16.msra.mxu0 0
    %633 = vmatprep.subr.bf16.mxu0 0
    %634 = vmatpush1.bf16.msra.mxu0 0
    %635 = vmatprep.subr.bf16.mxu0 0
    %636 = vmatpush1.bf16.msra.mxu0 0
    %637 = vmatprep.subr.bf16.mxu0 0
    %638 = vmatpush1.bf16.msra.mxu0 0
    %639 = vmatprep.subr.bf16.mxu0 0
    %640 = vmatpush1.bf16.msra.mxu0 0
    %641 = vmatprep.subr.bf16.mxu0 0
    %642 = vmatpush1.bf16.msra.mxu0 0
    %643 = vmatprep.subr.bf16.mxu0 0
    %644 = vmatpush1.bf16.msra.mxu0 0
    %645 = vmatprep.subr.bf16.mxu0 0
    %646 = vmatpush1.bf16.msra.mxu0 0
    %647 = vmatprep.subr.bf16.mxu0 0
    %648 = vmatpush1.bf16.msra.mxu0 0
    %649 = vmatprep.subr.bf16.mxu0 0
    %650 = vmatpush1.bf16.msra.mxu0 0
    %651 = vmatprep.subr.bf16.mxu0 0
    %652 = vmatpush1.bf16.msra.mxu0 0
    %653 = vmatprep.subr.bf16.mxu0 0
    %654 = vmatpush1.bf16.msra.mxu0 0
    %655 = vmatprep.subr.bf16.mxu0 0
    %656 = vmatpush1.bf16.msra.mxu0 0
    %657 = vmatprep.subr.bf16.mxu0 0
    %658 = vmatpush1.bf16.msra.mxu0 0
    %659 = vmatprep.mubr.bf16.mxu0 0
    %660 = vmatmul.mubr.bf16.gmra.mrb[0].mxu0 %v622
    %v661 = vpop.f32.mrb[0].mxu0
    %v662 = vadd.f32 0.0, %v661
    %v663 = vpop.f32.mrb[0].mxu0
    %v664 = vpop.f32.mrb[0].mxu0
    %v665 = vpop.f32.mrb[0].mxu0
    %666 = vdwg.mxu0
    %668 = vrot.lane.b32.xlu0 %v438, 96
    %v669 = vpop.permute.xlu0 %668
    %671 = vrot.lane.b32.xlu0 %v446, 96
    %v672 = vpop.permute.xlu0 %671
    %v674 = vsel %vm456, %v669, 0
    %v677 = vsel %vm456, %v672, 0
    %679 = vmatprep.subr.bf16.mxu0 0
    %680 = vmatpush1.bf16.xpose.msra.mxu0 %v677
    %681 = vmatprep.subr.bf16.mxu0 0
    %682 = vmatpush1.bf16.xpose.msra.mxu0 0
    %683 = vmatprep.subr.bf16.mxu0 0
    %684 = vmatpush1.bf16.xpose.msra.mxu0 0
    %685 = vmatprep.subr.bf16.mxu0 0
    %686 = vmatpush1.bf16.xpose.msra.mxu0 0
    %687 = vmatprep.subr.bf16.mxu0 0
    %688 = vmatpush1.bf16.xpose.msra.mxu0 0
    %689 = vmatprep.subr.bf16.mxu0 0
    %690 = vmatpush1.bf16.xpose.msra.mxu0 0
    %691 = vmatprep.subr.bf16.mxu0 0
    %692 = vmatpush1.bf16.xpose.msra.mxu0 0
    %693 = vmatprep.subr.bf16.mxu0 0
    %694 = vmatpush1.bf16.xpose.msra.mxu0 0
    %695 = vmatprep.subr.bf16.mxu0 0
    %696 = vmatpush1.bf16.xpose.msra.mxu0 0
    %697 = vmatprep.subr.bf16.mxu0 0
    %698 = vmatpush1.bf16.xpose.msra.mxu0 0
    %699 = vmatprep.subr.bf16.mxu0 0
    %700 = vmatpush1.bf16.xpose.msra.mxu0 0
    %701 = vmatprep.subr.bf16.mxu0 0
    %702 = vmatpush1.bf16.xpose.msra.mxu0 0
    %703 = vmatprep.subr.bf16.mxu0 0
    %704 = vmatpush1.bf16.xpose.msra.mxu0 0
    %705 = vmatprep.subr.bf16.mxu0 0
    %706 = vmatpush1.bf16.xpose.msra.mxu0 0
    %707 = vmatprep.subr.bf16.mxu0 0
    %708 = vmatpush1.bf16.xpose.msra.mxu0 0
    %709 = vmatprep.subr.bf16.mxu0 0
    %710 = vmatpush1.bf16.xpose.msra.mxu0 0
    %711 = vmatprep.mubr.bf16.mxu0 0
    %712 = vmatmul.mubr.bf16.gmra.mrb[0].mxu0 %v674
    %v713 = vpop.f32.mrb[0].mxu0
    %v714 = vadd.f32 0.0, %v713
    %v715 = vpop.f32.mrb[0].mxu0
    %v716 = vpop.f32.mrb[0].mxu0
    %v717 = vpop.f32.mrb[0].mxu0
    %718 = vdwg.mxu0
    %720 = vrot.lane.b32.xlu0 %v439, 96
    %v721 = vpop.permute.xlu0 %720
    %723 = vrot.lane.b32.xlu0 %v447, 96
    %v724 = vpop.permute.xlu0 %723
    %v726 = vsel %vm456, %v721, 0
    %v729 = vsel %vm456, %v724, 0
    %731 = vmatprep.subr.bf16.mxu0 0
    %732 = vmatpush1.bf16.xpose.msra.mxu0 %v729
    %733 = vmatprep.subr.bf16.mxu0 0
    %734 = vmatpush1.bf16.xpose.msra.mxu0 0
    %735 = vmatprep.subr.bf16.mxu0 0
    %736 = vmatpush1.bf16.xpose.msra.mxu0 0
    %737 = vmatprep.subr.bf16.mxu0 0
    %738 = vmatpush1.bf16.xpose.msra.mxu0 0
    %739 = vmatprep.subr.bf16.mxu0 0
    %740 = vmatpush1.bf16.xpose.msra.mxu0 0
    %741 = vmatprep.subr.bf16.mxu0 0
    %742 = vmatpush1.bf16.xpose.msra.mxu0 0
    %743 = vmatprep.subr.bf16.mxu0 0
    %744 = vmatpush1.bf16.xpose.msra.mxu0 0
    %745 = vmatprep.subr.bf16.mxu0 0
    %746 = vmatpush1.bf16.xpose.msra.mxu0 0
    %747 = vmatprep.subr.bf16.mxu0 0
    %748 = vmatpush1.bf16.xpose.msra.mxu0 0
    %749 = vmatprep.subr.bf16.mxu0 0
    %750 = vmatpush1.bf16.xpose.msra.mxu0 0
    %751 = vmatprep.subr.bf16.mxu0 0
    %752 = vmatpush1.bf16.xpose.msra.mxu0 0
    %753 = vmatprep.subr.bf16.mxu0 0
    %754 = vmatpush1.bf16.xpose.msra.mxu0 0
    %755 = vmatprep.subr.bf16.mxu0 0
    %756 = vmatpush1.bf16.xpose.msra.mxu0 0
    %757 = vmatprep.subr.bf16.mxu0 0
    %758 = vmatpush1.bf16.xpose.msra.mxu0 0
    %759 = vmatprep.subr.bf16.mxu0 0
    %760 = vmatpush1.bf16.xpose.msra.mxu0 0
    %761 = vmatprep.subr.bf16.mxu0 0
    %762 = vmatpush1.bf16.xpose.msra.mxu0 0
    %763 = vmatprep.mubr.bf16.mxu0 0
    %764 = vmatmul.mubr.bf16.gmra.mrb[0].mxu0 %v726
    %v765 = vpop.f32.mrb[0].mxu0
    %v766 = vadd.f32 0.0, %v765
    %v767 = vpop.f32.mrb[0].mxu0
    %v768 = vpop.f32.mrb[0].mxu0
    %v769 = vpop.f32.mrb[0].mxu0
    %770 = vdwg.mxu0
    %v771 = vsel %vm549, %v714, -inf
    %772 = vmax.xlane.f32.xlu0 %v771
    %v773 = vpop.xlane.xlu0 %772
    %v774 = vsel %vm549, %v766, -inf
    %775 = vmax.xlane.f32.xlu0 %v774
    %v776 = vpop.xlane.xlu0 %775
    %v777 = vsub.f32 %v714, %v773
    %v778 = vsub.f32 %v766, %v776
    %v779 = vmul.f32 %v777, 1.442695
    %v780 = vpow.pop %v779
    %v781 = vmul.f32 %v778, 1.442695
    %v782 = vpow.pop %v781
    %v783 = vsel %vm549, %v780, 0.0
    %784 = vadd.xlane.f32.xlu0 %v783
    %v785 = vpop.xlane.xlu0 %784
    %v786 = vsel %vm549, %v782, 0.0
    %787 = vadd.xlane.f32.xlu0 %v786
    %v788 = vpop.xlane.xlu0 %787
    %v789 = vrcp.pop %v785
    %v790 = vrcp.pop %v788
    %v791 = vmul.f32 %v780, %v789
    %v792 = vmul.f32 %v782, %v790
    %v793 = vpack.c.bf16 %v791, %v791
    %v794 = vpack.c.bf16 %v792, %v792
    %796 = vrot.lane.b32.xlu0 %v454, 96
    %v797 = vpop.permute.xlu0 %796
    %v799 = vsel %vm549, %v793, 0
    %v802 = vsel %vm577, %v797, 0
    %804 = vmatprep.subr.bf16.mxu0 0
    %805 = vmatpush1.bf16.msra.mxu0 %v802
    %806 = vmatprep.subr.bf16.mxu0 0
    %807 = vmatpush1.bf16.msra.mxu0 0
    %808 = vmatprep.subr.bf16.mxu0 0
    %809 = vmatpush1.bf16.msra.mxu0 0
    %810 = vmatprep.subr.bf16.mxu0 0
    %811 = vmatpush1.bf16.msra.mxu0 0
    %812 = vmatprep.subr.bf16.mxu0 0
    %813 = vmatpush1.bf16.msra.mxu0 0
    %814 = vmatprep.subr.bf16.mxu0 0
    %815 = vmatpush1.bf16.msra.mxu0 0
    %816 = vmatprep.subr.bf16.mxu0 0
    %817 = vmatpush1.bf16.msra.mxu0 0
    %818 = vmatprep.subr.bf16.mxu0 0
    %819 = vmatpush1.bf16.msra.mxu0 0
    %820 = vmatprep.subr.bf16.mxu0 0
    %821 = vmatpush1.bf16.msra.mxu0 0
    %822 = vmatprep.subr.bf16.mxu0 0
    %823 = vmatpush1.bf16.msra.mxu0 0
    %824 = vmatprep.subr.bf16.mxu0 0
    %825 = vmatpush1.bf16.msra.mxu0 0
    %826 = vmatprep.subr.bf16.mxu0 0
    %827 = vmatpush1.bf16.msra.mxu0 0
    %828 = vmatprep.subr.bf16.mxu0 0
    %829 = vmatpush1.bf16.msra.mxu0 0
    %830 = vmatprep.subr.bf16.mxu0 0
    %831 = vmatpush1.bf16.msra.mxu0 0
    %832 = vmatprep.subr.bf16.mxu0 0
    %833 = vmatpush1.bf16.msra.mxu0 0
    %834 = vmatprep.subr.bf16.mxu0 0
    %835 = vmatpush1.bf16.msra.mxu0 0
    %836 = vmatprep.mubr.bf16.mxu0 0
    %837 = vmatmul.mubr.bf16.gmra.mrb[0].mxu0 %v799
    %v838 = vpop.f32.mrb[0].mxu0
    %v839 = vadd.f32 0.0, %v838
    %v840 = vpop.f32.mrb[0].mxu0
    %v841 = vpop.f32.mrb[0].mxu0
    %v842 = vpop.f32.mrb[0].mxu0
    %843 = vdwg.mxu0
    %845 = vrot.lane.b32.xlu0 %v455, 96
    %v846 = vpop.permute.xlu0 %845
    %v848 = vsel %vm549, %v794, 0
    %v851 = vsel %vm577, %v846, 0
    %853 = vmatprep.subr.bf16.mxu0 0
    %854 = vmatpush1.bf16.msra.mxu0 %v851
    %855 = vmatprep.subr.bf16.mxu0 0
    %856 = vmatpush1.bf16.msra.mxu0 0
    %857 = vmatprep.subr.bf16.mxu0 0
    %858 = vmatpush1.bf16.msra.mxu0 0
    %859 = vmatprep.subr.bf16.mxu0 0
    %860 = vmatpush1.bf16.msra.mxu0 0
    %861 = vmatprep.subr.bf16.mxu0 0
    %862 = vmatpush1.bf16.msra.mxu0 0
    %863 = vmatprep.subr.bf16.mxu0 0
    %864 = vmatpush1.bf16.msra.mxu0 0
    %865 = vmatprep.subr.bf16.mxu0 0
    %866 = vmatpush1.bf16.msra.mxu0 0
    %867 = vmatprep.subr.bf16.mxu0 0
    %868 = vmatpush1.bf16.msra.mxu0 0
    %869 = vmatprep.subr.bf16.mxu0 0
    %870 = vmatpush1.bf16.msra.mxu0 0
    %871 = vmatprep.subr.bf16.mxu0 0
    %872 = vmatpush1.bf16.msra.mxu0 0
    %873 = vmatprep.subr.bf16.mxu0 0
    %874 = vmatpush1.bf16.msra.mxu0 0
    %875 = vmatprep.subr.bf16.mxu0 0
    %876 = vmatpush1.bf16.msra.mxu0 0
    %877 = vmatprep.subr.bf16.mxu0 0
    %878 = vmatpush1.bf16.msra.mxu0 0
    %879 = vmatprep.subr.bf16.mxu0 0
    %880 = vmatpush1.bf16.msra.mxu0 0
    %881 = vmatprep.subr.bf16.mxu0 0
    %882 = vmatpush1.bf16.msra.mxu0 0
    %883 = vmatprep.subr.bf16.mxu0 0
    %884 = vmatpush1.bf16.msra.mxu0 0
    %885 = vmatprep.mubr.bf16.mxu0 0
    %886 = vmatmul.mubr.bf16.gmra.mrb[0].mxu0 %v848
    %v887 = vpop.f32.mrb[0].mxu0
    %v888 = vadd.f32 0.0, %v887
    %v889 = vpop.f32.mrb[0].mxu0
    %v890 = vpop.f32.mrb[0].mxu0
    %v891 = vpop.f32.mrb[0].mxu0
    %892 = vdwg.mxu0
    %893 = vrot.lane.b32.xlu0 %v438, 64
    %v894 = vpop.permute.xlu0 %893
    %895 = vrot.lane.b32.xlu0 %v446, 64
    %v896 = vpop.permute.xlu0 %895
    %v898 = vsel %vm456, %v894, 0
    %v901 = vsel %vm456, %v896, 0
    %903 = vmatprep.subr.bf16.mxu0 0
    %904 = vmatpush1.bf16.xpose.msra.mxu0 %v901
    %905 = vmatprep.subr.bf16.mxu0 0
    %906 = vmatpush1.bf16.xpose.msra.mxu0 0
    %907 = vmatprep.subr.bf16.mxu0 0
    %908 = vmatpush1.bf16.xpose.msra.mxu0 0
    %909 = vmatprep.subr.bf16.mxu0 0
    %910 = vmatpush1.bf16.xpose.msra.mxu0 0
    %911 = vmatprep.subr.bf16.mxu0 0
    %912 = vmatpush1.bf16.xpose.msra.mxu0 0
    %913 = vmatprep.subr.bf16.mxu0 0
    %914 = vmatpush1.bf16.xpose.msra.mxu0 0
    %915 = vmatprep.subr.bf16.mxu0 0
    %916 = vmatpush1.bf16.xpose.msra.mxu0 0
    %917 = vmatprep.subr.bf16.mxu0 0
    %918 = vmatpush1.bf16.xpose.msra.mxu0 0
    %919 = vmatprep.subr.bf16.mxu0 0
    %920 = vmatpush1.bf16.xpose.msra.mxu0 0
    %921 = vmatprep.subr.bf16.mxu0 0
    %922 = vmatpush1.bf16.xpose.msra.mxu0 0
    %923 = vmatprep.subr.bf16.mxu0 0
    %924 = vmatpush1.bf16.xpose.msra.mxu0 0
    %925 = vmatprep.subr.bf16.mxu0 0
    %926 = vmatpush1.bf16.xpose.msra.mxu0 0
    %927 = vmatprep.subr.bf16.mxu0 0
    %928 = vmatpush1.bf16.xpose.msra.mxu0 0
    %929 = vmatprep.subr.bf16.mxu0 0
    %930 = vmatpush1.bf16.xpose.msra.mxu0 0
    %931 = vmatprep.subr.bf16.mxu0 0
    %932 = vmatpush1.bf16.xpose.msra.mxu0 0
    %933 = vmatprep.subr.bf16.mxu0 0
    %934 = vmatpush1.bf16.xpose.msra.mxu0 0
    %935 = vmatprep.mubr.bf16.mxu0 0
    %936 = vmatmul.mubr.bf16.gmra.mrb[0].mxu0 %v898
    %v937 = vpop.f32.mrb[0].mxu0
    %v938 = vadd.f32 0.0, %v937
    %v939 = vpop.f32.mrb[0].mxu0
    %v940 = vpop.f32.mrb[0].mxu0
    %v941 = vpop.f32.mrb[0].mxu0
    %942 = vdwg.mxu0
    %943 = vrot.lane.b32.xlu0 %v439, 64
    %v944 = vpop.permute.xlu0 %943
    %945 = vrot.lane.b32.xlu0 %v447, 64
    %v946 = vpop.permute.xlu0 %945
    %v948 = vsel %vm456, %v944, 0
    %v951 = vsel %vm456, %v946, 0
    %953 = vmatprep.subr.bf16.mxu0 0
    %954 = vmatpush1.bf16.xpose.msra.mxu0 %v951
    %955 = vmatprep.subr.bf16.mxu0 0
    %956 = vmatpush1.bf16.xpose.msra.mxu0 0
    %957 = vmatprep.subr.bf16.mxu0 0
    %958 = vmatpush1.bf16.xpose.msra.mxu0 0
    %959 = vmatprep.subr.bf16.mxu0 0
    %960 = vmatpush1.bf16.xpose.msra.mxu0 0
    %961 = vmatprep.subr.bf16.mxu0 0
    %962 = vmatpush1.bf16.xpose.msra.mxu0 0
    %963 = vmatprep.subr.bf16.mxu0 0
    %964 = vmatpush1.bf16.xpose.msra.mxu0 0
    %965 = vmatprep.subr.bf16.mxu0 0
    %966 = vmatpush1.bf16.xpose.msra.mxu0 0
    %967 = vmatprep.subr.bf16.mxu0 0
    %968 = vmatpush1.bf16.xpose.msra.mxu0 0
    %969 = vmatprep.subr.bf16.mxu0 0
    %970 = vmatpush1.bf16.xpose.msra.mxu0 0
    %971 = vmatprep.subr.bf16.mxu0 0
    %972 = vmatpush1.bf16.xpose.msra.mxu0 0
    %973 = vmatprep.subr.bf16.mxu0 0
    %974 = vmatpush1.bf16.xpose.msra.mxu0 0
    %975 = vmatprep.subr.bf16.mxu0 0
    %976 = vmatpush1.bf16.xpose.msra.mxu0 0
    %977 = vmatprep.subr.bf16.mxu0 0
    %978 = vmatpush1.bf16.xpose.msra.mxu0 0
    %979 = vmatprep.subr.bf16.mxu0 0
    %980 = vmatpush1.bf16.xpose.msra.mxu0 0
    %981 = vmatprep.subr.bf16.mxu0 0
    %982 = vmatpush1.bf16.xpose.msra.mxu0 0
    %983 = vmatprep.subr.bf16.mxu0 0
    %984 = vmatpush1.bf16.xpose.msra.mxu0 0
    %985 = vmatprep.mubr.bf16.mxu0 0
    %986 = vmatmul.mubr.bf16.gmra.mrb[0].mxu0 %v948
    %v987 = vpop.f32.mrb[0].mxu0
    %v988 = vadd.f32 0.0, %v987
    %v989 = vpop.f32.mrb[0].mxu0
    %v990 = vpop.f32.mrb[0].mxu0
    %v991 = vpop.f32.mrb[0].mxu0
    %992 = vdwg.mxu0
    %v993 = vsel %vm549, %v938, -inf
    %994 = vmax.xlane.f32.xlu0 %v993
    %v995 = vpop.xlane.xlu0 %994
    %v996 = vsel %vm549, %v988, -inf
    %997 = vmax.xlane.f32.xlu0 %v996
    %v998 = vpop.xlane.xlu0 %997
    %v999 = vsub.f32 %v938, %v995
    %v1000 = vsub.f32 %v988, %v998
    %v1001 = vmul.f32 %v999, 1.442695
    %v1002 = vpow.pop %v1001
    %v1003 = vmul.f32 %v1000, 1.442695
    %v1004 = vpow.pop %v1003
    %v1005 = vsel %vm549, %v1002, 0.0
    %1006 = vadd.xlane.f32.xlu0 %v1005
    %v1007 = vpop.xlane.xlu0 %1006
    %v1008 = vsel %vm549, %v1004, 0.0
    %1009 = vadd.xlane.f32.xlu0 %v1008
    %v1010 = vpop.xlane.xlu0 %1009
    %v1011 = vrcp.pop %v1007
    %v1012 = vrcp.pop %v1010
    %v1013 = vmul.f32 %v1002, %v1011
    %v1014 = vmul.f32 %v1004, %v1012
    %v1015 = vpack.c.bf16 %v1013, %v1013
    %v1016 = vpack.c.bf16 %v1014, %v1014
    %1017 = vrot.lane.b32.xlu0 %v454, 64
    %v1018 = vpop.permute.xlu0 %1017
    %v1020 = vsel %vm549, %v1015, 0
    %v1023 = vsel %vm577, %v1018, 0
    %1025 = vmatprep.subr.bf16.mxu0 0
    %1026 = vmatpush1.bf16.msra.mxu0 %v1023
    %1027 = vmatprep.subr.bf16.mxu0 0
    %1028 = vmatpush1.bf16.msra.mxu0 0
    %1029 = vmatprep.subr.bf16.mxu0 0
    %1030 = vmatpush1.bf16.msra.mxu0 0
    %1031 = vmatprep.subr.bf16.mxu0 0
    %1032 = vmatpush1.bf16.msra.mxu0 0
    %1033 = vmatprep.subr.bf16.mxu0 0
    %1034 = vmatpush1.bf16.msra.mxu0 0
    %1035 = vmatprep.subr.bf16.mxu0 0
    %1036 = vmatpush1.bf16.msra.mxu0 0
    %1037 = vmatprep.subr.bf16.mxu0 0
    %1038 = vmatpush1.bf16.msra.mxu0 0
    %1039 = vmatprep.subr.bf16.mxu0 0
    %1040 = vmatpush1.bf16.msra.mxu0 0
    %1041 = vmatprep.subr.bf16.mxu0 0
    %1042 = vmatpush1.bf16.msra.mxu0 0
    %1043 = vmatprep.subr.bf16.mxu0 0
    %1044 = vmatpush1.bf16.msra.mxu0 0
    %1045 = vmatprep.subr.bf16.mxu0 0
    %1046 = vmatpush1.bf16.msra.mxu0 0
    %1047 = vmatprep.subr.bf16.mxu0 0
    %1048 = vmatpush1.bf16.msra.mxu0 0
    %1049 = vmatprep.subr.bf16.mxu0 0
    %1050 = vmatpush1.bf16.msra.mxu0 0
    %1051 = vmatprep.subr.bf16.mxu0 0
    %1052 = vmatpush1.bf16.msra.mxu0 0
    %1053 = vmatprep.subr.bf16.mxu0 0
    %1054 = vmatpush1.bf16.msra.mxu0 0
    %1055 = vmatprep.subr.bf16.mxu0 0
    %1056 = vmatpush1.bf16.msra.mxu0 0
    %1057 = vmatprep.mubr.bf16.mxu0 0
    %1058 = vmatmul.mubr.bf16.gmra.mrb[0].mxu0 %v1020
    %v1059 = vpop.f32.mrb[0].mxu0
    %v1060 = vadd.f32 0.0, %v1059
    %v1061 = vpop.f32.mrb[0].mxu0
    %v1062 = vpop.f32.mrb[0].mxu0
    %v1063 = vpop.f32.mrb[0].mxu0
    %1064 = vdwg.mxu0
    %1065 = vrot.lane.b32.xlu0 %v455, 64
    %v1066 = vpop.permute.xlu0 %1065
    %v1068 = vsel %vm549, %v1016, 0
    %v1071 = vsel %vm577, %v1066, 0
    %1073 = vmatprep.subr.bf16.mxu0 0
    %1074 = vmatpush1.bf16.msra.mxu0 %v1071
    %1075 = vmatprep.subr.bf16.mxu0 0
    %1076 = vmatpush1.bf16.msra.mxu0 0
    %1077 = vmatprep.subr.bf16.mxu0 0
    %1078 = vmatpush1.bf16.msra.mxu0 0
    %1079 = vmatprep.subr.bf16.mxu0 0
    %1080 = vmatpush1.bf16.msra.mxu0 0
    %1081 = vmatprep.subr.bf16.mxu0 0
    %1082 = vmatpush1.bf16.msra.mxu0 0
    %1083 = vmatprep.subr.bf16.mxu0 0
    %1084 = vmatpush1.bf16.msra.mxu0 0
    %1085 = vmatprep.subr.bf16.mxu0 0
    %1086 = vmatpush1.bf16.msra.mxu0 0
    %1087 = vmatprep.subr.bf16.mxu0 0
    %1088 = vmatpush1.bf16.msra.mxu0 0
    %1089 = vmatprep.subr.bf16.mxu0 0
    %1090 = vmatpush1.bf16.msra.mxu0 0
    %1091 = vmatprep.subr.bf16.mxu0 0
    %1092 = vmatpush1.bf16.msra.mxu0 0
    %1093 = vmatprep.subr.bf16.mxu0 0
    %1094 = vmatpush1.bf16.msra.mxu0 0
    %1095 = vmatprep.subr.bf16.mxu0 0
    %1096 = vmatpush1.bf16.msra.mxu0 0
    %1097 = vmatprep.subr.bf16.mxu0 0
    %1098 = vmatpush1.bf16.msra.mxu0 0
    %1099 = vmatprep.subr.bf16.mxu0 0
    %1100 = vmatpush1.bf16.msra.mxu0 0
    %1101 = vmatprep.subr.bf16.mxu0 0
    %1102 = vmatpush1.bf16.msra.mxu0 0
    %1103 = vmatprep.subr.bf16.mxu0 0
    %1104 = vmatpush1.bf16.msra.mxu0 0
    %1105 = vmatprep.mubr.bf16.mxu0 0
    %1106 = vmatmul.mubr.bf16.gmra.mrb[0].mxu0 %v1068
    %v1107 = vpop.f32.mrb[0].mxu0
    %v1108 = vadd.f32 0.0, %v1107
    %v1109 = vpop.f32.mrb[0].mxu0
    %v1110 = vpop.f32.mrb[0].mxu0
    %v1111 = vpop.f32.mrb[0].mxu0
    %1112 = vdwg.mxu0
    %1113 = vrot.lane.b32.xlu0 %v438, 32
    %v1114 = vpop.permute.xlu0 %1113
    %1115 = vrot.lane.b32.xlu0 %v446, 32
    %v1116 = vpop.permute.xlu0 %1115
    %v1118 = vsel %vm456, %v1114, 0
    %v1121 = vsel %vm456, %v1116, 0
    %1123 = vmatprep.subr.bf16.mxu0 0
    %1124 = vmatpush1.bf16.xpose.msra.mxu0 %v1121
    %1125 = vmatprep.subr.bf16.mxu0 0
    %1126 = vmatpush1.bf16.xpose.msra.mxu0 0
    %1127 = vmatprep.subr.bf16.mxu0 0
    %1128 = vmatpush1.bf16.xpose.msra.mxu0 0
    %1129 = vmatprep.subr.bf16.mxu0 0
    %1130 = vmatpush1.bf16.xpose.msra.mxu0 0
    %1131 = vmatprep.subr.bf16.mxu0 0
    %1132 = vmatpush1.bf16.xpose.msra.mxu0 0
    %1133 = vmatprep.subr.bf16.mxu0 0
    %1134 = vmatpush1.bf16.xpose.msra.mxu0 0
    %1135 = vmatprep.subr.bf16.mxu0 0
    %1136 = vmatpush1.bf16.xpose.msra.mxu0 0
    %1137 = vmatprep.subr.bf16.mxu0 0
    %1138 = vmatpush1.bf16.xpose.msra.mxu0 0
    %1139 = vmatprep.subr.bf16.mxu0 0
    %1140 = vmatpush1.bf16.xpose.msra.mxu0 0
    %1141 = vmatprep.subr.bf16.mxu0 0
    %1142 = vmatpush1.bf16.xpose.msra.mxu0 0
    %1143 = vmatprep.subr.bf16.mxu0 0
    %1144 = vmatpush1.bf16.xpose.msra.mxu0 0
    %1145 = vmatprep.subr.bf16.mxu0 0
    %1146 = vmatpush1.bf16.xpose.msra.mxu0 0
    %1147 = vmatprep.subr.bf16.mxu0 0
    %1148 = vmatpush1.bf16.xpose.msra.mxu0 0
    %1149 = vmatprep.subr.bf16.mxu0 0
    %1150 = vmatpush1.bf16.xpose.msra.mxu0 0
    %1151 = vmatprep.subr.bf16.mxu0 0
    %1152 = vmatpush1.bf16.xpose.msra.mxu0 0
    %1153 = vmatprep.subr.bf16.mxu0 0
    %1154 = vmatpush1.bf16.xpose.msra.mxu0 0
    %1155 = vmatprep.mubr.bf16.mxu0 0
    %1156 = vmatmul.mubr.bf16.gmra.mrb[0].mxu0 %v1118
    %v1157 = vpop.f32.mrb[0].mxu0
    %v1158 = vadd.f32 0.0, %v1157
    %v1159 = vpop.f32.mrb[0].mxu0
    %v1160 = vpop.f32.mrb[0].mxu0
    %v1161 = vpop.f32.mrb[0].mxu0
    %1162 = vdwg.mxu0
    %1163 = vrot.lane.b32.xlu0 %v439, 32
    %v1164 = vpop.permute.xlu0 %1163
    %1165 = vrot.lane.b32.xlu0 %v447, 32
    %v1166 = vpop.permute.xlu0 %1165
    %v1168 = vsel %vm456, %v1164, 0
    %v1171 = vsel %vm456, %v1166, 0
    %1173 = vmatprep.subr.bf16.mxu0 0
    %1174 = vmatpush1.bf16.xpose.msra.mxu0 %v1171
    %1175 = vmatprep.subr.bf16.mxu0 0
    %1176 = vmatpush1.bf16.xpose.msra.mxu0 0
    %1177 = vmatprep.subr.bf16.mxu0 0
    %1178 = vmatpush1.bf16.xpose.msra.mxu0 0
    %1179 = vmatprep.subr.bf16.mxu0 0
    %1180 = vmatpush1.bf16.xpose.msra.mxu0 0
    %1181 = vmatprep.subr.bf16.mxu0 0
    %1182 = vmatpush1.bf16.xpose.msra.mxu0 0
    %1183 = vmatprep.subr.bf16.mxu0 0
    %1184 = vmatpush1.bf16.xpose.msra.mxu0 0
    %1185 = vmatprep.subr.bf16.mxu0 0
    %1186 = vmatpush1.bf16.xpose.msra.mxu0 0
    %1187 = vmatprep.subr.bf16.mxu0 0
    %1188 = vmatpush1.bf16.xpose.msra.mxu0 0
    %1189 = vmatprep.subr.bf16.mxu0 0
    %1190 = vmatpush1.bf16.xpose.msra.mxu0 0
    %1191 = vmatprep.subr.bf16.mxu0 0
    %1192 = vmatpush1.bf16.xpose.msra.mxu0 0
    %1193 = vmatprep.subr.bf16.mxu0 0
    %1194 = vmatpush1.bf16.xpose.msra.mxu0 0
    %1195 = vmatprep.subr.bf16.mxu0 0
    %1196 = vmatpush1.bf16.xpose.msra.mxu0 0
    %1197 = vmatprep.subr.bf16.mxu0 0
    %1198 = vmatpush1.bf16.xpose.msra.mxu0 0
    %1199 = vmatprep.subr.bf16.mxu0 0
    %1200 = vmatpush1.bf16.xpose.msra.mxu0 0
    %1201 = vmatprep.subr.bf16.mxu0 0
    %1202 = vmatpush1.bf16.xpose.msra.mxu0 0
    %1203 = vmatprep.subr.bf16.mxu0 0
    %1204 = vmatpush1.bf16.xpose.msra.mxu0 0
    %1205 = vmatprep.mubr.bf16.mxu0 0
    %1206 = vmatmul.mubr.bf16.gmra.mrb[0].mxu0 %v1168
    %v1207 = vpop.f32.mrb[0].mxu0
    %v1208 = vadd.f32 0.0, %v1207
    %v1209 = vpop.f32.mrb[0].mxu0
    %v1210 = vpop.f32.mrb[0].mxu0
    %v1211 = vpop.f32.mrb[0].mxu0
    %1212 = vdwg.mxu0
    %v1213 = vsel %vm549, %v1158, -inf
    %1214 = vmax.xlane.f32.xlu0 %v1213
    %v1215 = vpop.xlane.xlu0 %1214
    %v1216 = vsel %vm549, %v1208, -inf
    %1217 = vmax.xlane.f32.xlu0 %v1216
    %v1218 = vpop.xlane.xlu0 %1217
    %v1219 = vsub.f32 %v1158, %v1215
    %v1220 = vsub.f32 %v1208, %v1218
    %v1221 = vmul.f32 %v1219, 1.442695
    %v1222 = vpow.pop %v1221
    %v1223 = vmul.f32 %v1220, 1.442695
    %v1224 = vpow.pop %v1223
    %v1225 = vsel %vm549, %v1222, 0.0
    %1226 = vadd.xlane.f32.xlu0 %v1225
    %v1227 = vpop.xlane.xlu0 %1226
    %v1228 = vsel %vm549, %v1224, 0.0
    %1229 = vadd.xlane.f32.xlu0 %v1228
    %v1230 = vpop.xlane.xlu0 %1229
    %v1231 = vrcp.pop %v1227
    %v1232 = vrcp.pop %v1230
    %v1233 = vmul.f32 %v1222, %v1231
    %v1234 = vmul.f32 %v1224, %v1232
    %v1235 = vpack.c.bf16 %v1233, %v1233
    %v1236 = vpack.c.bf16 %v1234, %v1234
    %1237 = vrot.lane.b32.xlu0 %v454, 32
    %v1238 = vpop.permute.xlu0 %1237
    %v1240 = vsel %vm549, %v1235, 0
    %v1243 = vsel %vm577, %v1238, 0
    %1245 = vmatprep.subr.bf16.mxu0 0
    %1246 = vmatpush1.bf16.msra.mxu0 %v1243
    %1247 = vmatprep.subr.bf16.mxu0 0
    %1248 = vmatpush1.bf16.msra.mxu0 0
    %1249 = vmatprep.subr.bf16.mxu0 0
    %1250 = vmatpush1.bf16.msra.mxu0 0
    %1251 = vmatprep.subr.bf16.mxu0 0
    %1252 = vmatpush1.bf16.msra.mxu0 0
    %1253 = vmatprep.subr.bf16.mxu0 0
    %1254 = vmatpush1.bf16.msra.mxu0 0
    %1255 = vmatprep.subr.bf16.mxu0 0
    %1256 = vmatpush1.bf16.msra.mxu0 0
    %1257 = vmatprep.subr.bf16.mxu0 0
    %1258 = vmatpush1.bf16.msra.mxu0 0
    %1259 = vmatprep.subr.bf16.mxu0 0
    %1260 = vmatpush1.bf16.msra.mxu0 0
    %1261 = vmatprep.subr.bf16.mxu0 0
    %1262 = vmatpush1.bf16.msra.mxu0 0
    %1263 = vmatprep.subr.bf16.mxu0 0
    %1264 = vmatpush1.bf16.msra.mxu0 0
    %1265 = vmatprep.subr.bf16.mxu0 0
    %1266 = vmatpush1.bf16.msra.mxu0 0
    %1267 = vmatprep.subr.bf16.mxu0 0
    %1268 = vmatpush1.bf16.msra.mxu0 0
    %1269 = vmatprep.subr.bf16.mxu0 0
    %1270 = vmatpush1.bf16.msra.mxu0 0
    %1271 = vmatprep.subr.bf16.mxu0 0
    %1272 = vmatpush1.bf16.msra.mxu0 0
    %1273 = vmatprep.subr.bf16.mxu0 0
    %1274 = vmatpush1.bf16.msra.mxu0 0
    %1275 = vmatprep.subr.bf16.mxu0 0
    %1276 = vmatpush1.bf16.msra.mxu0 0
    %1277 = vmatprep.mubr.bf16.mxu0 0
    %1278 = vmatmul.mubr.bf16.gmra.mrb[0].mxu0 %v1240
    %v1279 = vpop.f32.mrb[0].mxu0
    %v1280 = vadd.f32 0.0, %v1279
    %v1281 = vpop.f32.mrb[0].mxu0
    %v1282 = vpop.f32.mrb[0].mxu0
    %v1283 = vpop.f32.mrb[0].mxu0
    %1284 = vdwg.mxu0
    %1285 = vrot.lane.b32.xlu0 %v455, 32
    %v1286 = vpop.permute.xlu0 %1285
    %v1288 = vsel %vm549, %v1236, 0
    %v1291 = vsel %vm577, %v1286, 0
    %1293 = vmatprep.subr.bf16.mxu0 0
    %1294 = vmatpush1.bf16.msra.mxu0 %v1291
    %1295 = vmatprep.subr.bf16.mxu0 0
    %1296 = vmatpush1.bf16.msra.mxu0 0
    %1297 = vmatprep.subr.bf16.mxu0 0
    %1298 = vmatpush1.bf16.msra.mxu0 0
    %1299 = vmatprep.subr.bf16.mxu0 0
    %1300 = vmatpush1.bf16.msra.mxu0 0
    %1301 = vmatprep.subr.bf16.mxu0 0
    %1302 = vmatpush1.bf16.msra.mxu0 0
    %1303 = vmatprep.subr.bf16.mxu0 0
    %1304 = vmatpush1.bf16.msra.mxu0 0
    %1305 = vmatprep.subr.bf16.mxu0 0
    %1306 = vmatpush1.bf16.msra.mxu0 0
    %1307 = vmatprep.subr.bf16.mxu0 0
    %1308 = vmatpush1.bf16.msra.mxu0 0
    %1309 = vmatprep.subr.bf16.mxu0 0
    %1310 = vmatpush1.bf16.msra.mxu0 0
    %1311 = vmatprep.subr.bf16.mxu0 0
    %1312 = vmatpush1.bf16.msra.mxu0 0
    %1313 = vmatprep.subr.bf16.mxu0 0
    %1314 = vmatpush1.bf16.msra.mxu0 0
    %1315 = vmatprep.subr.bf16.mxu0 0
    %1316 = vmatpush1.bf16.msra.mxu0 0
    %1317 = vmatprep.subr.bf16.mxu0 0
    %1318 = vmatpush1.bf16.msra.mxu0 0
    %1319 = vmatprep.subr.bf16.mxu0 0
    %1320 = vmatpush1.bf16.msra.mxu0 0
    %1321 = vmatprep.subr.bf16.mxu0 0
    %1322 = vmatpush1.bf16.msra.mxu0 0
    %1323 = vmatprep.subr.bf16.mxu0 0
    %1324 = vmatpush1.bf16.msra.mxu0 0
    %1325 = vmatprep.mubr.bf16.mxu0 0
    %1326 = vmatmul.mubr.bf16.gmra.mrb[0].mxu0 %v1288
    %v1327 = vpop.f32.mrb[0].mxu0
    %v1328 = vadd.f32 0.0, %v1327
    %v1329 = vpop.f32.mrb[0].mxu0
    %v1330 = vpop.f32.mrb[0].mxu0
    %v1331 = vpop.f32.mrb[0].mxu0
    %1332 = vdwg.mxu0
    %1335 = vrot.lane.b32.xlu0 %v839, 32
    %v1336 = vpop.permute.xlu0 %1335
    %1337 = vrot.lane.b32.xlu0 %v888, 32
    %v1338 = vpop.permute.xlu0 %1337
    %1343 = vrot.lane.b32.xlu0 %v1060, 64
    %v1344 = vpop.permute.xlu0 %1343
    %1345 = vrot.lane.b32.xlu0 %v1108, 64
    %v1346 = vpop.permute.xlu0 %1345
    %1351 = vrot.lane.b32.xlu0 %v1280, 96
    %v1352 = vpop.permute.xlu0 %1351
    %1353 = vrot.lane.b32.xlu0 %v1328, 96
    %v1354 = vpop.permute.xlu0 %1353
    %v1357 = vsel %vm456, %v616, %v1336
    %v1358 = vsel %vm456, %v662, %v1338
    %vm1359 = vcmask 523264
    %v1360 = vsel %vm1359, %v1357, %v1344
    %v1361 = vsel %vm1359, %v1358, %v1346
    %vm1362 = vcmask 785408
    %v1363 = vsel %vm1362, %v1360, %v1352
    %v1364 = vsel %vm1362, %v1361, %v1354
    %v1365 = vpack.c.bf16 %v1364, %v1363
    %v1366 = vlaneseq
    %v1367 = vshrl.u32 %v1366, 7
    %v1368 = vsub.s32 3, %v1367
    %v1369 = vrot.slane %v217, %v1368
    %v1386 = vunpack.c.l.b16 %v104
    %v1387 = vunpack.c.l.b16 %v105
    %v1388 = vunpack.c.l.b16 %v106
    %v1389 = vunpack.c.l.b16 %v107
    %v1390 = vunpack.c.l.b16 %v108
    %v1391 = vunpack.c.l.b16 %v109
    %v1392 = vunpack.c.l.b16 %v110
    %v1393 = vunpack.c.l.b16 %v111
    %v1394 = vunpack.c.l.b16 %v112
    %v1395 = vunpack.c.l.b16 %v113
    %v1396 = vunpack.c.l.b16 %v114
    %v1397 = vunpack.c.l.b16 %v115
    %v1398 = vunpack.c.l.b16 %v116
    %v1399 = vunpack.c.l.b16 %v117
    %v1400 = vunpack.c.l.b16 %v118
    %v1401 = vunpack.c.l.b16 %v119
    %v1402 = vpack.c.b16 %v1387, %v1386
    %v1403 = vpack.c.b16 %v1389, %v1388
    %v1404 = vpack.c.b16 %v1391, %v1390
    %v1405 = vpack.c.b16 %v1393, %v1392
    %v1406 = vpack.c.b16 %v1395, %v1394
    %v1407 = vpack.c.b16 %v1397, %v1396
    %v1408 = vpack.c.b16 %v1399, %v1398
    %v1409 = vpack.c.b16 %v1401, %v1400
    %1418 = vmatprep.subr.bf16.mxu0 0
    %1419 = vmatpush1.bf16.msra.mxu0 %v1402
    %1420 = vmatprep.subr.bf16.mxu0 0
    %1421 = vmatpush1.bf16.msra.mxu0 %v1403
    %1422 = vmatprep.subr.bf16.mxu0 0
    %1423 = vmatpush1.bf16.msra.mxu0 %v1404
    %1424 = vmatprep.subr.bf16.mxu0 0
    %1425 = vmatpush1.bf16.msra.mxu0 %v1405
    %1426 = vmatprep.subr.bf16.mxu0 0
    %1427 = vmatpush1.bf16.msra.mxu0 %v1406
    %1428 = vmatprep.subr.bf16.mxu0 0
    %1429 = vmatpush1.bf16.msra.mxu0 %v1407
    %1430 = vmatprep.subr.bf16.mxu0 0
    %1431 = vmatpush1.bf16.msra.mxu0 %v1408
    %1432 = vmatprep.subr.bf16.mxu0 0
    %1433 = vmatpush1.bf16.msra.mxu0 %v1409
    %1434 = vmatprep.subr.bf16.mxu0 0
    %1435 = vmatpush1.bf16.msra.mxu0 0
    %1436 = vmatprep.subr.bf16.mxu0 0
    %1437 = vmatpush1.bf16.msra.mxu0 0
    %1438 = vmatprep.subr.bf16.mxu0 0
    %1439 = vmatpush1.bf16.msra.mxu0 0
    %1440 = vmatprep.subr.bf16.mxu0 0
    %1441 = vmatpush1.bf16.msra.mxu0 0
    %1442 = vmatprep.subr.bf16.mxu0 0
    %1443 = vmatpush1.bf16.msra.mxu0 0
    %1444 = vmatprep.subr.bf16.mxu0 0
    %1445 = vmatpush1.bf16.msra.mxu0 0
    %1446 = vmatprep.subr.bf16.mxu0 0
    %1447 = vmatpush1.bf16.msra.mxu0 0
    %1448 = vmatprep.subr.bf16.mxu0 0
    %1449 = vmatpush1.bf16.msra.mxu0 0
    %1450 = vmatprep.mubr.bf16.mxu0 0
    %1451 = vmatmul.mubr.bf16.gmra.mrb[0].mxu0 %v1365
    %v1452 = vpop.f32.mrb[0].mxu0
    %v1453 = vadd.f32 %v1369, %v1452
    %v1454 = vpop.f32.mrb[0].mxu0
    %v1455 = vpop.f32.mrb[0].mxu0
    %v1456 = vadd.f32 %v1369, %v1455
    %v1457 = vpop.f32.mrb[0].mxu0
    %1458 = vdwg.mxu0
    %v1459 = vadd.f32 %v70, %v1453
    %v1460 = vadd.f32 %v71, %v1456
    %1461 = vadd.xlane.f32.xlu0 %v1459
    %v1462 = vpop.xlane.xlu0 %1461
    %1463 = vadd.xlane.f32.xlu0 %v1460
    %v1464 = vpop.xlane.xlu0 %1463
    %v1465 = vrcp.pop 128.0
    %v1466 = vmul.f32 %v1462, %v1465
    %v1467 = vmul.f32 %v1464, %v1465
    %v1468 = vsub.f32 %v1459, %v1466
    %v1469 = vsub.f32 %v1460, %v1467
    %v1470 = vmul.f32 %v1468, %v1468
    %v1471 = vmul.f32 %v1469, %v1469
    %1472 = vadd.xlane.f32.xlu0 %v1470
    %v1473 = vpop.xlane.xlu0 %1472
    %1474 = vadd.xlane.f32.xlu0 %v1471
    %v1475 = vpop.xlane.xlu0 %1474
    %v1476 = vmul.f32 %v1473, %v1465
    %v1477 = vmul.f32 %v1475, %v1465
    %v1478 = vadd.f32 %v1476, 1e-05
    %v1479 = vadd.f32 %v1477, 1e-05
    %v1480 = vrsqrt.pop %v1478
    %v1481 = vrsqrt.pop %v1479
    %v1482 = vmul.f32 %v1468, %v1480
    %v1483 = vmul.f32 %v1469, %v1481
    %v1484 = vlaneseq
    %v1485 = vshrl.u32 %v1484, 7
    %v1486 = vsub.s32 4, %v1485
    %v1487 = vrot.slane %v217, %v1486
    %v1488 = vmul.f32 %v1482, %v1487
    %v1489 = vmul.f32 %v1483, %v1487
    %v1490 = vlaneseq
    %v1491 = vshrl.u32 %v1490, 7
    %v1492 = vsub.s32 5, %v1491
    %v1493 = vrot.slane %v217, %v1492
    %v1494 = vadd.f32 %v1488, %v1493
    %v1495 = vadd.f32 %v1489, %v1493
    %v1496 = vpack.c.bf16 %v1495, %v1494
    %v1498 = vlaneseq
    %v1499 = vshrl.u32 %v1498, 7
    %v1500 = vsub.s32 0, %v1499
    %v1501 = vrot.slane %v216, %v1500
    %v1502 = vlaneseq
    %v1503 = vshrl.u32 %v1502, 7
    %v1504 = vsub.s32 1, %v1503
    %v1505 = vrot.slane %v216, %v1504
    %v1506 = vlaneseq
    %v1507 = vshrl.u32 %v1506, 7
    %v1508 = vsub.s32 2, %v1507
    %v1509 = vrot.slane %v216, %v1508
    %v1510 = vlaneseq
    %v1511 = vshrl.u32 %v1510, 7
    %v1512 = vsub.s32 3, %v1511
    %v1513 = vrot.slane %v216, %v1512
    %v1550 = vunpack.c.l.b16 %v120
    %v1551 = vunpack.c.h.b16 %v120
    %v1552 = vunpack.c.l.b16 %v121
    %v1553 = vunpack.c.h.b16 %v121
    %v1554 = vunpack.c.l.b16 %v122
    %v1555 = vunpack.c.h.b16 %v122
    %v1556 = vunpack.c.l.b16 %v123
    %v1557 = vunpack.c.h.b16 %v123
    %v1558 = vunpack.c.l.b16 %v124
    %v1559 = vunpack.c.h.b16 %v124
    %v1560 = vunpack.c.l.b16 %v125
    %v1561 = vunpack.c.h.b16 %v125
    %v1562 = vunpack.c.l.b16 %v126
    %v1563 = vunpack.c.h.b16 %v126
    %v1564 = vunpack.c.l.b16 %v127
    %v1565 = vunpack.c.h.b16 %v127
    %v1566 = vunpack.c.l.b16 %v128
    %v1567 = vunpack.c.h.b16 %v128
    %v1568 = vunpack.c.l.b16 %v129
    %v1569 = vunpack.c.h.b16 %v129
    %v1570 = vunpack.c.l.b16 %v130
    %v1571 = vunpack.c.h.b16 %v130
    %v1572 = vunpack.c.l.b16 %v131
    %v1573 = vunpack.c.h.b16 %v131
    %v1574 = vunpack.c.l.b16 %v132
    %v1575 = vunpack.c.h.b16 %v132
    %v1576 = vunpack.c.l.b16 %v133
    %v1577 = vunpack.c.h.b16 %v133
    %v1578 = vunpack.c.l.b16 %v134
    %v1579 = vunpack.c.h.b16 %v134
    %v1580 = vunpack.c.l.b16 %v135
    %v1581 = vunpack.c.h.b16 %v135
    %v1582 = vunpack.c.l.b16 %v136
    %v1583 = vunpack.c.h.b16 %v136
    %v1584 = vunpack.c.l.b16 %v137
    %v1585 = vunpack.c.h.b16 %v137
    %v1586 = vunpack.c.l.b16 %v138
    %v1587 = vunpack.c.h.b16 %v138
    %v1588 = vunpack.c.l.b16 %v139
    %v1589 = vunpack.c.h.b16 %v139
    %v1590 = vunpack.c.l.b16 %v140
    %v1591 = vunpack.c.h.b16 %v140
    %v1592 = vunpack.c.l.b16 %v141
    %v1593 = vunpack.c.h.b16 %v141
    %v1594 = vunpack.c.l.b16 %v142
    %v1595 = vunpack.c.h.b16 %v142
    %v1596 = vunpack.c.l.b16 %v143
    %v1597 = vunpack.c.h.b16 %v143
    %v1598 = vunpack.c.l.b16 %v144
    %v1599 = vunpack.c.h.b16 %v144
    %v1600 = vunpack.c.l.b16 %v145
    %v1601 = vunpack.c.h.b16 %v145
    %v1602 = vunpack.c.l.b16 %v146
    %v1603 = vunpack.c.h.b16 %v146
    %v1604 = vunpack.c.l.b16 %v147
    %v1605 = vunpack.c.h.b16 %v147
    %v1606 = vunpack.c.l.b16 %v148
    %v1607 = vunpack.c.h.b16 %v148
    %v1608 = vunpack.c.l.b16 %v149
    %v1609 = vunpack.c.h.b16 %v149
    %v1610 = vunpack.c.l.b16 %v150
    %v1611 = vunpack.c.h.b16 %v150
    %v1612 = vunpack.c.l.b16 %v151
    %v1613 = vunpack.c.h.b16 %v151
    %v1614 = vpack.c.b16 %v1554, %v1550
    %v1615 = vpack.c.b16 %v1555, %v1551
    %v1616 = vpack.c.b16 %v1556, %v1552
    %v1617 = vpack.c.b16 %v1557, %v1553
    %v1618 = vpack.c.b16 %v1562, %v1558
    %v1619 = vpack.c.b16 %v1563, %v1559
    %v1620 = vpack.c.b16 %v1564, %v1560
    %v1621 = vpack.c.b16 %v1565, %v1561
    %v1622 = vpack.c.b16 %v1570, %v1566
    %v1623 = vpack.c.b16 %v1571, %v1567
    %v1624 = vpack.c.b16 %v1572, %v1568
    %v1625 = vpack.c.b16 %v1573, %v1569
    %v1626 = vpack.c.b16 %v1578, %v1574
    %v1627 = vpack.c.b16 %v1579, %v1575
    %v1628 = vpack.c.b16 %v1580, %v1576
    %v1629 = vpack.c.b16 %v1581, %v1577
    %v1630 = vpack.c.b16 %v1586, %v1582
    %v1631 = vpack.c.b16 %v1587, %v1583
    %v1632 = vpack.c.b16 %v1588, %v1584
    %v1633 = vpack.c.b16 %v1589, %v1585
    %v1634 = vpack.c.b16 %v1594, %v1590
    %v1635 = vpack.c.b16 %v1595, %v1591
    %v1636 = vpack.c.b16 %v1596, %v1592
    %v1637 = vpack.c.b16 %v1597, %v1593
    %v1638 = vpack.c.b16 %v1602, %v1598
    %v1639 = vpack.c.b16 %v1603, %v1599
    %v1640 = vpack.c.b16 %v1604, %v1600
    %v1641 = vpack.c.b16 %v1605, %v1601
    %v1642 = vpack.c.b16 %v1610, %v1606
    %v1643 = vpack.c.b16 %v1611, %v1607
    %v1644 = vpack.c.b16 %v1612, %v1608
    %v1645 = vpack.c.b16 %v1613, %v1609
    %1678 = vmatprep.subr.bf16.mxu0 %v1615
    %1679 = vmatpush1.bf16.msra.mxu0 %v1614
    %1680 = vmatprep.subr.bf16.mxu0 %v1619
    %1681 = vmatpush1.bf16.msra.mxu0 %v1618
    %1682 = vmatprep.subr.bf16.mxu0 %v1623
    %1683 = vmatpush1.bf16.msra.mxu0 %v1622
    %1684 = vmatprep.subr.bf16.mxu0 %v1627
    %1685 = vmatpush1.bf16.msra.mxu0 %v1626
    %1686 = vmatprep.subr.bf16.mxu0 %v1631
    %1687 = vmatpush1.bf16.msra.mxu0 %v1630
    %1688 = vmatprep.subr.bf16.mxu0 %v1635
    %1689 = vmatpush1.bf16.msra.mxu0 %v1634
    %1690 = vmatprep.subr.bf16.mxu0 %v1639
    %1691 = vmatpush1.bf16.msra.mxu0 %v1638
    %1692 = vmatprep.subr.bf16.mxu0 %v1643
    %1693 = vmatpush1.bf16.msra.mxu0 %v1642
    %1694 = vmatprep.subr.bf16.mxu0 0
    %1695 = vmatpush1.bf16.msra.mxu0 0
    %1696 = vmatprep.subr.bf16.mxu0 0
    %1697 = vmatpush1.bf16.msra.mxu0 0
    %1698 = vmatprep.subr.bf16.mxu0 0
    %1699 = vmatpush1.bf16.msra.mxu0 0
    %1700 = vmatprep.subr.bf16.mxu0 0
    %1701 = vmatpush1.bf16.msra.mxu0 0
    %1702 = vmatprep.subr.bf16.mxu0 0
    %1703 = vmatpush1.bf16.msra.mxu0 0
    %1704 = vmatprep.subr.bf16.mxu0 0
    %1705 = vmatpush1.bf16.msra.mxu0 0
    %1706 = vmatprep.subr.bf16.mxu0 0
    %1707 = vmatpush1.bf16.msra.mxu0 0
    %1708 = vmatprep.subr.bf16.mxu0 0
    %1709 = vmatpush1.bf16.msra.mxu0 0
    %1710 = vmatprep.mubr.bf16.mxu0 0
    %1711 = vmatmul.mubr.bf16.gmra.mrb[0].mxu0 %v1496
    %v1712 = vpop.f32.mrb[0].mxu0
    %v1713 = vadd.f32 %v1501, %v1712
    %v1714 = vpop.f32.mrb[0].mxu0
    %v1715 = vadd.f32 %v1505, %v1714
    %v1716 = vpop.f32.mrb[0].mxu0
    %v1717 = vadd.f32 %v1501, %v1716
    %v1718 = vpop.f32.mrb[0].mxu0
    %v1719 = vadd.f32 %v1505, %v1718
    %1720 = vdwg.mxu0
    %1721 = vmatprep.subr.bf16.mxu0 %v1617
    %1722 = vmatpush1.bf16.msra.mxu0 %v1616
    %1723 = vmatprep.subr.bf16.mxu0 %v1621
    %1724 = vmatpush1.bf16.msra.mxu0 %v1620
    %1725 = vmatprep.subr.bf16.mxu0 %v1625
    %1726 = vmatpush1.bf16.msra.mxu0 %v1624
    %1727 = vmatprep.subr.bf16.mxu0 %v1629
    %1728 = vmatpush1.bf16.msra.mxu0 %v1628
    %1729 = vmatprep.subr.bf16.mxu0 %v1633
    %1730 = vmatpush1.bf16.msra.mxu0 %v1632
    %1731 = vmatprep.subr.bf16.mxu0 %v1637
    %1732 = vmatpush1.bf16.msra.mxu0 %v1636
    %1733 = vmatprep.subr.bf16.mxu0 %v1641
    %1734 = vmatpush1.bf16.msra.mxu0 %v1640
    %1735 = vmatprep.subr.bf16.mxu0 %v1645
    %1736 = vmatpush1.bf16.msra.mxu0 %v1644
    %1737 = vmatprep.subr.bf16.mxu0 0
    %1738 = vmatpush1.bf16.msra.mxu0 0
    %1739 = vmatprep.subr.bf16.mxu0 0
    %1740 = vmatpush1.bf16.msra.mxu0 0
    %1741 = vmatprep.subr.bf16.mxu0 0
    %1742 = vmatpush1.bf16.msra.mxu0 0
    %1743 = vmatprep.subr.bf16.mxu0 0
    %1744 = vmatpush1.bf16.msra.mxu0 0
    %1745 = vmatprep.subr.bf16.mxu0 0
    %1746 = vmatpush1.bf16.msra.mxu0 0
    %1747 = vmatprep.subr.bf16.mxu0 0
    %1748 = vmatpush1.bf16.msra.mxu0 0
    %1749 = vmatprep.subr.bf16.mxu0 0
    %1750 = vmatpush1.bf16.msra.mxu0 0
    %1751 = vmatprep.subr.bf16.mxu0 0
    %1752 = vmatpush1.bf16.msra.mxu0 0
    %1753 = vmatprep.mubr.bf16.mxu0 0
    %1754 = vmatmul.mubr.bf16.gmra.mrb[0].mxu0 %v1496
    %v1755 = vpop.f32.mrb[0].mxu0
    %v1756 = vadd.f32 %v1509, %v1755
    %v1757 = vpop.f32.mrb[0].mxu0
    %v1758 = vadd.f32 %v1513, %v1757
    %v1759 = vpop.f32.mrb[0].mxu0
    %v1760 = vadd.f32 %v1509, %v1759
    %v1761 = vpop.f32.mrb[0].mxu0
    %v1762 = vadd.f32 %v1513, %v1761
    %1763 = vdwg.mxu0
    %v1764 = vmax.f32 %v1713, 0.0
    %v1765 = vmax.f32 %v1715, 0.0
    %v1766 = vmax.f32 %v1756, 0.0
    %v1767 = vmax.f32 %v1758, 0.0
    %v1768 = vmax.f32 %v1717, 0.0
    %v1769 = vmax.f32 %v1719, 0.0
    %v1770 = vmax.f32 %v1760, 0.0
    %v1771 = vmax.f32 %v1762, 0.0
    %v1772 = vpack.c.bf16 %v1768, %v1764
    %v1773 = vpack.c.bf16 %v1769, %v1765
    %v1774 = vpack.c.bf16 %v1770, %v1766
    %v1775 = vpack.c.bf16 %v1771, %v1767
    %v1776 = vlaneseq
    %v1777 = vshrl.u32 %v1776, 7
    %v1778 = vsub.s32 6, %v1777
    %v1779 = vrot.slane %v217, %v1778
    %v1844 = vunpack.c.l.b16 %v152
    %v1845 = vunpack.c.l.b16 %v153
    %v1846 = vunpack.c.l.b16 %v154
    %v1847 = vunpack.c.l.b16 %v155
    %v1848 = vunpack.c.l.b16 %v156
    %v1849 = vunpack.c.l.b16 %v157
    %v1850 = vunpack.c.l.b16 %v158
    %v1851 = vunpack.c.l.b16 %v159
    %v1852 = vunpack.c.l.b16 %v160
    %v1853 = vunpack.c.l.b16 %v161
    %v1854 = vunpack.c.l.b16 %v162
    %v1855 = vunpack.c.l.b16 %v163
    %v1856 = vunpack.c.l.b16 %v164
    %v1857 = vunpack.c.l.b16 %v165
    %v1858 = vunpack.c.l.b16 %v166
    %v1859 = vunpack.c.l.b16 %v167
    %v1860 = vunpack.c.l.b16 %v168
    %v1861 = vunpack.c.l.b16 %v169
    %v1862 = vunpack.c.l.b16 %v170
    %v1863 = vunpack.c.l.b16 %v171
    %v1864 = vunpack.c.l.b16 %v172
    %v1865 = vunpack.c.l.b16 %v173
    %v1866 = vunpack.c.l.b16 %v174
    %v1867 = vunpack.c.l.b16 %v175
    %v1868 = vunpack.c.l.b16 %v176
    %v1869 = vunpack.c.l.b16 %v177
    %v1870 = vunpack.c.l.b16 %v178
    %v1871 = vunpack.c.l.b16 %v179
    %v1872 = vunpack.c.l.b16 %v180
    %v1873 = vunpack.c.l.b16 %v181
    %v1874 = vunpack.c.l.b16 %v182
    %v1875 = vunpack.c.l.b16 %v183
    %v1876 = vunpack.c.l.b16 %v184
    %v1877 = vunpack.c.l.b16 %v185
    %v1878 = vunpack.c.l.b16 %v186
    %v1879 = vunpack.c.l.b16 %v187
    %v1880 = vunpack.c.l.b16 %v188
    %v1881 = vunpack.c.l.b16 %v189
    %v1882 = vunpack.c.l.b16 %v190
    %v1883 = vunpack.c.l.b16 %v191
    %v1884 = vunpack.c.l.b16 %v192
    %v1885 = vunpack.c.l.b16 %v193
    %v1886 = vunpack.c.l.b16 %v194
    %v1887 = vunpack.c.l.b16 %v195
    %v1888 = vunpack.c.l.b16 %v196
    %v1889 = vunpack.c.l.b16 %v197
    %v1890 = vunpack.c.l.b16 %v198
    %v1891 = vunpack.c.l.b16 %v199
    %v1892 = vunpack.c.l.b16 %v200
    %v1893 = vunpack.c.l.b16 %v201
    %v1894 = vunpack.c.l.b16 %v202
    %v1895 = vunpack.c.l.b16 %v203
    %v1896 = vunpack.c.l.b16 %v204
    %v1897 = vunpack.c.l.b16 %v205
    %v1898 = vunpack.c.l.b16 %v206
    %v1899 = vunpack.c.l.b16 %v207
    %v1900 = vunpack.c.l.b16 %v208
    %v1901 = vunpack.c.l.b16 %v209
    %v1902 = vunpack.c.l.b16 %v210
    %v1903 = vunpack.c.l.b16 %v211
    %v1904 = vunpack.c.l.b16 %v212
    %v1905 = vunpack.c.l.b16 %v213
    %v1906 = vunpack.c.l.b16 %v214
    %v1907 = vunpack.c.l.b16 %v215
    %v1908 = vpack.c.b16 %v1845, %v1844
    %v1909 = vpack.c.b16 %v1847, %v1846
    %v1910 = vpack.c.b16 %v1849, %v1848
    %v1911 = vpack.c.b16 %v1851, %v1850
    %v1912 = vpack.c.b16 %v1853, %v1852
    %v1913 = vpack.c.b16 %v1855, %v1854
    %v1914 = vpack.c.b16 %v1857, %v1856
    %v1915 = vpack.c.b16 %v1859, %v1858
    %v1916 = vpack.c.b16 %v1861, %v1860
    %v1917 = vpack.c.b16 %v1863, %v1862
    %v1918 = vpack.c.b16 %v1865, %v1864
    %v1919 = vpack.c.b16 %v1867, %v1866
    %v1920 = vpack.c.b16 %v1869, %v1868
    %v1921 = vpack.c.b16 %v1871, %v1870
    %v1922 = vpack.c.b16 %v1873, %v1872
    %v1923 = vpack.c.b16 %v1875, %v1874
    %v1924 = vpack.c.b16 %v1877, %v1876
    %v1925 = vpack.c.b16 %v1879, %v1878
    %v1926 = vpack.c.b16 %v1881, %v1880
    %v1927 = vpack.c.b16 %v1883, %v1882
    %v1928 = vpack.c.b16 %v1885, %v1884
    %v1929 = vpack.c.b16 %v1887, %v1886
    %v1930 = vpack.c.b16 %v1889, %v1888
    %v1931 = vpack.c.b16 %v1891, %v1890
    %v1932 = vpack.c.b16 %v1893, %v1892
    %v1933 = vpack.c.b16 %v1895, %v1894
    %v1934 = vpack.c.b16 %v1897, %v1896
    %v1935 = vpack.c.b16 %v1899, %v1898
    %v1936 = vpack.c.b16 %v1901, %v1900
    %v1937 = vpack.c.b16 %v1903, %v1902
    %v1938 = vpack.c.b16 %v1905, %v1904
    %v1939 = vpack.c.b16 %v1907, %v1906
    %1972 = vmatprep.subr.bf16.mxu0 0
    %1973 = vmatpush1.bf16.msra.mxu0 %v1908
    %1974 = vmatprep.subr.bf16.mxu0 0
    %1975 = vmatpush1.bf16.msra.mxu0 %v1909
    %1976 = vmatprep.subr.bf16.mxu0 0
    %1977 = vmatpush1.bf16.msra.mxu0 %v1910
    %1978 = vmatprep.subr.bf16.mxu0 0
    %1979 = vmatpush1.bf16.msra.mxu0 %v1911
    %1980 = vmatprep.subr.bf16.mxu0 0
    %1981 = vmatpush1.bf16.msra.mxu0 %v1912
    %1982 = vmatprep.subr.bf16.mxu0 0
    %1983 = vmatpush1.bf16.msra.mxu0 %v1913
    %1984 = vmatprep.subr.bf16.mxu0 0
    %1985 = vmatpush1.bf16.msra.mxu0 %v1914
    %1986 = vmatprep.subr.bf16.mxu0 0
    %1987 = vmatpush1.bf16.msra.mxu0 %v1915
    %1988 = vmatprep.subr.bf16.mxu0 0
    %1989 = vmatpush1.bf16.msra.mxu0 %v1916
    %1990 = vmatprep.subr.bf16.mxu0 0
    %1991 = vmatpush1.bf16.msra.mxu0 %v1917
    %1992 = vmatprep.subr.bf16.mxu0 0
    %1993 = vmatpush1.bf16.msra.mxu0 %v1918
    %1994 = vmatprep.subr.bf16.mxu0 0
    %1995 = vmatpush1.bf16.msra.mxu0 %v1919
    %1996 = vmatprep.subr.bf16.mxu0 0
    %1997 = vmatpush1.bf16.msra.mxu0 %v1920
    %1998 = vmatprep.subr.bf16.mxu0 0
    %1999 = vmatpush1.bf16.msra.mxu0 %v1921
    %2000 = vmatprep.subr.bf16.mxu0 0
    %2001 = vmatpush1.bf16.msra.mxu0 %v1922
    %2002 = vmatprep.subr.bf16.mxu0 0
    %2003 = vmatpush1.bf16.msra.mxu0 %v1923
    %2004 = vmatprep.mubr.bf16.mxu0 %v1773
    %2005 = vmatmul.mubr.bf16.gmra.mrb[0].mxu0 %v1772
    %v2006 = vpop.f32.mrb[0].mxu0
    %v2007 = vadd.f32 %v1779, %v2006
    %v2008 = vpop.f32.mrb[0].mxu0
    %v2009 = vpop.f32.mrb[0].mxu0
    %v2010 = vadd.f32 %v1779, %v2009
    %v2011 = vpop.f32.mrb[0].mxu0
    %2012 = vdwg.mxu0
    %2013 = vmatprep.subr.bf16.mxu0 0
    %2014 = vmatpush1.bf16.msra.mxu0 %v1924
    %2015 = vmatprep.subr.bf16.mxu0 0
    %2016 = vmatpush1.bf16.msra.mxu0 %v1925
    %2017 = vmatprep.subr.bf16.mxu0 0
    %2018 = vmatpush1.bf16.msra.mxu0 %v1926
    %2019 = vmatprep.subr.bf16.mxu0 0
    %2020 = vmatpush1.bf16.msra.mxu0 %v1927
    %2021 = vmatprep.subr.bf16.mxu0 0
    %2022 = vmatpush1.bf16.msra.mxu0 %v1928
    %2023 = vmatprep.subr.bf16.mxu0 0
    %2024 = vmatpush1.bf16.msra.mxu0 %v1929
    %2025 = vmatprep.subr.bf16.mxu0 0
    %2026 = vmatpush1.bf16.msra.mxu0 %v1930
    %2027 = vmatprep.subr.bf16.mxu0 0
    %2028 = vmatpush1.bf16.msra.mxu0 %v1931
    %2029 = vmatprep.subr.bf16.mxu0 0
    %2030 = vmatpush1.bf16.msra.mxu0 %v1932
    %2031 = vmatprep.subr.bf16.mxu0 0
    %2032 = vmatpush1.bf16.msra.mxu0 %v1933
    %2033 = vmatprep.subr.bf16.mxu0 0
    %2034 = vmatpush1.bf16.msra.mxu0 %v1934
    %2035 = vmatprep.subr.bf16.mxu0 0
    %2036 = vmatpush1.bf16.msra.mxu0 %v1935
    %2037 = vmatprep.subr.bf16.mxu0 0
    %2038 = vmatpush1.bf16.msra.mxu0 %v1936
    %2039 = vmatprep.subr.bf16.mxu0 0
    %2040 = vmatpush1.bf16.msra.mxu0 %v1937
    %2041 = vmatprep.subr.bf16.mxu0 0
    %2042 = vmatpush1.bf16.msra.mxu0 %v1938
    %2043 = vmatprep.subr.bf16.mxu0 0
    %2044 = vmatpush1.bf16.msra.mxu0 %v1939
    %2045 = vmatprep.mubr.bf16.mxu0 %v1775
    %2046 = vmatmul.mubr.bf16.gmra.mrb[0].mxu0 %v1774
    %v2047 = vpop.f32.mrb[0].mxu0
    %v2048 = vadd.f32 %v2007, %v2047
    %v2049 = vpop.f32.mrb[0].mxu0
    %v2050 = vpop.f32.mrb[0].mxu0
    %v2051 = vadd.f32 %v2010, %v2050
    %v2052 = vpop.f32.mrb[0].mxu0
    %2053 = vdwg.mxu0
    %v2054 = vadd.f32 %v1494, %v2048
    %v2055 = vadd.f32 %v1495, %v2051
    %2056 = vadd.xlane.f32.xlu0 %v2054
    %v2057 = vpop.xlane.xlu0 %2056
    %2058 = vadd.xlane.f32.xlu0 %v2055
    %v2059 = vpop.xlane.xlu0 %2058
    %v2060 = vmul.f32 %v2057, %v1465
    %v2061 = vmul.f32 %v2059, %v1465
    %v2062 = vsub.f32 %v2054, %v2060
    %v2063 = vsub.f32 %v2055, %v2061
    %v2064 = vmul.f32 %v2062, %v2062
    %v2065 = vmul.f32 %v2063, %v2063
    %2066 = vadd.xlane.f32.xlu0 %v2064
    %v2067 = vpop.xlane.xlu0 %2066
    %2068 = vadd.xlane.f32.xlu0 %v2065
    %v2069 = vpop.xlane.xlu0 %2068
    %v2070 = vmul.f32 %v2067, %v1465
    %v2071 = vmul.f32 %v2069, %v1465
    %v2072 = vadd.f32 %v2070, 1e-05
    %v2073 = vadd.f32 %v2071, 1e-05
    %v2074 = vrsqrt.pop %v2072
    %v2075 = vrsqrt.pop %v2073
    %v2076 = vmul.f32 %v2062, %v2074
    %v2077 = vmul.f32 %v2063, %v2075
    %v2078 = vlaneseq
    %v2079 = vshrl.u32 %v2078, 7
    %v2080 = vsub.s32 7, %v2079
    %v2081 = vrot.slane %v217, %v2080
    %v2082 = vmul.f32 %v2076, %v2081
    %v2083 = vmul.f32 %v2077, %v2081
    %v2084 = vlaneseq
    %v2085 = vshrl.u32 %v2084, 7
    %v2086 = vsub.s32 0, %v2085
    %v2087 = vrot.slane %v218, %v2086
    %v2088 = vadd.f32 %v2082, %v2087
    %v2089 = vadd.f32 %v2083, %v2087
    %s2090 = scalar_lea.vmem [#allocation2], 192
    %v2091 = vld [vmem:[%s2090] sm:$0xff]
    %v2092 = vld [vmem:[%s2090 + $0x8] sm:$0xf]
    %v2093 = vld [vmem:[%s2090 + $0xc] sm:$0xff]
    %v2094 = vld [vmem:[%s2090 + $0x14] sm:$0xf]
    %v2095 = vld [vmem:[%s2090 + $0x18] sm:$0xff]
    %v2096 = vld [vmem:[%s2090 + $0x20] sm:$0xf]
    %v2097 = vld [vmem:[%s2090 + $0x24] sm:$0xff]
    %v2098 = vld [vmem:[%s2090 + $0x2c] sm:$0xf]
    %v2099 = vld [vmem:[%s2090 + $0x30] sm:$0xff]
    %v2100 = vld [vmem:[%s2090 + $0x38] sm:$0xf]
    %v2101 = vld [vmem:[%s2090 + $0x3c] sm:$0xff]
    %v2102 = vld [vmem:[%s2090 + $0x44] sm:$0xf]
    %v2103 = vld [vmem:[%s2090 + $0x48] sm:$0xff]
    %v2104 = vld [vmem:[%s2090 + $0x50] sm:$0xf]
    %v2105 = vld [vmem:[%s2090 + $0x54] sm:$0xff]
    %v2106 = vld [vmem:[%s2090 + $0x5c] sm:$0xf]
    %v2107 = vld [vmem:[%s2090 + $0x60] sm:$0xff]
    %v2108 = vld [vmem:[%s2090 + $0x68] sm:$0xf]
    %v2109 = vld [vmem:[%s2090 + $0x6c] sm:$0xff]
    %v2110 = vld [vmem:[%s2090 + $0x74] sm:$0xf]
    %v2111 = vld [vmem:[%s2090 + $0x78] sm:$0xff]
    %v2112 = vld [vmem:[%s2090 + $0x80] sm:$0xf]
    %v2113 = vld [vmem:[%s2090 + $0x84] sm:$0xff]
    %v2114 = vld [vmem:[%s2090 + $0x8c] sm:$0xf]
    %v2115 = vld [vmem:[%s2090 + $0x90] sm:$0xff]
    %v2116 = vld [vmem:[%s2090 + $0x98] sm:$0xf]
    %v2117 = vld [vmem:[%s2090 + $0x9c] sm:$0xff]
    %v2118 = vld [vmem:[%s2090 + $0xa4] sm:$0xf]
    %v2119 = vld [vmem:[%s2090 + $0xa8] sm:$0xff]
    %v2120 = vld [vmem:[%s2090 + $0xb0] sm:$0xf]
    %v2121 = vld [vmem:[%s2090 + $0xb4] sm:$0xff]
    %v2122 = vld [vmem:[%s2090 + $0xbc] sm:$0xf]
    %s2123 = scalar_lea.vmem %s2, 64
    %v2124 = vld [vmem:[%s2123] sm:$0xf]
    %v2125 = vld [vmem:[%s2123 + $0x4] sm:$0xf]
    %v2126 = vld [vmem:[%s2123 + $0x8] sm:$0xf]
    %v2127 = vld [vmem:[%s2123 + $0xc] sm:$0xf]
    %v2128 = vld [vmem:[%s2123 + $0x10] sm:$0xf]
    %v2129 = vld [vmem:[%s2123 + $0x14] sm:$0xf]
    %v2130 = vld [vmem:[%s2123 + $0x18] sm:$0xf]
    %v2131 = vld [vmem:[%s2123 + $0x1c] sm:$0xf]
    %v2132 = vld [vmem:[%s2123 + $0x20] sm:$0xf]
    %v2133 = vld [vmem:[%s2123 + $0x24] sm:$0xf]
    %v2134 = vld [vmem:[%s2123 + $0x28] sm:$0xf]
    %v2135 = vld [vmem:[%s2123 + $0x2c] sm:$0xf]
    %v2136 = vld [vmem:[%s2123 + $0x30] sm:$0xf]
    %v2137 = vld [vmem:[%s2123 + $0x34] sm:$0xf]
    %v2138 = vld [vmem:[%s2123 + $0x38] sm:$0xf]
    %v2139 = vld [vmem:[%s2123 + $0x3c] sm:$0xf]
    %s2140 = scalar_lea.vmem %s3, 256
    %v2141 = vld [vmem:[%s2140] sm:$0xff]
    %v2142 = vld [vmem:[%s2140 + $0x8] sm:$0xff]
    %v2143 = vld [vmem:[%s2140 + $0x10] sm:$0xff]
    %v2144 = vld [vmem:[%s2140 + $0x18] sm:$0xff]
    %v2145 = vld [vmem:[%s2140 + $0x20] sm:$0xff]
    %v2146 = vld [vmem:[%s2140 + $0x28] sm:$0xff]
    %v2147 = vld [vmem:[%s2140 + $0x30] sm:$0xff]
    %v2148 = vld [vmem:[%s2140 + $0x38] sm:$0xff]
    %v2149 = vld [vmem:[%s2140 + $0x40] sm:$0xff]
    %v2150 = vld [vmem:[%s2140 + $0x48] sm:$0xff]
    %v2151 = vld [vmem:[%s2140 + $0x50] sm:$0xff]
    %v2152 = vld [vmem:[%s2140 + $0x58] sm:$0xff]
    %v2153 = vld [vmem:[%s2140 + $0x60] sm:$0xff]
    %v2154 = vld [vmem:[%s2140 + $0x68] sm:$0xff]
    %v2155 = vld [vmem:[%s2140 + $0x70] sm:$0xff]
    %v2156 = vld [vmem:[%s2140 + $0x78] sm:$0xff]
    %v2157 = vld [vmem:[%s2140 + $0x80] sm:$0xff]
    %v2158 = vld [vmem:[%s2140 + $0x88] sm:$0xff]
    %v2159 = vld [vmem:[%s2140 + $0x90] sm:$0xff]
    %v2160 = vld [vmem:[%s2140 + $0x98] sm:$0xff]
    %v2161 = vld [vmem:[%s2140 + $0xa0] sm:$0xff]
    %v2162 = vld [vmem:[%s2140 + $0xa8] sm:$0xff]
    %v2163 = vld [vmem:[%s2140 + $0xb0] sm:$0xff]
    %v2164 = vld [vmem:[%s2140 + $0xb8] sm:$0xff]
    %v2165 = vld [vmem:[%s2140 + $0xc0] sm:$0xff]
    %v2166 = vld [vmem:[%s2140 + $0xc8] sm:$0xff]
    %v2167 = vld [vmem:[%s2140 + $0xd0] sm:$0xff]
    %v2168 = vld [vmem:[%s2140 + $0xd8] sm:$0xff]
    %v2169 = vld [vmem:[%s2140 + $0xe0] sm:$0xff]
    %v2170 = vld [vmem:[%s2140 + $0xe8] sm:$0xff]
    %v2171 = vld [vmem:[%s2140 + $0xf0] sm:$0xff]
    %v2172 = vld [vmem:[%s2140 + $0xf8] sm:$0xff]
    %s2173 = scalar_lea.vmem [#allocation4], 256
    %v2174 = vld [vmem:[%s2173] sm:$0xf]
    %v2175 = vld [vmem:[%s2173 + $0x4] sm:$0xf]
    %v2176 = vld [vmem:[%s2173 + $0x8] sm:$0xf]
    %v2177 = vld [vmem:[%s2173 + $0xc] sm:$0xf]
    %v2178 = vld [vmem:[%s2173 + $0x10] sm:$0xf]
    %v2179 = vld [vmem:[%s2173 + $0x14] sm:$0xf]
    %v2180 = vld [vmem:[%s2173 + $0x18] sm:$0xf]
    %v2181 = vld [vmem:[%s2173 + $0x1c] sm:$0xf]
    %v2182 = vld [vmem:[%s2173 + $0x20] sm:$0xf]
    %v2183 = vld [vmem:[%s2173 + $0x24] sm:$0xf]
    %v2184 = vld [vmem:[%s2173 + $0x28] sm:$0xf]
    %v2185 = vld [vmem:[%s2173 + $0x2c] sm:$0xf]
    %v2186 = vld [vmem:[%s2173 + $0x30] sm:$0xf]
    %v2187 = vld [vmem:[%s2173 + $0x34] sm:$0xf]
    %v2188 = vld [vmem:[%s2173 + $0x38] sm:$0xf]
    %v2189 = vld [vmem:[%s2173 + $0x3c] sm:$0xf]
    %v2190 = vld [vmem:[%s2173 + $0x40] sm:$0xf]
    %v2191 = vld [vmem:[%s2173 + $0x44] sm:$0xf]
    %v2192 = vld [vmem:[%s2173 + $0x48] sm:$0xf]
    %v2193 = vld [vmem:[%s2173 + $0x4c] sm:$0xf]
    %v2194 = vld [vmem:[%s2173 + $0x50] sm:$0xf]
    %v2195 = vld [vmem:[%s2173 + $0x54] sm:$0xf]
    %v2196 = vld [vmem:[%s2173 + $0x58] sm:$0xf]
    %v2197 = vld [vmem:[%s2173 + $0x5c] sm:$0xf]
    %v2198 = vld [vmem:[%s2173 + $0x60] sm:$0xf]
    %v2199 = vld [vmem:[%s2173 + $0x64] sm:$0xf]
    %v2200 = vld [vmem:[%s2173 + $0x68] sm:$0xf]
    %v2201 = vld [vmem:[%s2173 + $0x6c] sm:$0xf]
    %v2202 = vld [vmem:[%s2173 + $0x70] sm:$0xf]
    %v2203 = vld [vmem:[%s2173 + $0x74] sm:$0xf]
    %v2204 = vld [vmem:[%s2173 + $0x78] sm:$0xf]
    %v2205 = vld [vmem:[%s2173 + $0x7c] sm:$0xf]
    %v2206 = vld [vmem:[%s2173 + $0x80] sm:$0xf]
    %v2207 = vld [vmem:[%s2173 + $0x84] sm:$0xf]
    %v2208 = vld [vmem:[%s2173 + $0x88] sm:$0xf]
    %v2209 = vld [vmem:[%s2173 + $0x8c] sm:$0xf]
    %v2210 = vld [vmem:[%s2173 + $0x90] sm:$0xf]
    %v2211 = vld [vmem:[%s2173 + $0x94] sm:$0xf]
    %v2212 = vld [vmem:[%s2173 + $0x98] sm:$0xf]
    %v2213 = vld [vmem:[%s2173 + $0x9c] sm:$0xf]
    %v2214 = vld [vmem:[%s2173 + $0xa0] sm:$0xf]
    %v2215 = vld [vmem:[%s2173 + $0xa4] sm:$0xf]
    %v2216 = vld [vmem:[%s2173 + $0xa8] sm:$0xf]
    %v2217 = vld [vmem:[%s2173 + $0xac] sm:$0xf]
    %v2218 = vld [vmem:[%s2173 + $0xb0] sm:$0xf]
    %v2219 = vld [vmem:[%s2173 + $0xb4] sm:$0xf]
    %v2220 = vld [vmem:[%s2173 + $0xb8] sm:$0xf]
    %v2221 = vld [vmem:[%s2173 + $0xbc] sm:$0xf]
    %v2222 = vld [vmem:[%s2173 + $0xc0] sm:$0xf]
    %v2223 = vld [vmem:[%s2173 + $0xc4] sm:$0xf]
    %v2224 = vld [vmem:[%s2173 + $0xc8] sm:$0xf]
    %v2225 = vld [vmem:[%s2173 + $0xcc] sm:$0xf]
    %v2226 = vld [vmem:[%s2173 + $0xd0] sm:$0xf]
    %v2227 = vld [vmem:[%s2173 + $0xd4] sm:$0xf]
    %v2228 = vld [vmem:[%s2173 + $0xd8] sm:$0xf]
    %v2229 = vld [vmem:[%s2173 + $0xdc] sm:$0xf]
    %v2230 = vld [vmem:[%s2173 + $0xe0] sm:$0xf]
    %v2231 = vld [vmem:[%s2173 + $0xe4] sm:$0xf]
    %v2232 = vld [vmem:[%s2173 + $0xe8] sm:$0xf]
    %v2233 = vld [vmem:[%s2173 + $0xec] sm:$0xf]
    %v2234 = vld [vmem:[%s2173 + $0xf0] sm:$0xf]
    %v2235 = vld [vmem:[%s2173 + $0xf4] sm:$0xf]
    %v2236 = vld [vmem:[%s2173 + $0xf8] sm:$0xf]
    %v2237 = vld [vmem:[%s2173 + $0xfc] sm:$0xf]
    %s2238 = scalar_lea.vmem %s5, 4
    %v2239 = vld [vmem:[%s2238] sm:$0xf]
    %s2240 = scalar_lea.vmem %s6, 16
    %v2241 = vld [vmem:[%s2240] sm:$0xff]
    %v2242 = vld [vmem:[%s2240 + $0x8] sm:$0x1]
    %v2243 = vpack.c.bf16 %v2089, %v2088
    %v2276 = vunpack.c.l.b16 %v2091
    %v2277 = vunpack.c.h.b16 %v2091
    %v2278 = vunpack.c.l.b16 %v2092
    %v2279 = vunpack.c.l.b16 %v2093
    %v2280 = vunpack.c.h.b16 %v2093
    %v2281 = vunpack.c.l.b16 %v2094
    %v2282 = vunpack.c.l.b16 %v2095
    %v2283 = vunpack.c.h.b16 %v2095
    %v2284 = vunpack.c.l.b16 %v2096
    %v2285 = vunpack.c.l.b16 %v2097
    %v2286 = vunpack.c.h.b16 %v2097
    %v2287 = vunpack.c.l.b16 %v2098
    %v2288 = vunpack.c.l.b16 %v2099
    %v2289 = vunpack.c.h.b16 %v2099
    %v2290 = vunpack.c.l.b16 %v2100
    %v2291 = vunpack.c.l.b16 %v2101
    %v2292 = vunpack.c.h.b16 %v2101
    %v2293 = vunpack.c.l.b16 %v2102
    %v2294 = vunpack.c.l.b16 %v2103
    %v2295 = vunpack.c.h.b16 %v2103
    %v2296 = vunpack.c.l.b16 %v2104
    %v2297 = vunpack.c.l.b16 %v2105
    %v2298 = vunpack.c.h.b16 %v2105
    %v2299 = vunpack.c.l.b16 %v2106
    %v2300 = vunpack.c.l.b16 %v2107
    %v2301 = vunpack.c.h.b16 %v2107
    %v2302 = vunpack.c.l.b16 %v2108
    %v2303 = vunpack.c.l.b16 %v2109
    %v2304 = vunpack.c.h.b16 %v2109
    %v2305 = vunpack.c.l.b16 %v2110
    %v2306 = vunpack.c.l.b16 %v2111
    %v2307 = vunpack.c.h.b16 %v2111
    %v2308 = vunpack.c.l.b16 %v2112
    %v2309 = vunpack.c.l.b16 %v2113
    %v2310 = vunpack.c.h.b16 %v2113
    %v2311 = vunpack.c.l.b16 %v2114
    %v2312 = vunpack.c.l.b16 %v2115
    %v2313 = vunpack.c.h.b16 %v2115
    %v2314 = vunpack.c.l.b16 %v2116
    %v2315 = vunpack.c.l.b16 %v2117
    %v2316 = vunpack.c.h.b16 %v2117
    %v2317 = vunpack.c.l.b16 %v2118
    %v2318 = vunpack.c.l.b16 %v2119
    %v2319 = vunpack.c.h.b16 %v2119
    %v2320 = vunpack.c.l.b16 %v2120
    %v2321 = vunpack.c.l.b16 %v2121
    %v2322 = vunpack.c.h.b16 %v2121
    %v2323 = vunpack.c.l.b16 %v2122
    %v2324 = vpack.c.b16 %v2279, %v2276
    %v2325 = vpack.c.b16 %v2280, %v2277
    %v2326 = vpack.c.b16 %v2281, %v2278
    %v2327 = vpack.c.b16 %v2285, %v2282
    %v2328 = vpack.c.b16 %v2286, %v2283
    %v2329 = vpack.c.b16 %v2287, %v2284
    %v2330 = vpack.c.b16 %v2291, %v2288
    %v2331 = vpack.c.b16 %v2292, %v2289
    %v2332 = vpack.c.b16 %v2293, %v2290
    %v2333 = vpack.c.b16 %v2297, %v2294
    %v2334 = vpack.c.b16 %v2298, %v2295
    %v2335 = vpack.c.b16 %v2299, %v2296
    %v2336 = vpack.c.b16 %v2303, %v2300
    %v2337 = vpack.c.b16 %v2304, %v2301
    %v2338 = vpack.c.b16 %v2305, %v2302
    %v2339 = vpack.c.b16 %v2309, %v2306
    %v2340 = vpack.c.b16 %v2310, %v2307
    %v2341 = vpack.c.b16 %v2311, %v2308
    %v2342 = vpack.c.b16 %v2315, %v2312
    %v2343 = vpack.c.b16 %v2316, %v2313
    %v2344 = vpack.c.b16 %v2317, %v2314
    %v2345 = vpack.c.b16 %v2321, %v2318
    %v2346 = vpack.c.b16 %v2322, %v2319
    %v2347 = vpack.c.b16 %v2323, %v2320
    %2372 = vmatprep.subr.bf16.mxu0 %v2325
    %2373 = vmatpush1.bf16.msra.mxu0 %v2324
    %2374 = vmatprep.subr.bf16.mxu0 %v2328
    %2375 = vmatpush1.bf16.msra.mxu0 %v2327
    %2376 = vmatprep.subr.bf16.mxu0 %v2331
    %2377 = vmatpush1.bf16.msra.mxu0 %v2330
    %2378 = vmatprep.subr.bf16.mxu0 %v2334
    %2379 = vmatpush1.bf16.msra.mxu0 %v2333
    %2380 = vmatprep.subr.bf16.mxu0 %v2337
    %2381 = vmatpush1.bf16.msra.mxu0 %v2336
    %2382 = vmatprep.subr.bf16.mxu0 %v2340
    %2383 = vmatpush1.bf16.msra.mxu0 %v2339
    %2384 = vmatprep.subr.bf16.mxu0 %v2343
    %2385 = vmatpush1.bf16.msra.mxu0 %v2342
    %2386 = vmatprep.subr.bf16.mxu0 %v2346
    %2387 = vmatpush1.bf16.msra.mxu0 %v2345
    %2388 = vmatprep.subr.bf16.mxu0 0
    %2389 = vmatpush1.bf16.msra.mxu0 0
    %2390 = vmatprep.subr.bf16.mxu0 0
    %2391 = vmatpush1.bf16.msra.mxu0 0
    %2392 = vmatprep.subr.bf16.mxu0 0
    %2393 = vmatpush1.bf16.msra.mxu0 0
    %2394 = vmatprep.subr.bf16.mxu0 0
    %2395 = vmatpush1.bf16.msra.mxu0 0
    %2396 = vmatprep.subr.bf16.mxu0 0
    %2397 = vmatpush1.bf16.msra.mxu0 0
    %2398 = vmatprep.subr.bf16.mxu0 0
    %2399 = vmatpush1.bf16.msra.mxu0 0
    %2400 = vmatprep.subr.bf16.mxu0 0
    %2401 = vmatpush1.bf16.msra.mxu0 0
    %2402 = vmatprep.subr.bf16.mxu0 0
    %2403 = vmatpush1.bf16.msra.mxu0 0
    %2404 = vmatprep.mubr.bf16.mxu0 0
    %2405 = vmatmul.mubr.bf16.gmra.mrb[0].mxu0 %v2243
    %v2406 = vpop.f32.mrb[0].mxu0
    %v2407 = vadd.f32 0.0, %v2406
    %v2408 = vpop.f32.mrb[0].mxu0
    %v2409 = vadd.f32 0.0, %v2408
    %v2410 = vpop.f32.mrb[0].mxu0
    %v2411 = vadd.f32 0.0, %v2410
    %v2412 = vpop.f32.mrb[0].mxu0
    %v2413 = vadd.f32 0.0, %v2412
    %2414 = vdwg.mxu0
    %2415 = vmatprep.subr.bf16.mxu0 0
    %2416 = vmatpush1.bf16.msra.mxu0 %v2326
    %2417 = vmatprep.subr.bf16.mxu0 0
    %2418 = vmatpush1.bf16.msra.mxu0 %v2329
    %2419 = vmatprep.subr.bf16.mxu0 0
    %2420 = vmatpush1.bf16.msra.mxu0 %v2332
    %2421 = vmatprep.subr.bf16.mxu0 0
    %2422 = vmatpush1.bf16.msra.mxu0 %v2335
    %2423 = vmatprep.subr.bf16.mxu0 0
    %2424 = vmatpush1.bf16.msra.mxu0 %v2338
    %2425 = vmatprep.subr.bf16.mxu0 0
    %2426 = vmatpush1.bf16.msra.mxu0 %v2341
    %2427 = vmatprep.subr.bf16.mxu0 0
    %2428 = vmatpush1.bf16.msra.mxu0 %v2344
    %2429 = vmatprep.subr.bf16.mxu0 0
    %2430 = vmatpush1.bf16.msra.mxu0 %v2347
    %2431 = vmatprep.subr.bf16.mxu0 0
    %2432 = vmatpush1.bf16.msra.mxu0 0
    %2433 = vmatprep.subr.bf16.mxu0 0
    %2434 = vmatpush1.bf16.msra.mxu0 0
    %2435 = vmatprep.subr.bf16.mxu0 0
    %2436 = vmatpush1.bf16.msra.mxu0 0
    %2437 = vmatprep.subr.bf16.mxu0 0
    %2438 = vmatpush1.bf16.msra.mxu0 0
    %2439 = vmatprep.subr.bf16.mxu0 0
    %2440 = vmatpush1.bf16.msra.mxu0 0
    %2441 = vmatprep.subr.bf16.mxu0 0
    %2442 = vmatpush1.bf16.msra.mxu0 0
    %2443 = vmatprep.subr.bf16.mxu0 0
    %2444 = vmatpush1.bf16.msra.mxu0 0
    %2445 = vmatprep.subr.bf16.mxu0 0
    %2446 = vmatpush1.bf16.msra.mxu0 0
    %2447 = vmatprep.mubr.bf16.mxu0 0
    %2448 = vmatmul.mubr.bf16.gmra.mrb[0].mxu0 %v2243
    %v2449 = vpop.f32.mrb[0].mxu0
    %v2450 = vadd.f32 0.0, %v2449
    %v2451 = vpop.f32.mrb[0].mxu0
    %v2452 = vpop.f32.mrb[0].mxu0
    %v2453 = vadd.f32 0.0, %v2452
    %v2454 = vpop.f32.mrb[0].mxu0
    %2455 = vdwg.mxu0
    %v2456 = vlaneseq
    %v2457 = vshrl.u32 %v2456, 7
    %v2458 = vsub.s32 0, %v2457
    %v2459 = vrot.slane %v2241, %v2458
    %v2460 = vadd.f32 %v2407, %v2459
    %v2461 = vadd.f32 %v2411, %v2459
    %v2462 = vpack.c.bf16 %v2460, %v2460
    %v2463 = vpack.c.bf16 %v2461, %v2461
    %v2464 = vlaneseq
    %v2465 = vshrl.u32 %v2464, 7
    %v2466 = vsub.s32 1, %v2465
    %v2467 = vrot.slane %v2241, %v2466
    %v2468 = vadd.f32 %v2409, %v2467
    %v2469 = vadd.f32 %v2413, %v2467
    %v2470 = vpack.c.bf16 %v2468, %v2468
    %v2471 = vpack.c.bf16 %v2469, %v2469
    %v2472 = vlaneseq
    %v2473 = vshrl.u32 %v2472, 7
    %v2474 = vsub.s32 2, %v2473
    %v2475 = vrot.slane %v2241, %v2474
    %v2476 = vadd.f32 %v2450, %v2475
    %v2477 = vadd.f32 %v2453, %v2475
    %v2478 = vpack.c.bf16 %v2476, %v2476
    %v2479 = vpack.c.bf16 %v2477, %v2477
    %v2481 = vsel %vm456, %v2462, 0
    %v2484 = vsel %vm456, %v2470, 0
    %2486 = vmatprep.subr.bf16.mxu0 0
    %2487 = vmatpush1.bf16.xpose.msra.mxu0 %v2484
    %2488 = vmatprep.subr.bf16.mxu0 0
    %2489 = vmatpush1.bf16.xpose.msra.mxu0 0
    %2490 = vmatprep.subr.bf16.mxu0 0
    %2491 = vmatpush1.bf16.xpose.msra.mxu0 0
    %2492 = vmatprep.subr.bf16.mxu0 0
    %2493 = vmatpush1.bf16.xpose.msra.mxu0 0
    %2494 = vmatprep.subr.bf16.mxu0 0
    %2495 = vmatpush1.bf16.xpose.msra.mxu0 0
    %2496 = vmatprep.subr.bf16.mxu0 0
    %2497 = vmatpush1.bf16.xpose.msra.mxu0 0
    %2498 = vmatprep.subr.bf16.mxu0 0
    %2499 = vmatpush1.bf16.xpose.msra.mxu0 0
    %2500 = vmatprep.subr.bf16.mxu0 0
    %2501 = vmatpush1.bf16.xpose.msra.mxu0 0
    %2502 = vmatprep.subr.bf16.mxu0 0
    %2503 = vmatpush1.bf16.xpose.msra.mxu0 0
    %2504 = vmatprep.subr.bf16.mxu0 0
    %2505 = vmatpush1.bf16.xpose.msra.mxu0 0
    %2506 = vmatprep.subr.bf16.mxu0 0
    %2507 = vmatpush1.bf16.xpose.msra.mxu0 0
    %2508 = vmatprep.subr.bf16.mxu0 0
    %2509 = vmatpush1.bf16.xpose.msra.mxu0 0
    %2510 = vmatprep.subr.bf16.mxu0 0
    %2511 = vmatpush1.bf16.xpose.msra.mxu0 0
    %2512 = vmatprep.subr.bf16.mxu0 0
    %2513 = vmatpush1.bf16.xpose.msra.mxu0 0
    %2514 = vmatprep.subr.bf16.mxu0 0
    %2515 = vmatpush1.bf16.xpose.msra.mxu0 0
    %2516 = vmatprep.subr.bf16.mxu0 0
    %2517 = vmatpush1.bf16.xpose.msra.mxu0 0
    %2518 = vmatprep.mubr.bf16.mxu0 0
    %2519 = vmatmul.mubr.bf16.gmra.mrb[0].mxu0 %v2481
    %v2520 = vpop.f32.mrb[0].mxu0
    %v2521 = vadd.f32 0.0, %v2520
    %v2522 = vpop.f32.mrb[0].mxu0
    %v2523 = vpop.f32.mrb[0].mxu0
    %v2524 = vpop.f32.mrb[0].mxu0
    %2525 = vdwg.mxu0
    %v2527 = vsel %vm456, %v2463, 0
    %v2530 = vsel %vm456, %v2471, 0
    %2532 = vmatprep.subr.bf16.mxu0 0
    %2533 = vmatpush1.bf16.xpose.msra.mxu0 %v2530
    %2534 = vmatprep.subr.bf16.mxu0 0
    %2535 = vmatpush1.bf16.xpose.msra.mxu0 0
    %2536 = vmatprep.subr.bf16.mxu0 0
    %2537 = vmatpush1.bf16.xpose.msra.mxu0 0
    %2538 = vmatprep.subr.bf16.mxu0 0
    %2539 = vmatpush1.bf16.xpose.msra.mxu0 0
    %2540 = vmatprep.subr.bf16.mxu0 0
    %2541 = vmatpush1.bf16.xpose.msra.mxu0 0
    %2542 = vmatprep.subr.bf16.mxu0 0
    %2543 = vmatpush1.bf16.xpose.msra.mxu0 0
    %2544 = vmatprep.subr.bf16.mxu0 0
    %2545 = vmatpush1.bf16.xpose.msra.mxu0 0
    %2546 = vmatprep.subr.bf16.mxu0 0
    %2547 = vmatpush1.bf16.xpose.msra.mxu0 0
    %2548 = vmatprep.subr.bf16.mxu0 0
    %2549 = vmatpush1.bf16.xpose.msra.mxu0 0
    %2550 = vmatprep.subr.bf16.mxu0 0
    %2551 = vmatpush1.bf16.xpose.msra.mxu0 0
    %2552 = vmatprep.subr.bf16.mxu0 0
    %2553 = vmatpush1.bf16.xpose.msra.mxu0 0
    %2554 = vmatprep.subr.bf16.mxu0 0
    %2555 = vmatpush1.bf16.xpose.msra.mxu0 0
    %2556 = vmatprep.subr.bf16.mxu0 0
    %2557 = vmatpush1.bf16.xpose.msra.mxu0 0
    %2558 = vmatprep.subr.bf16.mxu0 0
    %2559 = vmatpush1.bf16.xpose.msra.mxu0 0
    %2560 = vmatprep.subr.bf16.mxu0 0
    %2561 = vmatpush1.bf16.xpose.msra.mxu0 0
    %2562 = vmatprep.subr.bf16.mxu0 0
    %2563 = vmatpush1.bf16.xpose.msra.mxu0 0
    %2564 = vmatprep.mubr.bf16.mxu0 0
    %2565 = vmatmul.mubr.bf16.gmra.mrb[0].mxu0 %v2527
    %v2566 = vpop.f32.mrb[0].mxu0
    %v2567 = vadd.f32 0.0, %v2566
    %v2568 = vpop.f32.mrb[0].mxu0
    %v2569 = vpop.f32.mrb[0].mxu0
    %v2570 = vpop.f32.mrb[0].mxu0
    %2571 = vdwg.mxu0
    %v2572 = vsel %vm549, %v2521, -inf
    %2573 = vmax.xlane.f32.xlu0 %v2572
    %v2574 = vpop.xlane.xlu0 %2573
    %v2575 = vsel %vm549, %v2567, -inf
    %2576 = vmax.xlane.f32.xlu0 %v2575
    %v2577 = vpop.xlane.xlu0 %2576
    %v2578 = vsub.f32 %v2521, %v2574
    %v2579 = vsub.f32 %v2567, %v2577
    %v2580 = vmul.f32 %v2578, 1.442695
    %v2581 = vpow.pop %v2580
    %v2582 = vmul.f32 %v2579, 1.442695
    %v2583 = vpow.pop %v2582
    %v2584 = vsel %vm549, %v2581, 0.0
    %2585 = vadd.xlane.f32.xlu0 %v2584
    %v2586 = vpop.xlane.xlu0 %2585
    %v2587 = vsel %vm549, %v2583, 0.0
    %2588 = vadd.xlane.f32.xlu0 %v2587
    %v2589 = vpop.xlane.xlu0 %2588
    %v2590 = vrcp.pop %v2586
    %v2591 = vrcp.pop %v2589
    %v2592 = vmul.f32 %v2581, %v2590
    %v2593 = vmul.f32 %v2583, %v2591
    %v2594 = vpack.c.bf16 %v2592, %v2592
    %v2595 = vpack.c.bf16 %v2593, %v2593
    %v2597 = vsel %vm549, %v2594, 0
    %v2600 = vsel %vm577, %v2478, 0
    %2602 = vmatprep.subr.bf16.mxu0 0
    %2603 = vmatpush1.bf16.msra.mxu0 %v2600
    %2604 = vmatprep.subr.bf16.mxu0 0
    %2605 = vmatpush1.bf16.msra.mxu0 0
    %2606 = vmatprep.subr.bf16.mxu0 0
    %2607 = vmatpush1.bf16.msra.mxu0 0
    %2608 = vmatprep.subr.bf16.mxu0 0
    %2609 = vmatpush1.bf16.msra.mxu0 0
    %2610 = vmatprep.subr.bf16.mxu0 0
    %2611 = vmatpush1.bf16.msra.mxu0 0
    %2612 = vmatprep.subr.bf16.mxu0 0
    %2613 = vmatpush1.bf16.msra.mxu0 0
    %2614 = vmatprep.subr.bf16.mxu0 0
    %2615 = vmatpush1.bf16.msra.mxu0 0
    %2616 = vmatprep.subr.bf16.mxu0 0
    %2617 = vmatpush1.bf16.msra.mxu0 0
    %2618 = vmatprep.subr.bf16.mxu0 0
    %2619 = vmatpush1.bf16.msra.mxu0 0
    %2620 = vmatprep.subr.bf16.mxu0 0
    %2621 = vmatpush1.bf16.msra.mxu0 0
    %2622 = vmatprep.subr.bf16.mxu0 0
    %2623 = vmatpush1.bf16.msra.mxu0 0
    %2624 = vmatprep.subr.bf16.mxu0 0
    %2625 = vmatpush1.bf16.msra.mxu0 0
    %2626 = vmatprep.subr.bf16.mxu0 0
    %2627 = vmatpush1.bf16.msra.mxu0 0
    %2628 = vmatprep.subr.bf16.mxu0 0
    %2629 = vmatpush1.bf16.msra.mxu0 0
    %2630 = vmatprep.subr.bf16.mxu0 0
    %2631 = vmatpush1.bf16.msra.mxu0 0
    %2632 = vmatprep.subr.bf16.mxu0 0
    %2633 = vmatpush1.bf16.msra.mxu0 0
    %2634 = vmatprep.mubr.bf16.mxu0 0
    %2635 = vmatmul.mubr.bf16.gmra.mrb[0].mxu0 %v2597
    %v2636 = vpop.f32.mrb[0].mxu0
    %v2637 = vadd.f32 0.0, %v2636
    %v2638 = vpop.f32.mrb[0].mxu0
    %v2639 = vpop.f32.mrb[0].mxu0
    %v2640 = vpop.f32.mrb[0].mxu0
    %2641 = vdwg.mxu0
    %v2643 = vsel %vm549, %v2595, 0
    %v2646 = vsel %vm577, %v2479, 0
    %2648 = vmatprep.subr.bf16.mxu0 0
    %2649 = vmatpush1.bf16.msra.mxu0 %v2646
    %2650 = vmatprep.subr.bf16.mxu0 0
    %2651 = vmatpush1.bf16.msra.mxu0 0
    %2652 = vmatprep.subr.bf16.mxu0 0
    %2653 = vmatpush1.bf16.msra.mxu0 0
    %2654 = vmatprep.subr.bf16.mxu0 0
    %2655 = vmatpush1.bf16.msra.mxu0 0
    %2656 = vmatprep.subr.bf16.mxu0 0
    %2657 = vmatpush1.bf16.msra.mxu0 0
    %2658 = vmatprep.subr.bf16.mxu0 0
    %2659 = vmatpush1.bf16.msra.mxu0 0
    %2660 = vmatprep.subr.bf16.mxu0 0
    %2661 = vmatpush1.bf16.msra.mxu0 0
    %2662 = vmatprep.subr.bf16.mxu0 0
    %2663 = vmatpush1.bf16.msra.mxu0 0
    %2664 = vmatprep.subr.bf16.mxu0 0
    %2665 = vmatpush1.bf16.msra.mxu0 0
    %2666 = vmatprep.subr.bf16.mxu0 0
    %2667 = vmatpush1.bf16.msra.mxu0 0
    %2668 = vmatprep.subr.bf16.mxu0 0
    %2669 = vmatpush1.bf16.msra.mxu0 0
    %2670 = vmatprep.subr.bf16.mxu0 0
    %2671 = vmatpush1.bf16.msra.mxu0 0
    %2672 = vmatprep.subr.bf16.mxu0 0
    %2673 = vmatpush1.bf16.msra.mxu0 0
    %2674 = vmatprep.subr.bf16.mxu0 0
    %2675 = vmatpush1.bf16.msra.mxu0 0
    %2676 = vmatprep.subr.bf16.mxu0 0
    %2677 = vmatpush1.bf16.msra.mxu0 0
    %2678 = vmatprep.subr.bf16.mxu0 0
    %2679 = vmatpush1.bf16.msra.mxu0 0
    %2680 = vmatprep.mubr.bf16.mxu0 0
    %2681 = vmatmul.mubr.bf16.gmra.mrb[0].mxu0 %v2643
    %v2682 = vpop.f32.mrb[0].mxu0
    %v2683 = vadd.f32 0.0, %v2682
    %v2684 = vpop.f32.mrb[0].mxu0
    %v2685 = vpop.f32.mrb[0].mxu0
    %v2686 = vpop.f32.mrb[0].mxu0
    %2687 = vdwg.mxu0
    %2689 = vrot.lane.b32.xlu0 %v2462, 96
    %v2690 = vpop.permute.xlu0 %2689
    %2692 = vrot.lane.b32.xlu0 %v2470, 96
    %v2693 = vpop.permute.xlu0 %2692
    %v2695 = vsel %vm456, %v2690, 0
    %v2698 = vsel %vm456, %v2693, 0
    %2700 = vmatprep.subr.bf16.mxu0 0
    %2701 = vmatpush1.bf16.xpose.msra.mxu0 %v2698
    %2702 = vmatprep.subr.bf16.mxu0 0
    %2703 = vmatpush1.bf16.xpose.msra.mxu0 0
    %2704 = vmatprep.subr.bf16.mxu0 0
    %2705 = vmatpush1.bf16.xpose.msra.mxu0 0
    %2706 = vmatprep.subr.bf16.mxu0 0
    %2707 = vmatpush1.bf16.xpose.msra.mxu0 0
    %2708 = vmatprep.subr.bf16.mxu0 0
    %2709 = vmatpush1.bf16.xpose.msra.mxu0 0
    %2710 = vmatprep.subr.bf16.mxu0 0
    %2711 = vmatpush1.bf16.xpose.msra.mxu0 0
    %2712 = vmatprep.subr.bf16.mxu0 0
    %2713 = vmatpush1.bf16.xpose.msra.mxu0 0
    %2714 = vmatprep.subr.bf16.mxu0 0
    %2715 = vmatpush1.bf16.xpose.msra.mxu0 0
    %2716 = vmatprep.subr.bf16.mxu0 0
    %2717 = vmatpush1.bf16.xpose.msra.mxu0 0
    %2718 = vmatprep.subr.bf16.mxu0 0
    %2719 = vmatpush1.bf16.xpose.msra.mxu0 0
    %2720 = vmatprep.subr.bf16.mxu0 0
    %2721 = vmatpush1.bf16.xpose.msra.mxu0 0
    %2722 = vmatprep.subr.bf16.mxu0 0
    %2723 = vmatpush1.bf16.xpose.msra.mxu0 0
    %2724 = vmatprep.subr.bf16.mxu0 0
    %2725 = vmatpush1.bf16.xpose.msra.mxu0 0
    %2726 = vmatprep.subr.bf16.mxu0 0
    %2727 = vmatpush1.bf16.xpose.msra.mxu0 0
    %2728 = vmatprep.subr.bf16.mxu0 0
    %2729 = vmatpush1.bf16.xpose.msra.mxu0 0
    %2730 = vmatprep.subr.bf16.mxu0 0
    %2731 = vmatpush1.bf16.xpose.msra.mxu0 0
    %2732 = vmatprep.mubr.bf16.mxu0 0
    %2733 = vmatmul.mubr.bf16.gmra.mrb[0].mxu0 %v2695
    %v2734 = vpop.f32.mrb[0].mxu0
    %v2735 = vadd.f32 0.0, %v2734
    %v2736 = vpop.f32.mrb[0].mxu0
    %v2737 = vpop.f32.mrb[0].mxu0
    %v2738 = vpop.f32.mrb[0].mxu0
    %2739 = vdwg.mxu0
    %2741 = vrot.lane.b32.xlu0 %v2463, 96
    %v2742 = vpop.permute.xlu0 %2741
    %2744 = vrot.lane.b32.xlu0 %v2471, 96
    %v2745 = vpop.permute.xlu0 %2744
    %v2747 = vsel %vm456, %v2742, 0
    %v2750 = vsel %vm456, %v2745, 0
    %2752 = vmatprep.subr.bf16.mxu0 0
    %2753 = vmatpush1.bf16.xpose.msra.mxu0 %v2750
    %2754 = vmatprep.subr.bf16.mxu0 0
    %2755 = vmatpush1.bf16.xpose.msra.mxu0 0
    %2756 = vmatprep.subr.bf16.mxu0 0
    %2757 = vmatpush1.bf16.xpose.msra.mxu0 0
    %2758 = vmatprep.subr.bf16.mxu0 0
    %2759 = vmatpush1.bf16.xpose.msra.mxu0 0
    %2760 = vmatprep.subr.bf16.mxu0 0
    %2761 = vmatpush1.bf16.xpose.msra.mxu0 0
    %2762 = vmatprep.subr.bf16.mxu0 0
    %2763 = vmatpush1.bf16.xpose.msra.mxu0 0
    %2764 = vmatprep.subr.bf16.mxu0 0
    %2765 = vmatpush1.bf16.xpose.msra.mxu0 0
    %2766 = vmatprep.subr.bf16.mxu0 0
    %2767 = vmatpush1.bf16.xpose.msra.mxu0 0
    %2768 = vmatprep.subr.bf16.mxu0 0
    %2769 = vmatpush1.bf16.xpose.msra.mxu0 0
    %2770 = vmatprep.subr.bf16.mxu0 0
    %2771 = vmatpush1.bf16.xpose.msra.mxu0 0
    %2772 = vmatprep.subr.bf16.mxu0 0
    %2773 = vmatpush1.bf16.xpose.msra.mxu0 0
    %2774 = vmatprep.subr.bf16.mxu0 0
    %2775 = vmatpush1.bf16.xpose.msra.mxu0 0
    %2776 = vmatprep.subr.bf16.mxu0 0
    %2777 = vmatpush1.bf16.xpose.msra.mxu0 0
    %2778 = vmatprep.subr.bf16.mxu0 0
    %2779 = vmatpush1.bf16.xpose.msra.mxu0 0
    %2780 = vmatprep.subr.bf16.mxu0 0
    %2781 = vmatpush1.bf16.xpose.msra.mxu0 0
    %2782 = vmatprep.subr.bf16.mxu0 0
    %2783 = vmatpush1.bf16.xpose.msra.mxu0 0
    %2784 = vmatprep.mubr.bf16.mxu0 0
    %2785 = vmatmul.mubr.bf16.gmra.mrb[0].mxu0 %v2747
    %v2786 = vpop.f32.mrb[0].mxu0
    %v2787 = vadd.f32 0.0, %v2786
    %v2788 = vpop.f32.mrb[0].mxu0
    %v2789 = vpop.f32.mrb[0].mxu0
    %v2790 = vpop.f32.mrb[0].mxu0
    %2791 = vdwg.mxu0
    %v2792 = vsel %vm549, %v2735, -inf
    %2793 = vmax.xlane.f32.xlu0 %v2792
    %v2794 = vpop.xlane.xlu0 %2793
    %v2795 = vsel %vm549, %v2787, -inf
    %2796 = vmax.xlane.f32.xlu0 %v2795
    %v2797 = vpop.xlane.xlu0 %2796
    %v2798 = vsub.f32 %v2735, %v2794
    %v2799 = vsub.f32 %v2787, %v2797
    %v2800 = vmul.f32 %v2798, 1.442695
    %v2801 = vpow.pop %v2800
    %v2802 = vmul.f32 %v2799, 1.442695
    %v2803 = vpow.pop %v2802
    %v2804 = vsel %vm549, %v2801, 0.0
    %2805 = vadd.xlane.f32.xlu0 %v2804
    %v2806 = vpop.xlane.xlu0 %2805
    %v2807 = vsel %vm549, %v2803, 0.0
    %2808 = vadd.xlane.f32.xlu0 %v2807
    %v2809 = vpop.xlane.xlu0 %2808
    %v2810 = vrcp.pop %v2806
    %v2811 = vrcp.pop %v2809
    %v2812 = vmul.f32 %v2801, %v2810
    %v2813 = vmul.f32 %v2803, %v2811
    %v2814 = vpack.c.bf16 %v2812, %v2812
    %v2815 = vpack.c.bf16 %v2813, %v2813
    %2817 = vrot.lane.b32.xlu0 %v2478, 96
    %v2818 = vpop.permute.xlu0 %2817
    %v2820 = vsel %vm549, %v2814, 0
    %v2823 = vsel %vm577, %v2818, 0
    %2825 = vmatprep.subr.bf16.mxu0 0
    %2826 = vmatpush1.bf16.msra.mxu0 %v2823
    %2827 = vmatprep.subr.bf16.mxu0 0
    %2828 = vmatpush1.bf16.msra.mxu0 0
    %2829 = vmatprep.subr.bf16.mxu0 0
    %2830 = vmatpush1.bf16.msra.mxu0 0
    %2831 = vmatprep.subr.bf16.mxu0 0
    %2832 = vmatpush1.bf16.msra.mxu0 0
    %2833 = vmatprep.subr.bf16.mxu0 0
    %2834 = vmatpush1.bf16.msra.mxu0 0
    %2835 = vmatprep.subr.bf16.mxu0 0
    %2836 = vmatpush1.bf16.msra.mxu0 0
    %2837 = vmatprep.subr.bf16.mxu0 0
    %2838 = vmatpush1.bf16.msra.mxu0 0
    %2839 = vmatprep.subr.bf16.mxu0 0
    %2840 = vmatpush1.bf16.msra.mxu0 0
    %2841 = vmatprep.subr.bf16.mxu0 0
    %2842 = vmatpush1.bf16.msra.mxu0 0
    %2843 = vmatprep.subr.bf16.mxu0 0
    %2844 = vmatpush1.bf16.msra.mxu0 0
    %2845 = vmatprep.subr.bf16.mxu0 0
    %2846 = vmatpush1.bf16.msra.mxu0 0
    %2847 = vmatprep.subr.bf16.mxu0 0
    %2848 = vmatpush1.bf16.msra.mxu0 0
    %2849 = vmatprep.subr.bf16.mxu0 0
    %2850 = vmatpush1.bf16.msra.mxu0 0
    %2851 = vmatprep.subr.bf16.mxu0 0
    %2852 = vmatpush1.bf16.msra.mxu0 0
    %2853 = vmatprep.subr.bf16.mxu0 0
    %2854 = vmatpush1.bf16.msra.mxu0 0
    %2855 = vmatprep.subr.bf16.mxu0 0
    %2856 = vmatpush1.bf16.msra.mxu0 0
    %2857 = vmatprep.mubr.bf16.mxu0 0
    %2858 = vmatmul.mubr.bf16.gmra.mrb[0].mxu0 %v2820
    %v2859 = vpop.f32.mrb[0].mxu0
    %v2860 = vadd.f32 0.0, %v2859
    %v2861 = vpop.f32.mrb[0].mxu0
    %v2862 = vpop.f32.mrb[0].mxu0
    %v2863 = vpop.f32.mrb[0].mxu0
    %2864 = vdwg.mxu0
    %2866 = vrot.lane.b32.xlu0 %v2479, 96
    %v2867 = vpop.permute.xlu0 %2866
    %v2869 = vsel %vm549, %v2815, 0
    %v2872 = vsel %vm577, %v2867, 0
    %2874 = vmatprep.subr.bf16.mxu0 0
    %2875 = vmatpush1.bf16.msra.mxu0 %v2872
    %2876 = vmatprep.subr.bf16.mxu0 0
    %2877 = vmatpush1.bf16.msra.mxu0 0
    %2878 = vmatprep.subr.bf16.mxu0 0
    %2879 = vmatpush1.bf16.msra.mxu0 0
    %2880 = vmatprep.subr.bf16.mxu0 0
    %2881 = vmatpush1.bf16.msra.mxu0 0
    %2882 = vmatprep.subr.bf16.mxu0 0
    %2883 = vmatpush1.bf16.msra.mxu0 0
    %2884 = vmatprep.subr.bf16.mxu0 0
    %2885 = vmatpush1.bf16.msra.mxu0 0
    %2886 = vmatprep.subr.bf16.mxu0 0
    %2887 = vmatpush1.bf16.msra.mxu0 0
    %2888 = vmatprep.subr.bf16.mxu0 0
    %2889 = vmatpush1.bf16.msra.mxu0 0
    %2890 = vmatprep.subr.bf16.mxu0 0
    %2891 = vmatpush1.bf16.msra.mxu0 0
    %2892 = vmatprep.subr.bf16.mxu0 0
    %2893 = vmatpush1.bf16.msra.mxu0 0
    %2894 = vmatprep.subr.bf16.mxu0 0
    %2895 = vmatpush1.bf16.msra.mxu0 0
    %2896 = vmatprep.subr.bf16.mxu0 0
    %2897 = vmatpush1.bf16.msra.mxu0 0
    %2898 = vmatprep.subr.bf16.mxu0 0
    %2899 = vmatpush1.bf16.msra.mxu0 0
    %2900 = vmatprep.subr.bf16.mxu0 0
    %2901 = vmatpush1.bf16.msra.mxu0 0
    %2902 = vmatprep.subr.bf16.mxu0 0
    %2903 = vmatpush1.bf16.msra.mxu0 0
    %2904 = vmatprep.subr.bf16.mxu0 0
    %2905 = vmatpush1.bf16.msra.mxu0 0
    %2906 = vmatprep.mubr.bf16.mxu0 0
    %2907 = vmatmul.mubr.bf16.gmra.mrb[0].mxu0 %v2869
    %v2908 = vpop.f32.mrb[0].mxu0
    %v2909 = vadd.f32 0.0, %v2908
    %v2910 = vpop.f32.mrb[0].mxu0
    %v2911 = vpop.f32.mrb[0].mxu0
    %v2912 = vpop.f32.mrb[0].mxu0
    %2913 = vdwg.mxu0
    %2914 = vrot.lane.b32.xlu0 %v2462, 64
    %v2915 = vpop.permute.xlu0 %2914
    %2916 = vrot.lane.b32.xlu0 %v2470, 64
    %v2917 = vpop.permute.xlu0 %2916
    %v2919 = vsel %vm456, %v2915, 0
    %v2922 = vsel %vm456, %v2917, 0
    %2924 = vmatprep.subr.bf16.mxu0 0
    %2925 = vmatpush1.bf16.xpose.msra.mxu0 %v2922
    %2926 = vmatprep.subr.bf16.mxu0 0
    %2927 = vmatpush1.bf16.xpose.msra.mxu0 0
    %2928 = vmatprep.subr.bf16.mxu0 0
    %2929 = vmatpush1.bf16.xpose.msra.mxu0 0
    %2930 = vmatprep.subr.bf16.mxu0 0
    %2931 = vmatpush1.bf16.xpose.msra.mxu0 0
    %2932 = vmatprep.subr.bf16.mxu0 0
    %2933 = vmatpush1.bf16.xpose.msra.mxu0 0
    %2934 = vmatprep.subr.bf16.mxu0 0
    %2935 = vmatpush1.bf16.xpose.msra.mxu0 0
    %2936 = vmatprep.subr.bf16.mxu0 0
    %2937 = vmatpush1.bf16.xpose.msra.mxu0 0
    %2938 = vmatprep.subr.bf16.mxu0 0
    %2939 = vmatpush1.bf16.xpose.msra.mxu0 0
    %2940 = vmatprep.subr.bf16.mxu0 0
    %2941 = vmatpush1.bf16.xpose.msra.mxu0 0
    %2942 = vmatprep.subr.bf16.mxu0 0
    %2943 = vmatpush1.bf16.xpose.msra.mxu0 0
    %2944 = vmatprep.subr.bf16.mxu0 0
    %2945 = vmatpush1.bf16.xpose.msra.mxu0 0
    %2946 = vmatprep.subr.bf16.mxu0 0
    %2947 = vmatpush1.bf16.xpose.msra.mxu0 0
    %2948 = vmatprep.subr.bf16.mxu0 0
    %2949 = vmatpush1.bf16.xpose.msra.mxu0 0
    %2950 = vmatprep.subr.bf16.mxu0 0
    %2951 = vmatpush1.bf16.xpose.msra.mxu0 0
    %2952 = vmatprep.subr.bf16.mxu0 0
    %2953 = vmatpush1.bf16.xpose.msra.mxu0 0
    %2954 = vmatprep.subr.bf16.mxu0 0
    %2955 = vmatpush1.bf16.xpose.msra.mxu0 0
    %2956 = vmatprep.mubr.bf16.mxu0 0
    %2957 = vmatmul.mubr.bf16.gmra.mrb[0].mxu0 %v2919
    %v2958 = vpop.f32.mrb[0].mxu0
    %v2959 = vadd.f32 0.0, %v2958
    %v2960 = vpop.f32.mrb[0].mxu0
    %v2961 = vpop.f32.mrb[0].mxu0
    %v2962 = vpop.f32.mrb[0].mxu0
    %2963 = vdwg.mxu0
    %2964 = vrot.lane.b32.xlu0 %v2463, 64
    %v2965 = vpop.permute.xlu0 %2964
    %2966 = vrot.lane.b32.xlu0 %v2471, 64
    %v2967 = vpop.permute.xlu0 %2966
    %v2969 = vsel %vm456, %v2965, 0
    %v2972 = vsel %vm456, %v2967, 0
    %2974 = vmatprep.subr.bf16.mxu0 0
    %2975 = vmatpush1.bf16.xpose.msra.mxu0 %v2972
    %2976 = vmatprep.subr.bf16.mxu0 0
    %2977 = vmatpush1.bf16.xpose.msra.mxu0 0
    %2978 = vmatprep.subr.bf16.mxu0 0
    %2979 = vmatpush1.bf16.xpose.msra.mxu0 0
    %2980 = vmatprep.subr.bf16.mxu0 0
    %2981 = vmatpush1.bf16.xpose.msra.mxu0 0
    %2982 = vmatprep.subr.bf16.mxu0 0
    %2983 = vmatpush1.bf16.xpose.msra.mxu0 0
    %2984 = vmatprep.subr.bf16.mxu0 0
    %2985 = vmatpush1.bf16.xpose.msra.mxu0 0
    %2986 = vmatprep.subr.bf16.mxu0 0
    %2987 = vmatpush1.bf16.xpose.msra.mxu0 0
    %2988 = vmatprep.subr.bf16.mxu0 0
    %2989 = vmatpush1.bf16.xpose.msra.mxu0 0
    %2990 = vmatprep.subr.bf16.mxu0 0
    %2991 = vmatpush1.bf16.xpose.msra.mxu0 0
    %2992 = vmatprep.subr.bf16.mxu0 0
    %2993 = vmatpush1.bf16.xpose.msra.mxu0 0
    %2994 = vmatprep.subr.bf16.mxu0 0
    %2995 = vmatpush1.bf16.xpose.msra.mxu0 0
    %2996 = vmatprep.subr.bf16.mxu0 0
    %2997 = vmatpush1.bf16.xpose.msra.mxu0 0
    %2998 = vmatprep.subr.bf16.mxu0 0
    %2999 = vmatpush1.bf16.xpose.msra.mxu0 0
    %3000 = vmatprep.subr.bf16.mxu0 0
    %3001 = vmatpush1.bf16.xpose.msra.mxu0 0
    %3002 = vmatprep.subr.bf16.mxu0 0
    %3003 = vmatpush1.bf16.xpose.msra.mxu0 0
    %3004 = vmatprep.subr.bf16.mxu0 0
    %3005 = vmatpush1.bf16.xpose.msra.mxu0 0
    %3006 = vmatprep.mubr.bf16.mxu0 0
    %3007 = vmatmul.mubr.bf16.gmra.mrb[0].mxu0 %v2969
    %v3008 = vpop.f32.mrb[0].mxu0
    %v3009 = vadd.f32 0.0, %v3008
    %v3010 = vpop.f32.mrb[0].mxu0
    %v3011 = vpop.f32.mrb[0].mxu0
    %v3012 = vpop.f32.mrb[0].mxu0
    %3013 = vdwg.mxu0
    %v3014 = vsel %vm549, %v2959, -inf
    %3015 = vmax.xlane.f32.xlu0 %v3014
    %v3016 = vpop.xlane.xlu0 %3015
    %v3017 = vsel %vm549, %v3009, -inf
    %3018 = vmax.xlane.f32.xlu0 %v3017
    %v3019 = vpop.xlane.xlu0 %3018
    %v3020 = vsub.f32 %v2959, %v3016
    %v3021 = vsub.f32 %v3009, %v3019
    %v3022 = vmul.f32 %v3020, 1.442695
    %v3023 = vpow.pop %v3022
    %v3024 = vmul.f32 %v3021, 1.442695
    %v3025 = vpow.pop %v3024
    %v3026 = vsel %vm549, %v3023, 0.0
    %3027 = vadd.xlane.f32.xlu0 %v3026
    %v3028 = vpop.xlane.xlu0 %3027
    %v3029 = vsel %vm549, %v3025, 0.0
    %3030 = vadd.xlane.f32.xlu0 %v3029
    %v3031 = vpop.xlane.xlu0 %3030
    %v3032 = vrcp.pop %v3028
    %v3033 = vrcp.pop %v3031
    %v3034 = vmul.f32 %v3023, %v3032
    %v3035 = vmul.f32 %v3025, %v3033
    %v3036 = vpack.c.bf16 %v3034, %v3034
    %v3037 = vpack.c.bf16 %v3035, %v3035
    %3038 = vrot.lane.b32.xlu0 %v2478, 64
    %v3039 = vpop.permute.xlu0 %3038
    %v3041 = vsel %vm549, %v3036, 0
    %v3044 = vsel %vm577, %v3039, 0
    %3046 = vmatprep.subr.bf16.mxu0 0
    %3047 = vmatpush1.bf16.msra.mxu0 %v3044
    %3048 = vmatprep.subr.bf16.mxu0 0
    %3049 = vmatpush1.bf16.msra.mxu0 0
    %3050 = vmatprep.subr.bf16.mxu0 0
    %3051 = vmatpush1.bf16.msra.mxu0 0
    %3052 = vmatprep.subr.bf16.mxu0 0
    %3053 = vmatpush1.bf16.msra.mxu0 0
    %3054 = vmatprep.subr.bf16.mxu0 0
    %3055 = vmatpush1.bf16.msra.mxu0 0
    %3056 = vmatprep.subr.bf16.mxu0 0
    %3057 = vmatpush1.bf16.msra.mxu0 0
    %3058 = vmatprep.subr.bf16.mxu0 0
    %3059 = vmatpush1.bf16.msra.mxu0 0
    %3060 = vmatprep.subr.bf16.mxu0 0
    %3061 = vmatpush1.bf16.msra.mxu0 0
    %3062 = vmatprep.subr.bf16.mxu0 0
    %3063 = vmatpush1.bf16.msra.mxu0 0
    %3064 = vmatprep.subr.bf16.mxu0 0
    %3065 = vmatpush1.bf16.msra.mxu0 0
    %3066 = vmatprep.subr.bf16.mxu0 0
    %3067 = vmatpush1.bf16.msra.mxu0 0
    %3068 = vmatprep.subr.bf16.mxu0 0
    %3069 = vmatpush1.bf16.msra.mxu0 0
    %3070 = vmatprep.subr.bf16.mxu0 0
    %3071 = vmatpush1.bf16.msra.mxu0 0
    %3072 = vmatprep.subr.bf16.mxu0 0
    %3073 = vmatpush1.bf16.msra.mxu0 0
    %3074 = vmatprep.subr.bf16.mxu0 0
    %3075 = vmatpush1.bf16.msra.mxu0 0
    %3076 = vmatprep.subr.bf16.mxu0 0
    %3077 = vmatpush1.bf16.msra.mxu0 0
    %3078 = vmatprep.mubr.bf16.mxu0 0
    %3079 = vmatmul.mubr.bf16.gmra.mrb[0].mxu0 %v3041
    %v3080 = vpop.f32.mrb[0].mxu0
    %v3081 = vadd.f32 0.0, %v3080
    %v3082 = vpop.f32.mrb[0].mxu0
    %v3083 = vpop.f32.mrb[0].mxu0
    %v3084 = vpop.f32.mrb[0].mxu0
    %3085 = vdwg.mxu0
    %3086 = vrot.lane.b32.xlu0 %v2479, 64
    %v3087 = vpop.permute.xlu0 %3086
    %v3089 = vsel %vm549, %v3037, 0
    %v3092 = vsel %vm577, %v3087, 0
    %3094 = vmatprep.subr.bf16.mxu0 0
    %3095 = vmatpush1.bf16.msra.mxu0 %v3092
    %3096 = vmatprep.subr.bf16.mxu0 0
    %3097 = vmatpush1.bf16.msra.mxu0 0
    %3098 = vmatprep.subr.bf16.mxu0 0
    %3099 = vmatpush1.bf16.msra.mxu0 0
    %3100 = vmatprep.subr.bf16.mxu0 0
    %3101 = vmatpush1.bf16.msra.mxu0 0
    %3102 = vmatprep.subr.bf16.mxu0 0
    %3103 = vmatpush1.bf16.msra.mxu0 0
    %3104 = vmatprep.subr.bf16.mxu0 0
    %3105 = vmatpush1.bf16.msra.mxu0 0
    %3106 = vmatprep.subr.bf16.mxu0 0
    %3107 = vmatpush1.bf16.msra.mxu0 0
    %3108 = vmatprep.subr.bf16.mxu0 0
    %3109 = vmatpush1.bf16.msra.mxu0 0
    %3110 = vmatprep.subr.bf16.mxu0 0
    %3111 = vmatpush1.bf16.msra.mxu0 0
    %3112 = vmatprep.subr.bf16.mxu0 0
    %3113 = vmatpush1.bf16.msra.mxu0 0
    %3114 = vmatprep.subr.bf16.mxu0 0
    %3115 = vmatpush1.bf16.msra.mxu0 0
    %3116 = vmatprep.subr.bf16.mxu0 0
    %3117 = vmatpush1.bf16.msra.mxu0 0
    %3118 = vmatprep.subr.bf16.mxu0 0
    %3119 = vmatpush1.bf16.msra.mxu0 0
    %3120 = vmatprep.subr.bf16.mxu0 0
    %3121 = vmatpush1.bf16.msra.mxu0 0
    %3122 = vmatprep.subr.bf16.mxu0 0
    %3123 = vmatpush1.bf16.msra.mxu0 0
    %3124 = vmatprep.subr.bf16.mxu0 0
    %3125 = vmatpush1.bf16.msra.mxu0 0
    %3126 = vmatprep.mubr.bf16.mxu0 0
    %3127 = vmatmul.mubr.bf16.gmra.mrb[0].mxu0 %v3089
    %v3128 = vpop.f32.mrb[0].mxu0
    %v3129 = vadd.f32 0.0, %v3128
    %v3130 = vpop.f32.mrb[0].mxu0
    %v3131 = vpop.f32.mrb[0].mxu0
    %v3132 = vpop.f32.mrb[0].mxu0
    %3133 = vdwg.mxu0
    %3134 = vrot.lane.b32.xlu0 %v2462, 32
    %v3135 = vpop.permute.xlu0 %3134
    %3136 = vrot.lane.b32.xlu0 %v2470, 32
    %v3137 = vpop.permute.xlu0 %3136
    %v3139 = vsel %vm456, %v3135, 0
    %v3142 = vsel %vm456, %v3137, 0
    %3144 = vmatprep.subr.bf16.mxu0 0
    %3145 = vmatpush1.bf16.xpose.msra.mxu0 %v3142
    %3146 = vmatprep.subr.bf16.mxu0 0
    %3147 = vmatpush1.bf16.xpose.msra.mxu0 0
    %3148 = vmatprep.subr.bf16.mxu0 0
    %3149 = vmatpush1.bf16.xpose.msra.mxu0 0
    %3150 = vmatprep.subr.bf16.mxu0 0
    %3151 = vmatpush1.bf16.xpose.msra.mxu0 0
    %3152 = vmatprep.subr.bf16.mxu0 0
    %3153 = vmatpush1.bf16.xpose.msra.mxu0 0
    %3154 = vmatprep.subr.bf16.mxu0 0
    %3155 = vmatpush1.bf16.xpose.msra.mxu0 0
    %3156 = vmatprep.subr.bf16.mxu0 0
    %3157 = vmatpush1.bf16.xpose.msra.mxu0 0
    %3158 = vmatprep.subr.bf16.mxu0 0
    %3159 = vmatpush1.bf16.xpose.msra.mxu0 0
    %3160 = vmatprep.subr.bf16.mxu0 0
    %3161 = vmatpush1.bf16.xpose.msra.mxu0 0
    %3162 = vmatprep.subr.bf16.mxu0 0
    %3163 = vmatpush1.bf16.xpose.msra.mxu0 0
    %3164 = vmatprep.subr.bf16.mxu0 0
    %3165 = vmatpush1.bf16.xpose.msra.mxu0 0
    %3166 = vmatprep.subr.bf16.mxu0 0
    %3167 = vmatpush1.bf16.xpose.msra.mxu0 0
    %3168 = vmatprep.subr.bf16.mxu0 0
    %3169 = vmatpush1.bf16.xpose.msra.mxu0 0
    %3170 = vmatprep.subr.bf16.mxu0 0
    %3171 = vmatpush1.bf16.xpose.msra.mxu0 0
    %3172 = vmatprep.subr.bf16.mxu0 0
    %3173 = vmatpush1.bf16.xpose.msra.mxu0 0
    %3174 = vmatprep.subr.bf16.mxu0 0
    %3175 = vmatpush1.bf16.xpose.msra.mxu0 0
    %3176 = vmatprep.mubr.bf16.mxu0 0
    %3177 = vmatmul.mubr.bf16.gmra.mrb[0].mxu0 %v3139
    %v3178 = vpop.f32.mrb[0].mxu0
    %v3179 = vadd.f32 0.0, %v3178
    %v3180 = vpop.f32.mrb[0].mxu0
    %v3181 = vpop.f32.mrb[0].mxu0
    %v3182 = vpop.f32.mrb[0].mxu0
    %3183 = vdwg.mxu0
    %3184 = vrot.lane.b32.xlu0 %v2463, 32
    %v3185 = vpop.permute.xlu0 %3184
    %3186 = vrot.lane.b32.xlu0 %v2471, 32
    %v3187 = vpop.permute.xlu0 %3186
    %v3189 = vsel %vm456, %v3185, 0
    %v3192 = vsel %vm456, %v3187, 0
    %3194 = vmatprep.subr.bf16.mxu0 0
    %3195 = vmatpush1.bf16.xpose.msra.mxu0 %v3192
    %3196 = vmatprep.subr.bf16.mxu0 0
    %3197 = vmatpush1.bf16.xpose.msra.mxu0 0
    %3198 = vmatprep.subr.bf16.mxu0 0
    %3199 = vmatpush1.bf16.xpose.msra.mxu0 0
    %3200 = vmatprep.subr.bf16.mxu0 0
    %3201 = vmatpush1.bf16.xpose.msra.mxu0 0
    %3202 = vmatprep.subr.bf16.mxu0 0
    %3203 = vmatpush1.bf16.xpose.msra.mxu0 0
    %3204 = vmatprep.subr.bf16.mxu0 0
    %3205 = vmatpush1.bf16.xpose.msra.mxu0 0
    %3206 = vmatprep.subr.bf16.mxu0 0
    %3207 = vmatpush1.bf16.xpose.msra.mxu0 0
    %3208 = vmatprep.subr.bf16.mxu0 0
    %3209 = vmatpush1.bf16.xpose.msra.mxu0 0
    %3210 = vmatprep.subr.bf16.mxu0 0
    %3211 = vmatpush1.bf16.xpose.msra.mxu0 0
    %3212 = vmatprep.subr.bf16.mxu0 0
    %3213 = vmatpush1.bf16.xpose.msra.mxu0 0
    %3214 = vmatprep.subr.bf16.mxu0 0
    %3215 = vmatpush1.bf16.xpose.msra.mxu0 0
    %3216 = vmatprep.subr.bf16.mxu0 0
    %3217 = vmatpush1.bf16.xpose.msra.mxu0 0
    %3218 = vmatprep.subr.bf16.mxu0 0
    %3219 = vmatpush1.bf16.xpose.msra.mxu0 0
    %3220 = vmatprep.subr.bf16.mxu0 0
    %3221 = vmatpush1.bf16.xpose.msra.mxu0 0
    %3222 = vmatprep.subr.bf16.mxu0 0
    %3223 = vmatpush1.bf16.xpose.msra.mxu0 0
    %3224 = vmatprep.subr.bf16.mxu0 0
    %3225 = vmatpush1.bf16.xpose.msra.mxu0 0
    %3226 = vmatprep.mubr.bf16.mxu0 0
    %3227 = vmatmul.mubr.bf16.gmra.mrb[0].mxu0 %v3189
    %v3228 = vpop.f32.mrb[0].mxu0
    %v3229 = vadd.f32 0.0, %v3228
    %v3230 = vpop.f32.mrb[0].mxu0
    %v3231 = vpop.f32.mrb[0].mxu0
    %v3232 = vpop.f32.mrb[0].mxu0
    %3233 = vdwg.mxu0
    %v3234 = vsel %vm549, %v3179, -inf
    %3235 = vmax.xlane.f32.xlu0 %v3234
    %v3236 = vpop.xlane.xlu0 %3235
    %v3237 = vsel %vm549, %v3229, -inf
    %3238 = vmax.xlane.f32.xlu0 %v3237
    %v3239 = vpop.xlane.xlu0 %3238
    %v3240 = vsub.f32 %v3179, %v3236
    %v3241 = vsub.f32 %v3229, %v3239
    %v3242 = vmul.f32 %v3240, 1.442695
    %v3243 = vpow.pop %v3242
    %v3244 = vmul.f32 %v3241, 1.442695
    %v3245 = vpow.pop %v3244
    %v3246 = vsel %vm549, %v3243, 0.0
    %3247 = vadd.xlane.f32.xlu0 %v3246
    %v3248 = vpop.xlane.xlu0 %3247
    %v3249 = vsel %vm549, %v3245, 0.0
    %3250 = vadd.xlane.f32.xlu0 %v3249
    %v3251 = vpop.xlane.xlu0 %3250
    %v3252 = vrcp.pop %v3248
    %v3253 = vrcp.pop %v3251
    %v3254 = vmul.f32 %v3243, %v3252
    %v3255 = vmul.f32 %v3245, %v3253
    %v3256 = vpack.c.bf16 %v3254, %v3254
    %v3257 = vpack.c.bf16 %v3255, %v3255
    %3258 = vrot.lane.b32.xlu0 %v2478, 32
    %v3259 = vpop.permute.xlu0 %3258
    %v3261 = vsel %vm549, %v3256, 0
    %v3264 = vsel %vm577, %v3259, 0
    %3266 = vmatprep.subr.bf16.mxu0 0
    %3267 = vmatpush1.bf16.msra.mxu0 %v3264
    %3268 = vmatprep.subr.bf16.mxu0 0
    %3269 = vmatpush1.bf16.msra.mxu0 0
    %3270 = vmatprep.subr.bf16.mxu0 0
    %3271 = vmatpush1.bf16.msra.mxu0 0
    %3272 = vmatprep.subr.bf16.mxu0 0
    %3273 = vmatpush1.bf16.msra.mxu0 0
    %3274 = vmatprep.subr.bf16.mxu0 0
    %3275 = vmatpush1.bf16.msra.mxu0 0
    %3276 = vmatprep.subr.bf16.mxu0 0
    %3277 = vmatpush1.bf16.msra.mxu0 0
    %3278 = vmatprep.subr.bf16.mxu0 0
    %3279 = vmatpush1.bf16.msra.mxu0 0
    %3280 = vmatprep.subr.bf16.mxu0 0
    %3281 = vmatpush1.bf16.msra.mxu0 0
    %3282 = vmatprep.subr.bf16.mxu0 0
    %3283 = vmatpush1.bf16.msra.mxu0 0
    %3284 = vmatprep.subr.bf16.mxu0 0
    %3285 = vmatpush1.bf16.msra.mxu0 0
    %3286 = vmatprep.subr.bf16.mxu0 0
    %3287 = vmatpush1.bf16.msra.mxu0 0
    %3288 = vmatprep.subr.bf16.mxu0 0
    %3289 = vmatpush1.bf16.msra.mxu0 0
    %3290 = vmatprep.subr.bf16.mxu0 0
    %3291 = vmatpush1.bf16.msra.mxu0 0
    %3292 = vmatprep.subr.bf16.mxu0 0
    %3293 = vmatpush1.bf16.msra.mxu0 0
    %3294 = vmatprep.subr.bf16.mxu0 0
    %3295 = vmatpush1.bf16.msra.mxu0 0
    %3296 = vmatprep.subr.bf16.mxu0 0
    %3297 = vmatpush1.bf16.msra.mxu0 0
    %3298 = vmatprep.mubr.bf16.mxu0 0
    %3299 = vmatmul.mubr.bf16.gmra.mrb[0].mxu0 %v3261
    %v3300 = vpop.f32.mrb[0].mxu0
    %v3301 = vadd.f32 0.0, %v3300
    %v3302 = vpop.f32.mrb[0].mxu0
    %v3303 = vpop.f32.mrb[0].mxu0
    %v3304 = vpop.f32.mrb[0].mxu0
    %3305 = vdwg.mxu0
    %3306 = vrot.lane.b32.xlu0 %v2479, 32
    %v3307 = vpop.permute.xlu0 %3306
    %v3309 = vsel %vm549, %v3257, 0
    %v3312 = vsel %vm577, %v3307, 0
    %3314 = vmatprep.subr.bf16.mxu0 0
    %3315 = vmatpush1.bf16.msra.mxu0 %v3312
    %3316 = vmatprep.subr.bf16.mxu0 0
    %3317 = vmatpush1.bf16.msra.mxu0 0
    %3318 = vmatprep.subr.bf16.mxu0 0
    %3319 = vmatpush1.bf16.msra.mxu0 0
    %3320 = vmatprep.subr.bf16.mxu0 0
    %3321 = vmatpush1.bf16.msra.mxu0 0
    %3322 = vmatprep.subr.bf16.mxu0 0
    %3323 = vmatpush1.bf16.msra.mxu0 0
    %3324 = vmatprep.subr.bf16.mxu0 0
    %3325 = vmatpush1.bf16.msra.mxu0 0
    %3326 = vmatprep.subr.bf16.mxu0 0
    %3327 = vmatpush1.bf16.msra.mxu0 0
    %3328 = vmatprep.subr.bf16.mxu0 0
    %3329 = vmatpush1.bf16.msra.mxu0 0
    %3330 = vmatprep.subr.bf16.mxu0 0
    %3331 = vmatpush1.bf16.msra.mxu0 0
    %3332 = vmatprep.subr.bf16.mxu0 0
    %3333 = vmatpush1.bf16.msra.mxu0 0
    %3334 = vmatprep.subr.bf16.mxu0 0
    %3335 = vmatpush1.bf16.msra.mxu0 0
    %3336 = vmatprep.subr.bf16.mxu0 0
    %3337 = vmatpush1.bf16.msra.mxu0 0
    %3338 = vmatprep.subr.bf16.mxu0 0
    %3339 = vmatpush1.bf16.msra.mxu0 0
    %3340 = vmatprep.subr.bf16.mxu0 0
    %3341 = vmatpush1.bf16.msra.mxu0 0
    %3342 = vmatprep.subr.bf16.mxu0 0
    %3343 = vmatpush1.bf16.msra.mxu0 0
    %3344 = vmatprep.subr.bf16.mxu0 0
    %3345 = vmatpush1.bf16.msra.mxu0 0
    %3346 = vmatprep.mubr.bf16.mxu0 0
    %3347 = vmatmul.mubr.bf16.gmra.mrb[0].mxu0 %v3309
    %v3348 = vpop.f32.mrb[0].mxu0
    %v3349 = vadd.f32 0.0, %v3348
    %v3350 = vpop.f32.mrb[0].mxu0
    %v3351 = vpop.f32.mrb[0].mxu0
    %v3352 = vpop.f32.mrb[0].mxu0
    %3353 = vdwg.mxu0
    %3356 = vrot.lane.b32.xlu0 %v2860, 32
    %v3357 = vpop.permute.xlu0 %3356
    %3358 = vrot.lane.b32.xlu0 %v2909, 32
    %v3359 = vpop.permute.xlu0 %3358
    %3364 = vrot.lane.b32.xlu0 %v3081, 64
    %v3365 = vpop.permute.xlu0 %3364
    %3366 = vrot.lane.b32.xlu0 %v3129, 64
    %v3367 = vpop.permute.xlu0 %3366
    %3372 = vrot.lane.b32.xlu0 %v3301, 96
    %v3373 = vpop.permute.xlu0 %3372
    %3374 = vrot.lane.b32.xlu0 %v3349, 96
    %v3375 = vpop.permute.xlu0 %3374
    %v3378 = vsel %vm456, %v2637, %v3357
    %v3379 = vsel %vm456, %v2683, %v3359
    %v3380 = vsel %vm1359, %v3378, %v3365
    %v3381 = vsel %vm1359, %v3379, %v3367
    %v3382 = vsel %vm1362, %v3380, %v3373
    %v3383 = vsel %vm1362, %v3381, %v3375
    %v3384 = vpack.c.bf16 %v3383, %v3382
    %v3385 = vlaneseq
    %v3386 = vshrl.u32 %v3385, 7
    %v3387 = vsub.s32 3, %v3386
    %v3388 = vrot.slane %v2241, %v3387
    %v3405 = vunpack.c.l.b16 %v2124
    %v3406 = vunpack.c.l.b16 %v2125
    %v3407 = vunpack.c.l.b16 %v2126
    %v3408 = vunpack.c.l.b16 %v2127
    %v3409 = vunpack.c.l.b16 %v2128
    %v3410 = vunpack.c.l.b16 %v2129
    %v3411 = vunpack.c.l.b16 %v2130
    %v3412 = vunpack.c.l.b16 %v2131
    %v3413 = vunpack.c.l.b16 %v2132
    %v3414 = vunpack.c.l.b16 %v2133
    %v3415 = vunpack.c.l.b16 %v2134
    %v3416 = vunpack.c.l.b16 %v2135
    %v3417 = vunpack.c.l.b16 %v2136
    %v3418 = vunpack.c.l.b16 %v2137
    %v3419 = vunpack.c.l.b16 %v2138
    %v3420 = vunpack.c.l.b16 %v2139
    %v3421 = vpack.c.b16 %v3406, %v3405
    %v3422 = vpack.c.b16 %v3408, %v3407
    %v3423 = vpack.c.b16 %v3410, %v3409
    %v3424 = vpack.c.b16 %v3412, %v3411
    %v3425 = vpack.c.b16 %v3414, %v3413
    %v3426 = vpack.c.b16 %v3416, %v3415
    %v3427 = vpack.c.b16 %v3418, %v3417
    %v3428 = vpack.c.b16 %v3420, %v3419
    %3437 = vmatprep.subr.bf16.mxu0 0
    %3438 = vmatpush1.bf16.msra.mxu0 %v3421
    %3439 = vmatprep.subr.bf16.mxu0 0
    %3440 = vmatpush1.bf16.msra.mxu0 %v3422
    %3441 = vmatprep.subr.bf16.mxu0 0
    %3442 = vmatpush1.bf16.msra.mxu0 %v3423
    %3443 = vmatprep.subr.bf16.mxu0 0
    %3444 = vmatpush1.bf16.msra.mxu0 %v3424
    %3445 = vmatprep.subr.bf16.mxu0 0
    %3446 = vmatpush1.bf16.msra.mxu0 %v3425
    %3447 = vmatprep.subr.bf16.mxu0 0
    %3448 = vmatpush1.bf16.msra.mxu0 %v3426
    %3449 = vmatprep.subr.bf16.mxu0 0
    %3450 = vmatpush1.bf16.msra.mxu0 %v3427
    %3451 = vmatprep.subr.bf16.mxu0 0
    %3452 = vmatpush1.bf16.msra.mxu0 %v3428
    %3453 = vmatprep.subr.bf16.mxu0 0
    %3454 = vmatpush1.bf16.msra.mxu0 0
    %3455 = vmatprep.subr.bf16.mxu0 0
    %3456 = vmatpush1.bf16.msra.mxu0 0
    %3457 = vmatprep.subr.bf16.mxu0 0
    %3458 = vmatpush1.bf16.msra.mxu0 0
    %3459 = vmatprep.subr.bf16.mxu0 0
    %3460 = vmatpush1.bf16.msra.mxu0 0
    %3461 = vmatprep.subr.bf16.mxu0 0
    %3462 = vmatpush1.bf16.msra.mxu0 0
    %3463 = vmatprep.subr.bf16.mxu0 0
    %3464 = vmatpush1.bf16.msra.mxu0 0
    %3465 = vmatprep.subr.bf16.mxu0 0
    %3466 = vmatpush1.bf16.msra.mxu0 0
    %3467 = vmatprep.subr.bf16.mxu0 0
    %3468 = vmatpush1.bf16.msra.mxu0 0
    %3469 = vmatprep.mubr.bf16.mxu0 0
    %3470 = vmatmul.mubr.bf16.gmra.mrb[0].mxu0 %v3384
    %v3471 = vpop.f32.mrb[0].mxu0
    %v3472 = vadd.f32 %v3388, %v3471
    %v3473 = vpop.f32.mrb[0].mxu0
    %v3474 = vpop.f32.mrb[0].mxu0
    %v3475 = vadd.f32 %v3388, %v3474
    %v3476 = vpop.f32.mrb[0].mxu0
    %3477 = vdwg.mxu0
    %v3478 = vadd.f32 %v2088, %v3472
    %v3479 = vadd.f32 %v2089, %v3475
    %3480 = vadd.xlane.f32.xlu0 %v3478
    %v3481 = vpop.xlane.xlu0 %3480
    %3482 = vadd.xlane.f32.xlu0 %v3479
    %v3483 = vpop.xlane.xlu0 %3482
    %v3484 = vmul.f32 %v3481, %v1465
    %v3485 = vmul.f32 %v3483, %v1465
    %v3486 = vsub.f32 %v3478, %v3484
    %v3487 = vsub.f32 %v3479, %v3485
    %v3488 = vmul.f32 %v3486, %v3486
    %v3489 = vmul.f32 %v3487, %v3487
    %3490 = vadd.xlane.f32.xlu0 %v3488
    %v3491 = vpop.xlane.xlu0 %3490
    %3492 = vadd.xlane.f32.xlu0 %v3489
    %v3493 = vpop.xlane.xlu0 %3492
    %v3494 = vmul.f32 %v3491, %v1465
    %v3495 = vmul.f32 %v3493, %v1465
    %v3496 = vadd.f32 %v3494, 1e-05
    %v3497 = vadd.f32 %v3495, 1e-05
    %v3498 = vrsqrt.pop %v3496
    %v3499 = vrsqrt.pop %v3497
    %v3500 = vmul.f32 %v3486, %v3498
    %v3501 = vmul.f32 %v3487, %v3499
    %v3502 = vlaneseq
    %v3503 = vshrl.u32 %v3502, 7
    %v3504 = vsub.s32 4, %v3503
    %v3505 = vrot.slane %v2241, %v3504
    %v3506 = vmul.f32 %v3500, %v3505
    %v3507 = vmul.f32 %v3501, %v3505
    %v3508 = vlaneseq
    %v3509 = vshrl.u32 %v3508, 7
    %v3510 = vsub.s32 5, %v3509
    %v3511 = vrot.slane %v2241, %v3510
    %v3512 = vadd.f32 %v3506, %v3511
    %v3513 = vadd.f32 %v3507, %v3511
    %v3514 = vpack.c.bf16 %v3513, %v3512
    %v3516 = vlaneseq
    %v3517 = vshrl.u32 %v3516, 7
    %v3518 = vsub.s32 0, %v3517
    %v3519 = vrot.slane %v2239, %v3518
    %v3520 = vlaneseq
    %v3521 = vshrl.u32 %v3520, 7
    %v3522 = vsub.s32 1, %v3521
    %v3523 = vrot.slane %v2239, %v3522
    %v3524 = vlaneseq
    %v3525 = vshrl.u32 %v3524, 7
    %v3526 = vsub.s32 2, %v3525
    %v3527 = vrot.slane %v2239, %v3526
    %v3528 = vlaneseq
    %v3529 = vshrl.u32 %v3528, 7
    %v3530 = vsub.s32 3, %v3529
    %v3531 = vrot.slane %v2239, %v3530
    %v3568 = vunpack.c.l.b16 %v2141
    %v3569 = vunpack.c.h.b16 %v2141
    %v3570 = vunpack.c.l.b16 %v2142
    %v3571 = vunpack.c.h.b16 %v2142
    %v3572 = vunpack.c.l.b16 %v2143
    %v3573 = vunpack.c.h.b16 %v2143
    %v3574 = vunpack.c.l.b16 %v2144
    %v3575 = vunpack.c.h.b16 %v2144
    %v3576 = vunpack.c.l.b16 %v2145
    %v3577 = vunpack.c.h.b16 %v2145
    %v3578 = vunpack.c.l.b16 %v2146
    %v3579 = vunpack.c.h.b16 %v2146
    %v3580 = vunpack.c.l.b16 %v2147
    %v3581 = vunpack.c.h.b16 %v2147
    %v3582 = vunpack.c.l.b16 %v2148
    %v3583 = vunpack.c.h.b16 %v2148
    %v3584 = vunpack.c.l.b16 %v2149
    %v3585 = vunpack.c.h.b16 %v2149
    %v3586 = vunpack.c.l.b16 %v2150
    %v3587 = vunpack.c.h.b16 %v2150
    %v3588 = vunpack.c.l.b16 %v2151
    %v3589 = vunpack.c.h.b16 %v2151
    %v3590 = vunpack.c.l.b16 %v2152
    %v3591 = vunpack.c.h.b16 %v2152
    %v3592 = vunpack.c.l.b16 %v2153
    %v3593 = vunpack.c.h.b16 %v2153
    %v3594 = vunpack.c.l.b16 %v2154
    %v3595 = vunpack.c.h.b16 %v2154
    %v3596 = vunpack.c.l.b16 %v2155
    %v3597 = vunpack.c.h.b16 %v2155
    %v3598 = vunpack.c.l.b16 %v2156
    %v3599 = vunpack.c.h.b16 %v2156
    %v3600 = vunpack.c.l.b16 %v2157
    %v3601 = vunpack.c.h.b16 %v2157
    %v3602 = vunpack.c.l.b16 %v2158
    %v3603 = vunpack.c.h.b16 %v2158
    %v3604 = vunpack.c.l.b16 %v2159
    %v3605 = vunpack.c.h.b16 %v2159
    %v3606 = vunpack.c.l.b16 %v2160
    %v3607 = vunpack.c.h.b16 %v2160
    %v3608 = vunpack.c.l.b16 %v2161
    %v3609 = vunpack.c.h.b16 %v2161
    %v3610 = vunpack.c.l.b16 %v2162
    %v3611 = vunpack.c.h.b16 %v2162
    %v3612 = vunpack.c.l.b16 %v2163
    %v3613 = vunpack.c.h.b16 %v2163
    %v3614 = vunpack.c.l.b16 %v2164
    %v3615 = vunpack.c.h.b16 %v2164
    %v3616 = vunpack.c.l.b16 %v2165
    %v3617 = vunpack.c.h.b16 %v2165
    %v3618 = vunpack.c.l.b16 %v2166
    %v3619 = vunpack.c.h.b16 %v2166
    %v3620 = vunpack.c.l.b16 %v2167
    %v3621 = vunpack.c.h.b16 %v2167
    %v3622 = vunpack.c.l.b16 %v2168
    %v3623 = vunpack.c.h.b16 %v2168
    %v3624 = vunpack.c.l.b16 %v2169
    %v3625 = vunpack.c.h.b16 %v2169
    %v3626 = vunpack.c.l.b16 %v2170
    %v3627 = vunpack.c.h.b16 %v2170
    %v3628 = vunpack.c.l.b16 %v2171
    %v3629 = vunpack.c.h.b16 %v2171
    %v3630 = vunpack.c.l.b16 %v2172
    %v3631 = vunpack.c.h.b16 %v2172
    %v3632 = vpack.c.b16 %v3572, %v3568
    %v3633 = vpack.c.b16 %v3573, %v3569
    %v3634 = vpack.c.b16 %v3574, %v3570
    %v3635 = vpack.c.b16 %v3575, %v3571
    %v3636 = vpack.c.b16 %v3580, %v3576
    %v3637 = vpack.c.b16 %v3581, %v3577
    %v3638 = vpack.c.b16 %v3582, %v3578
    %v3639 = vpack.c.b16 %v3583, %v3579
    %v3640 = vpack.c.b16 %v3588, %v3584
    %v3641 = vpack.c.b16 %v3589, %v3585
    %v3642 = vpack.c.b16 %v3590, %v3586
    %v3643 = vpack.c.b16 %v3591, %v3587
    %v3644 = vpack.c.b16 %v3596, %v3592
    %v3645 = vpack.c.b16 %v3597, %v3593
    %v3646 = vpack.c.b16 %v3598, %v3594
    %v3647 = vpack.c.b16 %v3599, %v3595
    %v3648 = vpack.c.b16 %v3604, %v3600
    %v3649 = vpack.c.b16 %v3605, %v3601
    %v3650 = vpack.c.b16 %v3606, %v3602
    %v3651 = vpack.c.b16 %v3607, %v3603
    %v3652 = vpack.c.b16 %v3612, %v3608
    %v3653 = vpack.c.b16 %v3613, %v3609
    %v3654 = vpack.c.b16 %v3614, %v3610
    %v3655 = vpack.c.b16 %v3615, %v3611
    %v3656 = vpack.c.b16 %v3620, %v3616
    %v3657 = vpack.c.b16 %v3621, %v3617
    %v3658 = vpack.c.b16 %v3622, %v3618
    %v3659 = vpack.c.b16 %v3623, %v3619
    %v3660 = vpack.c.b16 %v3628, %v3624
    %v3661 = vpack.c.b16 %v3629, %v3625
    %v3662 = vpack.c.b16 %v3630, %v3626
    %v3663 = vpack.c.b16 %v3631, %v3627
    %3696 = vmatprep.subr.bf16.mxu0 %v3633
    %3697 = vmatpush1.bf16.msra.mxu0 %v3632
    %3698 = vmatprep.subr.bf16.mxu0 %v3637
    %3699 = vmatpush1.bf16.msra.mxu0 %v3636
    %3700 = vmatprep.subr.bf16.mxu0 %v3641
    %3701 = vmatpush1.bf16.msra.mxu0 %v3640
    %3702 = vmatprep.subr.bf16.mxu0 %v3645
    %3703 = vmatpush1.bf16.msra.mxu0 %v3644
    %3704 = vmatprep.subr.bf16.mxu0 %v3649
    %3705 = vmatpush1.bf16.msra.mxu0 %v3648
    %3706 = vmatprep.subr.bf16.mxu0 %v3653
    %3707 = vmatpush1.bf16.msra.mxu0 %v3652
    %3708 = vmatprep.subr.bf16.mxu0 %v3657
    %3709 = vmatpush1.bf16.msra.mxu0 %v3656
    %3710 = vmatprep.subr.bf16.mxu0 %v3661
    %3711 = vmatpush1.bf16.msra.mxu0 %v3660
    %3712 = vmatprep.subr.bf16.mxu0 0
    %3713 = vmatpush1.bf16.msra.mxu0 0
    %3714 = vmatprep.subr.bf16.mxu0 0
    %3715 = vmatpush1.bf16.msra.mxu0 0
    %3716 = vmatprep.subr.bf16.mxu0 0
    %3717 = vmatpush1.bf16.msra.mxu0 0
    %3718 = vmatprep.subr.bf16.mxu0 0
    %3719 = vmatpush1.bf16.msra.mxu0 0
    %3720 = vmatprep.subr.bf16.mxu0 0
    %3721 = vmatpush1.bf16.msra.mxu0 0
    %3722 = vmatprep.subr.bf16.mxu0 0
    %3723 = vmatpush1.bf16.msra.mxu0 0
    %3724 = vmatprep.subr.bf16.mxu0 0
    %3725 = vmatpush1.bf16.msra.mxu0 0
    %3726 = vmatprep.subr.bf16.mxu0 0
    %3727 = vmatpush1.bf16.msra.mxu0 0
    %3728 = vmatprep.mubr.bf16.mxu0 0
    %3729 = vmatmul.mubr.bf16.gmra.mrb[0].mxu0 %v3514
    %v3730 = vpop.f32.mrb[0].mxu0
    %v3731 = vadd.f32 %v3519, %v3730
    %v3732 = vpop.f32.mrb[0].mxu0
    %v3733 = vadd.f32 %v3523, %v3732
    %v3734 = vpop.f32.mrb[0].mxu0
    %v3735 = vadd.f32 %v3519, %v3734
    %v3736 = vpop.f32.mrb[0].mxu0
    %v3737 = vadd.f32 %v3523, %v3736
    %3738 = vdwg.mxu0
    %3739 = vmatprep.subr.bf16.mxu0 %v3635
    %3740 = vmatpush1.bf16.msra.mxu0 %v3634
    %3741 = vmatprep.subr.bf16.mxu0 %v3639
    %3742 = vmatpush1.bf16.msra.mxu0 %v3638
    %3743 = vmatprep.subr.bf16.mxu0 %v3643
    %3744 = vmatpush1.bf16.msra.mxu0 %v3642
    %3745 = vmatprep.subr.bf16.mxu0 %v3647
    %3746 = vmatpush1.bf16.msra.mxu0 %v3646
    %3747 = vmatprep.subr.bf16.mxu0 %v3651
    %3748 = vmatpush1.bf16.msra.mxu0 %v3650
    %3749 = vmatprep.subr.bf16.mxu0 %v3655
    %3750 = vmatpush1.bf16.msra.mxu0 %v3654
    %3751 = vmatprep.subr.bf16.mxu0 %v3659
    %3752 = vmatpush1.bf16.msra.mxu0 %v3658
    %3753 = vmatprep.subr.bf16.mxu0 %v3663
    %3754 = vmatpush1.bf16.msra.mxu0 %v3662
    %3755 = vmatprep.subr.bf16.mxu0 0
    %3756 = vmatpush1.bf16.msra.mxu0 0
    %3757 = vmatprep.subr.bf16.mxu0 0
    %3758 = vmatpush1.bf16.msra.mxu0 0
    %3759 = vmatprep.subr.bf16.mxu0 0
    %3760 = vmatpush1.bf16.msra.mxu0 0
    %3761 = vmatprep.subr.bf16.mxu0 0
    %3762 = vmatpush1.bf16.msra.mxu0 0
    %3763 = vmatprep.subr.bf16.mxu0 0
    %3764 = vmatpush1.bf16.msra.mxu0 0
    %3765 = vmatprep.subr.bf16.mxu0 0
    %3766 = vmatpush1.bf16.msra.mxu0 0
    %3767 = vmatprep.subr.bf16.mxu0 0
    %3768 = vmatpush1.bf16.msra.mxu0 0
    %3769 = vmatprep.subr.bf16.mxu0 0
    %3770 = vmatpush1.bf16.msra.mxu0 0
    %3771 = vmatprep.mubr.bf16.mxu0 0
    %3772 = vmatmul.mubr.bf16.gmra.mrb[0].mxu0 %v3514
    %v3773 = vpop.f32.mrb[0].mxu0
    %v3774 = vadd.f32 %v3527, %v3773
    %v3775 = vpop.f32.mrb[0].mxu0
    %v3776 = vadd.f32 %v3531, %v3775
    %v3777 = vpop.f32.mrb[0].mxu0
    %v3778 = vadd.f32 %v3527, %v3777
    %v3779 = vpop.f32.mrb[0].mxu0
    %v3780 = vadd.f32 %v3531, %v3779
    %3781 = vdwg.mxu0
    %v3782 = vmax.f32 %v3731, 0.0
    %v3783 = vmax.f32 %v3733, 0.0
    %v3784 = vmax.f32 %v3774, 0.0
    %v3785 = vmax.f32 %v3776, 0.0
    %v3786 = vmax.f32 %v3735, 0.0
    %v3787 = vmax.f32 %v3737, 0.0
    %v3788 = vmax.f32 %v3778, 0.0
    %v3789 = vmax.f32 %v3780, 0.0
    %v3790 = vpack.c.bf16 %v3786, %v3782
    %v3791 = vpack.c.bf16 %v3787, %v3783
    %v3792 = vpack.c.bf16 %v3788, %v3784
    %v3793 = vpack.c.bf16 %v3789, %v3785
    %v3794 = vlaneseq
    %v3795 = vshrl.u32 %v3794, 7
    %v3796 = vsub.s32 6, %v3795
    %v3797 = vrot.slane %v2241, %v3796
    %v3862 = vunpack.c.l.b16 %v2174
    %v3863 = vunpack.c.l.b16 %v2175
    %v3864 = vunpack.c.l.b16 %v2176
    %v3865 = vunpack.c.l.b16 %v2177
    %v3866 = vunpack.c.l.b16 %v2178
    %v3867 = vunpack.c.l.b16 %v2179
    %v3868 = vunpack.c.l.b16 %v2180
    %v3869 = vunpack.c.l.b16 %v2181
    %v3870 = vunpack.c.l.b16 %v2182
    %v3871 = vunpack.c.l.b16 %v2183
    %v3872 = vunpack.c.l.b16 %v2184
    %v3873 = vunpack.c.l.b16 %v2185
    %v3874 = vunpack.c.l.b16 %v2186
    %v3875 = vunpack.c.l.b16 %v2187
    %v3876 = vunpack.c.l.b16 %v2188
    %v3877 = vunpack.c.l.b16 %v2189
    %v3878 = vunpack.c.l.b16 %v2190
    %v3879 = vunpack.c.l.b16 %v2191
    %v3880 = vunpack.c.l.b16 %v2192
    %v3881 = vunpack.c.l.b16 %v2193
    %v3882 = vunpack.c.l.b16 %v2194
    %v3883 = vunpack.c.l.b16 %v2195
    %v3884 = vunpack.c.l.b16 %v2196
    %v3885 = vunpack.c.l.b16 %v2197
    %v3886 = vunpack.c.l.b16 %v2198
    %v3887 = vunpack.c.l.b16 %v2199
    %v3888 = vunpack.c.l.b16 %v2200
    %v3889 = vunpack.c.l.b16 %v2201
    %v3890 = vunpack.c.l.b16 %v2202
    %v3891 = vunpack.c.l.b16 %v2203
    %v3892 = vunpack.c.l.b16 %v2204
    %v3893 = vunpack.c.l.b16 %v2205
    %v3894 = vunpack.c.l.b16 %v2206
    %v3895 = vunpack.c.l.b16 %v2207
    %v3896 = vunpack.c.l.b16 %v2208
    %v3897 = vunpack.c.l.b16 %v2209
    %v3898 = vunpack.c.l.b16 %v2210
    %v3899 = vunpack.c.l.b16 %v2211
    %v3900 = vunpack.c.l.b16 %v2212
    %v3901 = vunpack.c.l.b16 %v2213
    %v3902 = vunpack.c.l.b16 %v2214
    %v3903 = vunpack.c.l.b16 %v2215
    %v3904 = vunpack.c.l.b16 %v2216
    %v3905 = vunpack.c.l.b16 %v2217
    %v3906 = vunpack.c.l.b16 %v2218
    %v3907 = vunpack.c.l.b16 %v2219
    %v3908 = vunpack.c.l.b16 %v2220
    %v3909 = vunpack.c.l.b16 %v2221
    %v3910 = vunpack.c.l.b16 %v2222
    %v3911 = vunpack.c.l.b16 %v2223
    %v3912 = vunpack.c.l.b16 %v2224
    %v3913 = vunpack.c.l.b16 %v2225
    %v3914 = vunpack.c.l.b16 %v2226
    %v3915 = vunpack.c.l.b16 %v2227
    %v3916 = vunpack.c.l.b16 %v2228
    %v3917 = vunpack.c.l.b16 %v2229
    %v3918 = vunpack.c.l.b16 %v2230
    %v3919 = vunpack.c.l.b16 %v2231
    %v3920 = vunpack.c.l.b16 %v2232
    %v3921 = vunpack.c.l.b16 %v2233
    %v3922 = vunpack.c.l.b16 %v2234
    %v3923 = vunpack.c.l.b16 %v2235
    %v3924 = vunpack.c.l.b16 %v2236
    %v3925 = vunpack.c.l.b16 %v2237
    %v3926 = vpack.c.b16 %v3863, %v3862
    %v3927 = vpack.c.b16 %v3865, %v3864
    %v3928 = vpack.c.b16 %v3867, %v3866
    %v3929 = vpack.c.b16 %v3869, %v3868
    %v3930 = vpack.c.b16 %v3871, %v3870
    %v3931 = vpack.c.b16 %v3873, %v3872
    %v3932 = vpack.c.b16 %v3875, %v3874
    %v3933 = vpack.c.b16 %v3877, %v3876
    %v3934 = vpack.c.b16 %v3879, %v3878
    %v3935 = vpack.c.b16 %v3881, %v3880
    %v3936 = vpack.c.b16 %v3883, %v3882
    %v3937 = vpack.c.b16 %v3885, %v3884
    %v3938 = vpack.c.b16 %v3887, %v3886
    %v3939 = vpack.c.b16 %v3889, %v3888
    %v3940 = vpack.c.b16 %v3891, %v3890
    %v3941 = vpack.c.b16 %v3893, %v3892
    %v3942 = vpack.c.b16 %v3895, %v3894
    %v3943 = vpack.c.b16 %v3897, %v3896
    %v3944 = vpack.c.b16 %v3899, %v3898
    %v3945 = vpack.c.b16 %v3901, %v3900
    %v3946 = vpack.c.b16 %v3903, %v3902
    %v3947 = vpack.c.b16 %v3905, %v3904
    %v3948 = vpack.c.b16 %v3907, %v3906
    %v3949 = vpack.c.b16 %v3909, %v3908
    %v3950 = vpack.c.b16 %v3911, %v3910
    %v3951 = vpack.c.b16 %v3913, %v3912
    %v3952 = vpack.c.b16 %v3915, %v3914
    %v3953 = vpack.c.b16 %v3917, %v3916
    %v3954 = vpack.c.b16 %v3919, %v3918
    %v3955 = vpack.c.b16 %v3921, %v3920
    %v3956 = vpack.c.b16 %v3923, %v3922
    %v3957 = vpack.c.b16 %v3925, %v3924
    %3990 = vmatprep.subr.bf16.mxu0 0
    %3991 = vmatpush1.bf16.msra.mxu0 %v3926
    %3992 = vmatprep.subr.bf16.mxu0 0
    %3993 = vmatpush1.bf16.msra.mxu0 %v3927
    %3994 = vmatprep.subr.bf16.mxu0 0
    %3995 = vmatpush1.bf16.msra.mxu0 %v3928
    %3996 = vmatprep.subr.bf16.mxu0 0
    %3997 = vmatpush1.bf16.msra.mxu0 %v3929
    %3998 = vmatprep.subr.bf16.mxu0 0
    %3999 = vmatpush1.bf16.msra.mxu0 %v3930
    %4000 = vmatprep.subr.bf16.mxu0 0
    %4001 = vmatpush1.bf16.msra.mxu0 %v3931
    %4002 = vmatprep.subr.bf16.mxu0 0
    %4003 = vmatpush1.bf16.msra.mxu0 %v3932
    %4004 = vmatprep.subr.bf16.mxu0 0
    %4005 = vmatpush1.bf16.msra.mxu0 %v3933
    %4006 = vmatprep.subr.bf16.mxu0 0
    %4007 = vmatpush1.bf16.msra.mxu0 %v3934
    %4008 = vmatprep.subr.bf16.mxu0 0
    %4009 = vmatpush1.bf16.msra.mxu0 %v3935
    %4010 = vmatprep.subr.bf16.mxu0 0
    %4011 = vmatpush1.bf16.msra.mxu0 %v3936
    %4012 = vmatprep.subr.bf16.mxu0 0
    %4013 = vmatpush1.bf16.msra.mxu0 %v3937
    %4014 = vmatprep.subr.bf16.mxu0 0
    %4015 = vmatpush1.bf16.msra.mxu0 %v3938
    %4016 = vmatprep.subr.bf16.mxu0 0
    %4017 = vmatpush1.bf16.msra.mxu0 %v3939
    %4018 = vmatprep.subr.bf16.mxu0 0
    %4019 = vmatpush1.bf16.msra.mxu0 %v3940
    %4020 = vmatprep.subr.bf16.mxu0 0
    %4021 = vmatpush1.bf16.msra.mxu0 %v3941
    %4022 = vmatprep.mubr.bf16.mxu0 %v3791
    %4023 = vmatmul.mubr.bf16.gmra.mrb[0].mxu0 %v3790
    %v4024 = vpop.f32.mrb[0].mxu0
    %v4025 = vadd.f32 %v3797, %v4024
    %v4026 = vpop.f32.mrb[0].mxu0
    %v4027 = vpop.f32.mrb[0].mxu0
    %v4028 = vadd.f32 %v3797, %v4027
    %v4029 = vpop.f32.mrb[0].mxu0
    %4030 = vdwg.mxu0
    %4031 = vmatprep.subr.bf16.mxu0 0
    %4032 = vmatpush1.bf16.msra.mxu0 %v3942
    %4033 = vmatprep.subr.bf16.mxu0 0
    %4034 = vmatpush1.bf16.msra.mxu0 %v3943
    %4035 = vmatprep.subr.bf16.mxu0 0
    %4036 = vmatpush1.bf16.msra.mxu0 %v3944
    %4037 = vmatprep.subr.bf16.mxu0 0
    %4038 = vmatpush1.bf16.msra.mxu0 %v3945
    %4039 = vmatprep.subr.bf16.mxu0 0
    %4040 = vmatpush1.bf16.msra.mxu0 %v3946
    %4041 = vmatprep.subr.bf16.mxu0 0
    %4042 = vmatpush1.bf16.msra.mxu0 %v3947
    %4043 = vmatprep.subr.bf16.mxu0 0
    %4044 = vmatpush1.bf16.msra.mxu0 %v3948
    %4045 = vmatprep.subr.bf16.mxu0 0
    %4046 = vmatpush1.bf16.msra.mxu0 %v3949
    %4047 = vmatprep.subr.bf16.mxu0 0
    %4048 = vmatpush1.bf16.msra.mxu0 %v3950
    %4049 = vmatprep.subr.bf16.mxu0 0
    %4050 = vmatpush1.bf16.msra.mxu0 %v3951
    %4051 = vmatprep.subr.bf16.mxu0 0
    %4052 = vmatpush1.bf16.msra.mxu0 %v3952
    %4053 = vmatprep.subr.bf16.mxu0 0
    %4054 = vmatpush1.bf16.msra.mxu0 %v3953
    %4055 = vmatprep.subr.bf16.mxu0 0
    %4056 = vmatpush1.bf16.msra.mxu0 %v3954
    %4057 = vmatprep.subr.bf16.mxu0 0
    %4058 = vmatpush1.bf16.msra.mxu0 %v3955
    %4059 = vmatprep.subr.bf16.mxu0 0
    %4060 = vmatpush1.bf16.msra.mxu0 %v3956
    %4061 = vmatprep.subr.bf16.mxu0 0
    %4062 = vmatpush1.bf16.msra.mxu0 %v3957
    %4063 = vmatprep.mubr.bf16.mxu0 %v3793
    %4064 = vmatmul.mubr.bf16.gmra.mrb[0].mxu0 %v3792
    %v4065 = vpop.f32.mrb[0].mxu0
    %v4066 = vadd.f32 %v4025, %v4065
    %v4067 = vpop.f32.mrb[0].mxu0
    %v4068 = vpop.f32.mrb[0].mxu0
    %v4069 = vadd.f32 %v4028, %v4068
    %v4070 = vpop.f32.mrb[0].mxu0
    %4071 = vdwg.mxu0
    %v4072 = vadd.f32 %v3512, %v4066
    %v4073 = vadd.f32 %v3513, %v4069
    %4074 = vadd.xlane.f32.xlu0 %v4072
    %v4075 = vpop.xlane.xlu0 %4074
    %4076 = vadd.xlane.f32.xlu0 %v4073
    %v4077 = vpop.xlane.xlu0 %4076
    %v4078 = vmul.f32 %v4075, %v1465
    %v4079 = vmul.f32 %v4077, %v1465
    %v4080 = vsub.f32 %v4072, %v4078
    %v4081 = vsub.f32 %v4073, %v4079
    %v4082 = vmul.f32 %v4080, %v4080
    %v4083 = vmul.f32 %v4081, %v4081
    %4084 = vadd.xlane.f32.xlu0 %v4082
    %v4085 = vpop.xlane.xlu0 %4084
    %4086 = vadd.xlane.f32.xlu0 %v4083
    %v4087 = vpop.xlane.xlu0 %4086
    %v4088 = vmul.f32 %v4085, %v1465
    %v4089 = vmul.f32 %v4087, %v1465
    %v4090 = vadd.f32 %v4088, 1e-05
    %v4091 = vadd.f32 %v4089, 1e-05
    %v4092 = vrsqrt.pop %v4090
    %v4093 = vrsqrt.pop %v4091
    %v4094 = vmul.f32 %v4080, %v4092
    %v4095 = vmul.f32 %v4081, %v4093
    %v4096 = vlaneseq
    %v4097 = vshrl.u32 %v4096, 7
    %v4098 = vsub.s32 7, %v4097
    %v4099 = vrot.slane %v2241, %v4098
    %v4100 = vmul.f32 %v4094, %v4099
    %v4101 = vmul.f32 %v4095, %v4099
    %v4102 = vlaneseq
    %v4103 = vshrl.u32 %v4102, 7
    %v4104 = vsub.s32 0, %v4103
    %v4105 = vrot.slane %v2242, %v4104
    %v4106 = vadd.f32 %v4100, %v4105
    %v4107 = vadd.f32 %v4101, %v4105
    %v4108 = vld [vmem:[%s11] sm:$0xff]
    %v4109 = vld [vmem:[%s11 + $0x8] sm:$0x1]
    %v4110 = vpack.c.bf16 %v4106, %v4106
    %v4111 = vpack.c.bf16 %v4107, %v4107
    %v4112 = vld [vmem:[%s7] sm:$0xf]
    %v4113 = vld [vmem:[%s7 + $0x4] sm:$0xf]
    %v4114 = vld [vmem:[%s7 + $0x8] sm:$0xf]
    %v4115 = vld [vmem:[%s7 + $0xc] sm:$0xf]
    %v4116 = vld [vmem:[%s7 + $0x10] sm:$0xf]
    %v4117 = vld [vmem:[%s7 + $0x14] sm:$0xf]
    %v4118 = vld [vmem:[%s7 + $0x18] sm:$0xf]
    %v4119 = vld [vmem:[%s7 + $0x1c] sm:$0xf]
    %v4120 = vld [vmem:[%s7 + $0x20] sm:$0xf]
    %v4121 = vld [vmem:[%s7 + $0x24] sm:$0xf]
    %v4122 = vld [vmem:[%s7 + $0x28] sm:$0xf]
    %v4123 = vld [vmem:[%s7 + $0x2c] sm:$0xf]
    %v4124 = vld [vmem:[%s7 + $0x30] sm:$0xf]
    %v4125 = vld [vmem:[%s7 + $0x34] sm:$0xf]
    %v4126 = vld [vmem:[%s7 + $0x38] sm:$0xf]
    %v4127 = vld [vmem:[%s7 + $0x3c] sm:$0xf]
    %v4128 = vlaneseq
    %v4129 = vshrl.u32 %v4128, 7
    %v4130 = vsub.s32 0, %v4129
    %v4131 = vrot.slane %v4108, %v4130
    %v4134 = vunpack.c.l.b16 %v4110
    %v4135 = vunpack.c.l.b16 %v4111
    %v4136 = vrot.slane %v4134, 7
    %v4137 = vrot.slane %v4135, 6
    %vm4138 = vcmask 1041409
    %v4139 = vsel %vm4138, %v4137, %v4136
    %v4140 = vpack.c.b16 %v4139, %v4139
    %v4158 = vunpack.c.l.b16 %v4112
    %v4159 = vunpack.c.l.b16 %v4113
    %v4160 = vunpack.c.l.b16 %v4114
    %v4161 = vunpack.c.l.b16 %v4115
    %v4162 = vunpack.c.l.b16 %v4116
    %v4163 = vunpack.c.l.b16 %v4117
    %v4164 = vunpack.c.l.b16 %v4118
    %v4165 = vunpack.c.l.b16 %v4119
    %v4166 = vunpack.c.l.b16 %v4120
    %v4167 = vunpack.c.l.b16 %v4121
    %v4168 = vunpack.c.l.b16 %v4122
    %v4169 = vunpack.c.l.b16 %v4123
    %v4170 = vunpack.c.l.b16 %v4124
    %v4171 = vunpack.c.l.b16 %v4125
    %v4172 = vunpack.c.l.b16 %v4126
    %v4173 = vunpack.c.l.b16 %v4127
    %v4174 = vpack.c.b16 %v4159, %v4158
    %v4175 = vpack.c.b16 %v4161, %v4160
    %v4176 = vpack.c.b16 %v4163, %v4162
    %v4177 = vpack.c.b16 %v4165, %v4164
    %v4178 = vpack.c.b16 %v4167, %v4166
    %v4179 = vpack.c.b16 %v4169, %v4168
    %v4180 = vpack.c.b16 %v4171, %v4170
    %v4181 = vpack.c.b16 %v4173, %v4172
    %4190 = vmatprep.subr.bf16.mxu0 0
    %4191 = vmatpush1.bf16.msra.mxu0 %v4174
    %4192 = vmatprep.subr.bf16.mxu0 0
    %4193 = vmatpush1.bf16.msra.mxu0 %v4175
    %4194 = vmatprep.subr.bf16.mxu0 0
    %4195 = vmatpush1.bf16.msra.mxu0 %v4176
    %4196 = vmatprep.subr.bf16.mxu0 0
    %4197 = vmatpush1.bf16.msra.mxu0 %v4177
    %4198 = vmatprep.subr.bf16.mxu0 0
    %4199 = vmatpush1.bf16.msra.mxu0 %v4178
    %4200 = vmatprep.subr.bf16.mxu0 0
    %4201 = vmatpush1.bf16.msra.mxu0 %v4179
    %4202 = vmatprep.subr.bf16.mxu0 0
    %4203 = vmatpush1.bf16.msra.mxu0 %v4180
    %4204 = vmatprep.subr.bf16.mxu0 0
    %4205 = vmatpush1.bf16.msra.mxu0 %v4181
    %4206 = vmatprep.subr.bf16.mxu0 0
    %4207 = vmatpush1.bf16.msra.mxu0 0
    %4208 = vmatprep.subr.bf16.mxu0 0
    %4209 = vmatpush1.bf16.msra.mxu0 0
    %4210 = vmatprep.subr.bf16.mxu0 0
    %4211 = vmatpush1.bf16.msra.mxu0 0
    %4212 = vmatprep.subr.bf16.mxu0 0
    %4213 = vmatpush1.bf16.msra.mxu0 0
    %4214 = vmatprep.subr.bf16.mxu0 0
    %4215 = vmatpush1.bf16.msra.mxu0 0
    %4216 = vmatprep.subr.bf16.mxu0 0
    %4217 = vmatpush1.bf16.msra.mxu0 0
    %4218 = vmatprep.subr.bf16.mxu0 0
    %4219 = vmatpush1.bf16.msra.mxu0 0
    %4220 = vmatprep.subr.bf16.mxu0 0
    %4221 = vmatpush1.bf16.msra.mxu0 0
    %4222 = vmatprep.mubr.bf16.mxu0 0
    %4223 = vmatmul.mubr.bf16.gmra.mrb[0].mxu0 %v4140
    %v4224 = vpop.f32.mrb[0].mxu0
    %v4225 = vadd.f32 %v4131, %v4224
    %v4226 = vpop.f32.mrb[0].mxu0
    %v4227 = vpop.f32.mrb[0].mxu0
    %v4228 = vpop.f32.mrb[0].mxu0
    %4229 = vdwg.mxu0
    %vm4230 = vcmask 1041408
    %v4231 = vsel %vm4230, %v4225, 0.0
    %4232 = vadd.xlane.f32.xlu0 %v4231
    %v4233 = vpop.xlane.xlu0 %4232
    %v4234 = vmul.f32 %v4233, %v1465
    %v4235 = vsub.f32 %v4225, %v4234
    %v4236 = vmul.f32 %v4235, %v4235
    %v4237 = vsel %vm4230, %v4236, 0.0
    %4238 = vadd.xlane.f32.xlu0 %v4237
    %v4239 = vpop.xlane.xlu0 %4238
    %v4240 = vmul.f32 %v4239, %v1465
    %v4241 = vadd.f32 %v4240, 1e-05
    %v4242 = vrsqrt.pop %v4241
    %v4243 = vmul.f32 %v4235, %v4242
    %v4244 = vlaneseq
    %v4245 = vshrl.u32 %v4244, 7
    %v4246 = vsub.s32 1, %v4245
    %v4247 = vrot.slane %v4108, %v4246
    %v4248 = vmul.f32 %v4243, %v4247
    %v4249 = vlaneseq
    %v4250 = vshrl.u32 %v4249, 7
    %v4251 = vsub.s32 2, %v4250
    %v4252 = vrot.slane %v4108, %v4251
    %v4253 = vadd.f32 %v4248, %v4252
    %v4254 = vmax.f32 %v4253, 0.0
    %v4255 = vpack.c.bf16 %v4254, %v4254
    %v4256 = vld [vmem:[%s8] sm:$0xf]
    %v4257 = vld [vmem:[%s8 + $0x4] sm:$0xf]
    %v4258 = vld [vmem:[%s8 + $0x8] sm:$0xf]
    %v4259 = vld [vmem:[%s8 + $0xc] sm:$0xf]
    %v4260 = vld [vmem:[%s8 + $0x10] sm:$0xf]
    %v4261 = vld [vmem:[%s8 + $0x14] sm:$0xf]
    %v4262 = vld [vmem:[%s8 + $0x18] sm:$0xf]
    %v4263 = vld [vmem:[%s8 + $0x1c] sm:$0xf]
    %v4264 = vld [vmem:[%s8 + $0x20] sm:$0xf]
    %v4265 = vld [vmem:[%s8 + $0x24] sm:$0xf]
    %v4266 = vld [vmem:[%s8 + $0x28] sm:$0xf]
    %v4267 = vld [vmem:[%s8 + $0x2c] sm:$0xf]
    %v4268 = vld [vmem:[%s8 + $0x30] sm:$0xf]
    %v4269 = vld [vmem:[%s8 + $0x34] sm:$0xf]
    %v4270 = vld [vmem:[%s8 + $0x38] sm:$0xf]
    %v4271 = vld [vmem:[%s8 + $0x3c] sm:$0xf]
    %v4272 = vlaneseq
    %v4273 = vshrl.u32 %v4272, 7
    %v4274 = vsub.s32 6, %v4273
    %v4275 = vrot.slane %v4108, %v4274
    %v4292 = vunpack.c.l.b16 %v4256
    %v4293 = vunpack.c.l.b16 %v4257
    %v4294 = vunpack.c.l.b16 %v4258
    %v4295 = vunpack.c.l.b16 %v4259
    %v4296 = vunpack.c.l.b16 %v4260
    %v4297 = vunpack.c.l.b16 %v4261
    %v4298 = vunpack.c.l.b16 %v4262
    %v4299 = vunpack.c.l.b16 %v4263
    %v4300 = vunpack.c.l.b16 %v4264
    %v4301 = vunpack.c.l.b16 %v4265
    %v4302 = vunpack.c.l.b16 %v4266
    %v4303 = vunpack.c.l.b16 %v4267
    %v4304 = vunpack.c.l.b16 %v4268
    %v4305 = vunpack.c.l.b16 %v4269
    %v4306 = vunpack.c.l.b16 %v4270
    %v4307 = vunpack.c.l.b16 %v4271
    %v4308 = vpack.c.b16 %v4293, %v4292
    %v4309 = vpack.c.b16 %v4295, %v4294
    %v4310 = vpack.c.b16 %v4297, %v4296
    %v4311 = vpack.c.b16 %v4299, %v4298
    %v4312 = vpack.c.b16 %v4301, %v4300
    %v4313 = vpack.c.b16 %v4303, %v4302
    %v4314 = vpack.c.b16 %v4305, %v4304
    %v4315 = vpack.c.b16 %v4307, %v4306
    %4324 = vmatprep.subr.bf16.mxu0 0
    %4325 = vmatpush1.bf16.msra.mxu0 %v4308
    %4326 = vmatprep.subr.bf16.mxu0 0
    %4327 = vmatpush1.bf16.msra.mxu0 %v4309
    %4328 = vmatprep.subr.bf16.mxu0 0
    %4329 = vmatpush1.bf16.msra.mxu0 %v4310
    %4330 = vmatprep.subr.bf16.mxu0 0
    %4331 = vmatpush1.bf16.msra.mxu0 %v4311
    %4332 = vmatprep.subr.bf16.mxu0 0
    %4333 = vmatpush1.bf16.msra.mxu0 %v4312
    %4334 = vmatprep.subr.bf16.mxu0 0
    %4335 = vmatpush1.bf16.msra.mxu0 %v4313
    %4336 = vmatprep.subr.bf16.mxu0 0
    %4337 = vmatpush1.bf16.msra.mxu0 %v4314
    %4338 = vmatprep.subr.bf16.mxu0 0
    %4339 = vmatpush1.bf16.msra.mxu0 %v4315
    %4340 = vmatprep.subr.bf16.mxu0 0
    %4341 = vmatpush1.bf16.msra.mxu0 0
    %4342 = vmatprep.subr.bf16.mxu0 0
    %4343 = vmatpush1.bf16.msra.mxu0 0
    %4344 = vmatprep.subr.bf16.mxu0 0
    %4345 = vmatpush1.bf16.msra.mxu0 0
    %4346 = vmatprep.subr.bf16.mxu0 0
    %4347 = vmatpush1.bf16.msra.mxu0 0
    %4348 = vmatprep.subr.bf16.mxu0 0
    %4349 = vmatpush1.bf16.msra.mxu0 0
    %4350 = vmatprep.subr.bf16.mxu0 0
    %4351 = vmatpush1.bf16.msra.mxu0 0
    %4352 = vmatprep.subr.bf16.mxu0 0
    %4353 = vmatpush1.bf16.msra.mxu0 0
    %4354 = vmatprep.subr.bf16.mxu0 0
    %4355 = vmatpush1.bf16.msra.mxu0 0
    %4356 = vmatprep.mubr.bf16.mxu0 0
    %4357 = vmatmul.mubr.bf16.gmra.mrb[0].mxu0 %v4255
    %v4358 = vpop.f32.mrb[0].mxu0
    %v4359 = vadd.f32 %v4275, %v4358
    %v4360 = vpop.f32.mrb[0].mxu0
    %v4361 = vpop.f32.mrb[0].mxu0
    %v4362 = vpop.f32.mrb[0].mxu0
    %4363 = vdwg.mxu0
    %v4364 = vpack.c.bf16 %v4359, %v4359
    %v4365 = vld [vmem:[%s9] sm:$0xff]
    %v4366 = vld [vmem:[%s9 + $0x8] sm:$0xff]
    %v4367 = vld [vmem:[%s9 + $0x10] sm:$0xff]
    %v4368 = vld [vmem:[%s9 + $0x18] sm:$0xff]
    %v4369 = vld [vmem:[%s9 + $0x20] sm:$0xff]
    %v4370 = vld [vmem:[%s9 + $0x28] sm:$0xff]
    %v4371 = vld [vmem:[%s9 + $0x30] sm:$0xff]
    %v4372 = vld [vmem:[%s9 + $0x38] sm:$0xff]
    %v4381 = vunpack.c.l.b16 %v4365
    %v4382 = vunpack.c.h.b16 %v4365
    %v4383 = vunpack.c.l.b16 %v4366
    %v4384 = vunpack.c.h.b16 %v4366
    %v4385 = vunpack.c.l.b16 %v4367
    %v4386 = vunpack.c.h.b16 %v4367
    %v4387 = vunpack.c.l.b16 %v4368
    %v4388 = vunpack.c.h.b16 %v4368
    %v4389 = vunpack.c.l.b16 %v4369
    %v4390 = vunpack.c.h.b16 %v4369
    %v4391 = vunpack.c.l.b16 %v4370
    %v4392 = vunpack.c.h.b16 %v4370
    %v4393 = vunpack.c.l.b16 %v4371
    %v4394 = vunpack.c.h.b16 %v4371
    %v4395 = vunpack.c.l.b16 %v4372
    %v4396 = vunpack.c.h.b16 %v4372
    %v4397 = vpack.c.b16 %v4383, %v4381
    %v4398 = vpack.c.b16 %v4384, %v4382
    %v4399 = vpack.c.b16 %v4387, %v4385
    %v4400 = vpack.c.b16 %v4388, %v4386
    %v4401 = vpack.c.b16 %v4391, %v4389
    %v4402 = vpack.c.b16 %v4392, %v4390
    %v4403 = vpack.c.b16 %v4395, %v4393
    %v4404 = vpack.c.b16 %v4396, %v4394
    %v4414 = vsel %vm1359, %v4364, 0
    %4416 = vmatprep.subr.bf16.mxu0 %v4398
    %4417 = vmatpush1.bf16.msra.mxu0 %v4397
    %4418 = vmatprep.subr.bf16.mxu0 %v4400
    %4419 = vmatpush1.bf16.msra.mxu0 %v4399
    %4420 = vmatprep.subr.bf16.mxu0 %v4402
    %4421 = vmatpush1.bf16.msra.mxu0 %v4401
    %4422 = vmatprep.subr.bf16.mxu0 %v4404
    %4423 = vmatpush1.bf16.msra.mxu0 %v4403
    %4424 = vmatprep.subr.bf16.mxu0 0
    %4425 = vmatpush1.bf16.msra.mxu0 0
    %4426 = vmatprep.subr.bf16.mxu0 0
    %4427 = vmatpush1.bf16.msra.mxu0 0
    %4428 = vmatprep.subr.bf16.mxu0 0
    %4429 = vmatpush1.bf16.msra.mxu0 0
    %4430 = vmatprep.subr.bf16.mxu0 0
    %4431 = vmatpush1.bf16.msra.mxu0 0
    %4432 = vmatprep.subr.bf16.mxu0 0
    %4433 = vmatpush1.bf16.msra.mxu0 0
    %4434 = vmatprep.subr.bf16.mxu0 0
    %4435 = vmatpush1.bf16.msra.mxu0 0
    %4436 = vmatprep.subr.bf16.mxu0 0
    %4437 = vmatpush1.bf16.msra.mxu0 0
    %4438 = vmatprep.subr.bf16.mxu0 0
    %4439 = vmatpush1.bf16.msra.mxu0 0
    %4440 = vmatprep.subr.bf16.mxu0 0
    %4441 = vmatpush1.bf16.msra.mxu0 0
    %4442 = vmatprep.subr.bf16.mxu0 0
    %4443 = vmatpush1.bf16.msra.mxu0 0
    %4444 = vmatprep.subr.bf16.mxu0 0
    %4445 = vmatpush1.bf16.msra.mxu0 0
    %4446 = vmatprep.subr.bf16.mxu0 0
    %4447 = vmatpush1.bf16.msra.mxu0 0
    %4448 = vmatprep.mubr.bf16.mxu0 0
    %4449 = vmatmul.mubr.bf16.gmra.mrb[0].mxu0 %v4414
    %v4450 = vpop.f32.mrb[0].mxu0
    %v4451 = vadd.f32 0.0, %v4450
    %v4452 = vpop.f32.mrb[0].mxu0
    %v4453 = vadd.f32 0.0, %v4452
    %v4454 = vpop.f32.mrb[0].mxu0
    %v4455 = vpop.f32.mrb[0].mxu0
    %4456 = vdwg.mxu0
    %v4457 = vlaneseq
    %v4458 = vshrl.u32 %v4457, 7
    %v4459 = vsub.s32 3, %v4458
    %v4460 = vrot.slane %v4108, %v4459
    %v4461 = vadd.f32 %v4451, %v4460
    %v4462 = vlaneseq
    %v4463 = vshrl.u32 %v4462, 7
    %v4464 = vsub.s32 7, %v4463
    %v4465 = vrot.slane %v4108, %v4464
    %v4466 = vadd.f32 %v4453, %v4465
    %v4467 = vxor.u32 %v4466, 2147483648
    %v4468 = vmul.f32 %v4467, 1.442695
    %v4469 = vpow.pop %v4468
    %v4470 = vadd.f32 %v4469, 1.0
    %v4471 = vrcp.pop %v4470
    %v4472 = vmul.f32 1.0, %v4471
    %v4473 = vmul.f32 %v4472, 1.9
    %v4474 = vadd.f32 %v4473, 0.1
    %v4475 = vmul.f32 %v4472, 0.8
    %v4476 = vadd.f32 %v4475, 0.1
    %v4477 = vsel %vm4230, %v4461, 0.0
    %4478 = vadd.xlane.f32.xlu0 %v4477
    %v4479 = vpop.xlane.xlu0 %4478
    %v4480 = vmul.f32 %v4479, %v1465
    %v4481 = vsub.f32 %v4461, %v4480
    %v4482 = vmul.f32 %v4481, %v4481
    %v4483 = vsel %vm4230, %v4482, 0.0
    %4484 = vadd.xlane.f32.xlu0 %v4483
    %v4485 = vpop.xlane.xlu0 %4484
    %v4486 = vmul.f32 %v4485, %v1465
    %v4487 = vadd.f32 %v4486, 1e-05
    %v4488 = vrsqrt.pop %v4487
    %v4489 = vmul.f32 %v4481, %v4488
    %v4490 = vlaneseq
    %v4491 = vshrl.u32 %v4490, 7
    %v4492 = vsub.s32 4, %v4491
    %v4493 = vrot.slane %v4108, %v4492
    %v4494 = vmul.f32 %v4489, %v4493
    %v4495 = vlaneseq
    %v4496 = vshrl.u32 %v4495, 7
    %v4497 = vsub.s32 5, %v4496
    %v4498 = vrot.slane %v4108, %v4497
    %v4499 = vadd.f32 %v4494, %v4498
    %v4500 = vmax.f32 %v4499, 0.0
    %v4501 = vpack.c.bf16 %v4500, %v4500
    %v4502 = vld [vmem:[%s10] sm:$0xf]
    %v4503 = vld [vmem:[%s10 + $0x4] sm:$0xf]
    %v4504 = vld [vmem:[%s10 + $0x8] sm:$0xf]
    %v4505 = vld [vmem:[%s10 + $0xc] sm:$0xf]
    %v4506 = vld [vmem:[%s10 + $0x10] sm:$0xf]
    %v4507 = vld [vmem:[%s10 + $0x14] sm:$0xf]
    %v4508 = vld [vmem:[%s10 + $0x18] sm:$0xf]
    %v4509 = vld [vmem:[%s10 + $0x1c] sm:$0xf]
    %v4510 = vld [vmem:[%s10 + $0x20] sm:$0xf]
    %v4511 = vld [vmem:[%s10 + $0x24] sm:$0xf]
    %v4512 = vld [vmem:[%s10 + $0x28] sm:$0xf]
    %v4513 = vld [vmem:[%s10 + $0x2c] sm:$0xf]
    %v4514 = vld [vmem:[%s10 + $0x30] sm:$0xf]
    %v4515 = vld [vmem:[%s10 + $0x34] sm:$0xf]
    %v4516 = vld [vmem:[%s10 + $0x38] sm:$0xf]
    %v4517 = vld [vmem:[%s10 + $0x3c] sm:$0xf]
    %v4518 = vlaneseq
    %v4519 = vshrl.u32 %v4518, 7
    %v4520 = vsub.s32 0, %v4519
    %v4521 = vrot.slane %v4109, %v4520
    %v4538 = vunpack.c.l.b16 %v4502
    %v4539 = vunpack.c.l.b16 %v4503
    %v4540 = vunpack.c.l.b16 %v4504
    %v4541 = vunpack.c.l.b16 %v4505
    %v4542 = vunpack.c.l.b16 %v4506
    %v4543 = vunpack.c.l.b16 %v4507
    %v4544 = vunpack.c.l.b16 %v4508
    %v4545 = vunpack.c.l.b16 %v4509
    %v4546 = vunpack.c.l.b16 %v4510
    %v4547 = vunpack.c.l.b16 %v4511
    %v4548 = vunpack.c.l.b16 %v4512
    %v4549 = vunpack.c.l.b16 %v4513
    %v4550 = vunpack.c.l.b16 %v4514
    %v4551 = vunpack.c.l.b16 %v4515
    %v4552 = vunpack.c.l.b16 %v4516
    %v4553 = vunpack.c.l.b16 %v4517
    %v4554 = vpack.c.b16 %v4539, %v4538
    %v4555 = vpack.c.b16 %v4541, %v4540
    %v4556 = vpack.c.b16 %v4543, %v4542
    %v4557 = vpack.c.b16 %v4545, %v4544
    %v4558 = vpack.c.b16 %v4547, %v4546
    %v4559 = vpack.c.b16 %v4549, %v4548
    %v4560 = vpack.c.b16 %v4551, %v4550
    %v4561 = vpack.c.b16 %v4553, %v4552
    %4570 = vmatprep.subr.bf16.mxu0 0
    %4571 = vmatpush1.bf16.msra.mxu0 %v4554
    %4572 = vmatprep.subr.bf16.mxu0 0
    %4573 = vmatpush1.bf16.msra.mxu0 %v4555
    %4574 = vmatprep.subr.bf16.mxu0 0
    %4575 = vmatpush1.bf16.msra.mxu0 %v4556
    %4576 = vmatprep.subr.bf16.mxu0 0
    %4577 = vmatpush1.bf16.msra.mxu0 %v4557
    %4578 = vmatprep.subr.bf16.mxu0 0
    %4579 = vmatpush1.bf16.msra.mxu0 %v4558
    %4580 = vmatprep.subr.bf16.mxu0 0
    %4581 = vmatpush1.bf16.msra.mxu0 %v4559
    %4582 = vmatprep.subr.bf16.mxu0 0
    %4583 = vmatpush1.bf16.msra.mxu0 %v4560
    %4584 = vmatprep.subr.bf16.mxu0 0
    %4585 = vmatpush1.bf16.msra.mxu0 %v4561
    %4586 = vmatprep.subr.bf16.mxu0 0
    %4587 = vmatpush1.bf16.msra.mxu0 0
    %4588 = vmatprep.subr.bf16.mxu0 0
    %4589 = vmatpush1.bf16.msra.mxu0 0
    %4590 = vmatprep.subr.bf16.mxu0 0
    %4591 = vmatpush1.bf16.msra.mxu0 0
    %4592 = vmatprep.subr.bf16.mxu0 0
    %4593 = vmatpush1.bf16.msra.mxu0 0
    %4594 = vmatprep.subr.bf16.mxu0 0
    %4595 = vmatpush1.bf16.msra.mxu0 0
    %4596 = vmatprep.subr.bf16.mxu0 0
    %4597 = vmatpush1.bf16.msra.mxu0 0
    %4598 = vmatprep.subr.bf16.mxu0 0
    %4599 = vmatpush1.bf16.msra.mxu0 0
    %4600 = vmatprep.subr.bf16.mxu0 0
    %4601 = vmatpush1.bf16.msra.mxu0 0
    %4602 = vmatprep.mubr.bf16.mxu0 0
    %4603 = vmatmul.mubr.bf16.gmra.mrb[0].mxu0 %v4501
    %v4604 = vpop.f32.mrb[0].mxu0
    %v4605 = vadd.f32 %v4521, %v4604
    %v4606 = vpop.f32.mrb[0].mxu0
    %v4607 = vpop.f32.mrb[0].mxu0
    %v4608 = vpop.f32.mrb[0].mxu0
    %4609 = vdwg.mxu0
    %4611 = vrot.lane.b32.xlu0 %v4474, 64
    %v4612 = vpop.permute.xlu0 %4611
    %4615 = vrot.lane.b32.xlu0 %v4476, 64
    %v4616 = vpop.permute.xlu0 %4615
    %4619 = vrot.lane.b32.xlu0 %v4605, 66
    %v4620 = vpop.permute.xlu0 %4619
    %4623 = vrot.lane.b32.xlu0 %v4466, 67
    %v4624 = vpop.permute.xlu0 %4623
    %v4626 = vsel %vm1359, %v4359, %v4612
    %vm4627 = vcmask 531456
    %v4628 = vsel %vm4627, %v4626, %v4616
    %vm4629 = vcmask 539648
    %v4630 = vsel %vm4629, %v4628, %v4620
    %vm4631 = vcmask 547840
    %v4632 = vsel %vm4631, %v4630, %v4624
    %vm4633 = vcmask 556032
    %v4634 = vsel %vm4633, %v4632, %v4624
    %vm4635 = vcmask 564224
    %v4636 = vsel %vm4635, %v4634, 0.0
    %4637 = vst [vmem:[%s12] sm:$0x3] %v4636
    // Predicated region
    $region58: #{belief_network_forward.1} parent=1 // pred_check
      _
    $region59: #{belief_network_forward.1} parent=1 // pred_check_branch
      %4639 = sbr.rel (0) target = $region61
    $region60: #{belief_network_forward.1} parent=1 // pred_region
      _
    $region61: #{belief_network_forward.1} parent=1 // pred_fallthru
      _
    // Predicated region
    $region62: #{belief_network_forward.1} parent=1 // pred_check
      _
    $region63: #{belief_network_forward.1} parent=1 // pred_check_branch
      %4641 = sbr.rel (0) target = $region65
    $region64: #{belief_network_forward.1} parent=1 // pred_region
      _
    $region65: #{belief_network_forward.1} parent=1 // pred_fallthru
      _
    %4642 = vsyncpa [#allocation3], 1
    %4643 = vsyncpa [#allocation5], 1

</llo_original>
